<compile_context>
chip_gen: v7x
topology: tpu7x:2x2x1
jax: 0.10.0
libtpu: 0.0.40
codegen_flags: <defaults>
</compile_context>

<pallas_src>
import jax
import jax.numpy as jnp
from jax import lax
from jax.experimental import pallas as pl
from jax.experimental.pallas import tpu as pltpu


def _round_up(x, m):
    return (x + m - 1) // m * m


def _gru_net_kernel(x_ref, m_ref, h0_ref, wih_ref, whh_ref, bih_ref, bhh_ref,
                    wfc_ref, bfc_ref, y_ref, hout_ref, hs_s):
    TN, Hp = x_ref.shape
    T, Np, _ = m_ref.shape

    # ---- Stage 1: input projection for ALL timesteps, one bf16 MXU matmul
    # (off the serial critical path). gi stays in vregs; the unrolled loop
    # below slices it with static, sublane/lane-aligned slices (free views).
    gi = jnp.dot(x_ref[...], wih_ref[...], preferred_element_type=jnp.float32)
    gi = gi + bih_ref[...]

    # Hoist the hidden-bias broadcast out of the unrolled loop.
    bhh = jnp.broadcast_to(bhh_ref[...], (Np, 3 * Hp))

    # ---- Stage 2: serial recurrence. Per step: episode-reset mask (full-vreg
    # VPU multiply), one (Np,Hp)x(Hp,3Hp) bf16 MXU matmul, gate math in f32.
    # h is carried in vregs; the per-step history store is off the h-chain.
    h = h0_ref[...]
    for t in range(T):
        h = h * m_ref[t]                                   # masks pre-broadcast
        gh = jnp.dot(h.astype(jnp.bfloat16), whh_ref[...],
                     preferred_element_type=jnp.float32) + bhh
        gi_t = gi[t * Np:(t + 1) * Np, :]
        # Gates live in lane-aligned Hp-wide slabs -> slices are free views.
        r = jax.nn.sigmoid(gi_t[:, :Hp] + gh[:, :Hp])
        z = jax.nn.sigmoid(gi_t[:, Hp:2 * Hp] + gh[:, Hp:2 * Hp])
        n = jnp.tanh(gi_t[:, 2 * Hp:] + r * gh[:, 2 * Hp:])
        h = n + z * (h - n)                                # == (1-z)*n + z*h
        hs_s[t] = h

    hout_ref[...] = h                                      # written once, f32

    # ---- Stage 3: final Linear + ReLU over all timesteps at once (bf16 MXU).
    hs = hs_s[...].reshape(TN, Hp).astype(jnp.bfloat16)
    out = jnp.dot(hs, wfc_ref[...], preferred_element_type=jnp.float32)
    y_ref[...] = jnp.maximum(out + bfc_ref[...], 0.0)


def prepare_params(params):
    """One-time weight prep (pad to lane-aligned gate slabs + cast to bf16).

    Hoisted out of the per-call path: these pads/casts rewrite ~0.5 MiB and
    must not run on every forward call.
    """
    w_ih, w_hh, b_ih, b_hh, w_fc, b_fc = params
    H = w_fc.shape[0]
    Hp = _round_up(H, 128)

    def pad_gate_mat(w):     # (H, 3H) -> (Hp, 3Hp) bf16, each gate lane-aligned
        w3 = w.reshape(H, 3, H)
        w3 = jnp.pad(w3, ((0, Hp - H), (0, 0), (0, Hp - H)))
        return w3.reshape(Hp, 3 * Hp).astype(jnp.bfloat16)

    def pad_gate_vec(b):     # (1, 3H) -> (1, 3Hp) f32
        b3 = b.reshape(1, 3, H)
        b3 = jnp.pad(b3, ((0, 0), (0, 0), (0, Hp - H)))
        return b3.reshape(1, 3 * Hp).astype(jnp.float32)

    wih_p = pad_gate_mat(w_ih)
    whh_p = pad_gate_mat(w_hh)
    bih_p = pad_gate_vec(b_ih)
    bhh_p = pad_gate_vec(b_hh)
    wfc_p = jnp.pad(w_fc, ((0, Hp - H), (0, Hp - H))).astype(jnp.bfloat16)
    bfc_p = jnp.pad(b_fc, ((0, 0), (0, Hp - H))).astype(jnp.float32)
    return (wih_p, whh_p, bih_p, bhh_p, wfc_p, bfc_p)


def gru_net_forward(inputs, rhs, done, padded_params):
    """
    inputs : (B, input_size)  with B == T * N and input_size == hidden size
    rhs    : (N, H)           recurrent hidden state
    done   : (B, 1)           episode termination flags
    padded_params : output of prepare_params (pre-padded, bf16 weights)
    Returns (y, rhs_new) with y : (B, H), rhs_new : (N, H).
    """
    wih_p, whh_p, bih_p, bhh_p, wfc_p, bfc_p = padded_params
    N, H = rhs.shape
    B = inputs.shape[0]
    assert B % N == 0 and inputs.shape[1] == H
    T = B // N
    Hp = wfc_p.shape[0]      # lane-dense hidden / gate stride
    Np = _round_up(N, 8)     # full sublanes

    # --- pad activations. Padded hidden columns stay exactly 0 through the
    # recurrence (zero weights/bias/h0); padded batch rows are sliced off.
    x = inputs.reshape(T, N, H)
    x_p = jnp.pad(x, ((0, 0), (0, Np - N), (0, Hp - H)))
    x_p = x_p.reshape(T * Np, Hp).astype(jnp.bfloat16)     # flat, bf16 MXU operand
    masks = (1.0 - done.astype(jnp.float32)).reshape(T, N, 1)
    masks_p = jnp.pad(masks, ((0, 0), (0, Np - N), (0, 0)), constant_values=1.0)
    masks_p = jnp.broadcast_to(masks_p, (T, Np, Hp))       # pre-broadcast to full vregs
    h0_p = jnp.pad(rhs.astype(jnp.float32), ((0, Np - N), (0, Hp - H)))

    full = lambda shape: pl.BlockSpec(shape, lambda i: (0,) * len(shape))

    y_p, h_out_p = pl.pallas_call(
        _gru_net_kernel,
        out_shape=(
            jax.ShapeDtypeStruct((T * Np, Hp), jnp.float32),
            jax.ShapeDtypeStruct((Np, Hp), jnp.float32),
        ),
        grid=(1,),
        in_specs=[
            full((T * Np, Hp)),      # x (whole sequence, bf16, VMEM resident)
            full((T, Np, Hp)),       # masks (pre-broadcast, f32)
            full((Np, Hp)),          # h0 (f32)
            full((Hp, 3 * Hp)),      # w_ih^T (bf16)
            full((Hp, 3 * Hp)),      # w_hh^T (bf16)
            full((1, 3 * Hp)),       # b_ih (f32)
            full((1, 3 * Hp)),       # b_hh (f32)
            full((Hp, Hp)),          # w_fc^T (bf16)
            full((1, Hp)),           # b_fc (f32)
        ],
        out_specs=(
            full((T * Np, Hp)),      # y (lane-dense, last dim multiple of 128)
            full((Np, Hp)),          # final hidden (f32)
        ),
        scratch_shapes=[
            pltpu.VMEM((T, Np, Hp), jnp.float32),   # per-step h history for fc
        ],
        compiler_params=pltpu.CompilerParams(
            dimension_semantics=("arbitrary",)),
    )(x_p, masks_p, h0_p, wih_p, whh_p, bih_p, bhh_p, wfc_p, bfc_p)

    y = y_p.reshape(T, Np, Hp)[:, :N, :H].reshape(B, H)
    h_out = h_out_p[:N, :H]
    return y, h_out


def gru_net_reference(inputs, rhs, done, params):
    """Pure-JAX f32 reference with the same semantics (mask applied each step)."""
    w_ih, w_hh, b_ih, b_hh, w_fc, b_fc = params
    N, H = rhs.shape
    T = inputs.shape[0] // N
    x = inputs.reshape(T, N, H).astype(jnp.float32)
    masks = (1.0 - done.astype(jnp.float32)).reshape(T, N, 1)
    hi = jax.lax.Precision.HIGHEST

    def step(h, xm):
        xt, mt = xm
        h = h * mt
        gi = jnp.dot(xt, w_ih, precision=hi) + b_ih
        gh = jnp.dot(h, w_hh, precision=hi) + b_hh
        r = jax.nn.sigmoid(gi[:, :H] + gh[:, :H])
        z = jax.nn.sigmoid(gi[:, H:2 * H] + gh[:, H:2 * H])
        n = jnp.tanh(gi[:, 2 * H:] + r * gh[:, 2 * H:])
        h_new = (1.0 - z) * n + z * h
        return h_new, h_new

    h_last, hs = lax.scan(step, rhs.astype(jnp.float32), (x, masks))
    y = jnp.maximum(jnp.dot(hs.reshape(T * N, H), w_fc, precision=hi) + b_fc, 0.0)
    return y, h_last


def init_params(key, input_size):
    """Deterministic synthetic parameters (same shapes as nn.GRU + nn.Linear)."""
    H = input_size
    ks = jax.random.split(key, 6)
    scale = 1.0 / jnp.sqrt(jnp.float32(H))
    # stored transposed: (in_features, 3H) / (H, H)
    w_ih = jax.random.uniform(ks[0], (H, 3 * H), jnp.float32, -scale, scale)
    w_hh = jax.random.uniform(ks[1], (H, 3 * H), jnp.float32, -scale, scale)
    b_ih = jax.random.uniform(ks[2], (1, 3 * H), jnp.float32, -scale, scale)
    b_hh = jax.random.uniform(ks[3], (1, 3 * H), jnp.float32, -scale, scale)
    # final layer: orthogonal-like deterministic init (ReLU gain), bias 0
    a = jax.random.normal(ks[4], (H, H), jnp.float32)
    q, _ = jnp.linalg.qr(a)
    w_fc = (jnp.sqrt(2.0) * q).astype(jnp.float32)   # (H, H), right-multiply
    b_fc = jnp.zeros((1, H), jnp.float32)
    return w_ih, w_hh, b_ih, b_hh, w_fc, b_fc


if __name__ == "__main__":
    input_size = 32     # GRU input == hidden size (as in GruNet)
    N = 4               # number of parallel environments
    T = 8               # sequence length
    B = T * N

    key = jax.random.PRNGKey(0)
    k_par, k_x, k_h, k_d = jax.random.split(key, 4)

    params = init_params(k_par, input_size)
    padded_params = prepare_params(params)          # one-time, off the hot path
    inputs = jax.random.normal(k_x, (B, input_size), jnp.float32)
    rhs = jax.random.normal(k_h, (N, input_size), jnp.float32)
    done = (jax.random.uniform(k_d, (B, 1)) < 0.2).astype(jnp.float32)

    fwd = jax.jit(gru_net_forward)
    y, rhs_new = fwd(inputs, rhs, done, padded_params)
    jax.block_until_ready((y, rhs_new))

    assert y.shape == (B, input_size) and rhs_new.shape == (N, input_size)

    # Sanity check against the pure-JAX f32 reference. bf16 MXU operands shift
    # the expected max-abs error to O(1e-2); 1e-1 gives comfortable margin.
    y_ref, rhs_ref = gru_net_reference(inputs, rhs, done, params)
    err_y = float(jnp.max(jnp.abs(y - y_ref)))
    err_h = float(jnp.max(jnp.abs(rhs_new - rhs_ref)))
    print(f"max|dy|={err_y:.3e} max|dh|={err_h:.3e}")
    assert err_y < 1e-1 and err_h < 1e-1, (err_y, err_h)

    print("KERNEL_OK")
</pallas_src>

<mosaic_0001>
module attributes {stable_mosaic.version = 11 : i64} {
  func.func @_gru_net_kernel(%arg0: i32, %arg1: memref<64x128xbf16, #tpu.memory_space<vmem>>, %arg2: memref<8x8x128xf32, #tpu.memory_space<vmem>>, %arg3: memref<8x128xf32, #tpu.memory_space<vmem>>, %arg4: memref<128x384xbf16, #tpu.memory_space<vmem>>, %arg5: memref<128x384xbf16, #tpu.memory_space<vmem>>, %arg6: memref<1x384xf32, #tpu.memory_space<vmem>>, %arg7: memref<1x384xf32, #tpu.memory_space<vmem>>, %arg8: memref<128x128xbf16, #tpu.memory_space<vmem>>, %arg9: memref<1x128xf32, #tpu.memory_space<vmem>>, %arg10: memref<64x128xf32, #tpu.memory_space<vmem>>, %arg11: memref<8x128xf32, #tpu.memory_space<vmem>>, %arg12: memref<8x8x128xf32, #tpu.memory_space<vmem>>) attributes {dimension_semantics = [#tpu.dimension_semantics<arbitrary>], iteration_bounds = array<i64: 1>, scalar_prefetch = 0 : i64, scratch_operands = 1 : i64, tpu.core_type = #tpu.core_type<tc>, window_params = [{pipeline_mode = #tpu.pipeline_mode<synchronous>, transform_indices = @transform_0, window_bounds = array<i64: 64, 128>}, {pipeline_mode = #tpu.pipeline_mode<synchronous>, transform_indices = @transform_1, window_bounds = array<i64: 8, 8, 128>}, {pipeline_mode = #tpu.pipeline_mode<synchronous>, transform_indices = @transform_2, window_bounds = array<i64: 8, 128>}, {pipeline_mode = #tpu.pipeline_mode<synchronous>, transform_indices = @transform_3, window_bounds = array<i64: 128, 384>}, {pipeline_mode = #tpu.pipeline_mode<synchronous>, transform_indices = @transform_4, window_bounds = array<i64: 128, 384>}, {pipeline_mode = #tpu.pipeline_mode<synchronous>, transform_indices = @transform_5, window_bounds = array<i64: 1, 384>}, {pipeline_mode = #tpu.pipeline_mode<synchronous>, transform_indices = @transform_6, window_bounds = array<i64: 1, 384>}, {pipeline_mode = #tpu.pipeline_mode<synchronous>, transform_indices = @transform_7, window_bounds = array<i64: 128, 128>}, {pipeline_mode = #tpu.pipeline_mode<synchronous>, transform_indices = @transform_8, window_bounds = array<i64: 1, 128>}, {pipeline_mode = #tpu.pipeline_mode<synchronous>, transform_indices = @transform_9, window_bounds = array<i64: 64, 128>}, {pipeline_mode = #tpu.pipeline_mode<synchronous>, transform_indices = @transform_10, window_bounds = array<i64: 8, 128>}]} {
    %c0 = arith.constant 0 : index
    %c0_0 = arith.constant 0 : index
    %0 = vector.load %arg1[%c0, %c0_0] : memref<64x128xbf16, #tpu.memory_space<vmem>>, vector<64x128xbf16>
    %c0_1 = arith.constant 0 : index
    %c0_2 = arith.constant 0 : index
    %1 = vector.load %arg4[%c0_1, %c0_2] : memref<128x384xbf16, #tpu.memory_space<vmem>>, vector<128x384xbf16>
    %cst = arith.constant dense<0.000000e+00> : vector<64x384xf32>
    %2 = tpu.matmul %0, %1, %cst {dimension_numbers = #tpu.dot_dimension_numbers<[1], [0], [0], [1], [0, 0, 1, 1], [], []>} : vector<64x128xbf16>, vector<128x384xbf16>, vector<64x384xf32> -> vector<64x384xf32>
    %c0_3 = arith.constant 0 : index
    %c0_4 = arith.constant 0 : index
    %3 = vector.load %arg6[%c0_3, %c0_4] : memref<1x384xf32, #tpu.memory_space<vmem>>, vector<1x384xf32>
    %4 = vector.broadcast %3 : vector<1x384xf32> to vector<64x384xf32>
    %5 = arith.addf %2, %4 : vector<64x384xf32>
    %c0_5 = arith.constant 0 : index
    %c0_6 = arith.constant 0 : index
    %6 = vector.load %arg7[%c0_5, %c0_6] : memref<1x384xf32, #tpu.memory_space<vmem>>, vector<1x384xf32>
    %7 = vector.shape_cast %6 : vector<1x384xf32> to vector<1x384xf32>
    %8 = vector.broadcast %7 : vector<1x384xf32> to vector<8x384xf32>
    %c0_7 = arith.constant 0 : index
    %c0_8 = arith.constant 0 : index
    %9 = vector.load %arg3[%c0_7, %c0_8] : memref<8x128xf32, #tpu.memory_space<vmem>>, vector<8x128xf32>
    %c0_9 = arith.constant 0 : index
    %c0_10 = arith.constant 0 : index
    %c0_11 = arith.constant 0 : index
    %10 = vector.load %arg2[%c0_9, %c0_10, %c0_11] : memref<8x8x128xf32, #tpu.memory_space<vmem>>, vector<1x8x128xf32>
    %11 = vector.shape_cast %10 : vector<1x8x128xf32> to vector<8x128xf32>
    %12 = arith.mulf %9, %11 : vector<8x128xf32>
    %13 = arith.truncf %12 : vector<8x128xf32> to vector<8x128xbf16>
    %c0_12 = arith.constant 0 : index
    %c0_13 = arith.constant 0 : index
    %14 = vector.load %arg5[%c0_12, %c0_13] : memref<128x384xbf16, #tpu.memory_space<vmem>>, vector<128x384xbf16>
    %cst_14 = arith.constant dense<0.000000e+00> : vector<8x384xf32>
    %15 = tpu.matmul %13, %14, %cst_14 {dimension_numbers = #tpu.dot_dimension_numbers<[1], [0], [0], [1], [0, 0, 1, 1], [], []>} : vector<8x128xbf16>, vector<128x384xbf16>, vector<8x384xf32> -> vector<8x384xf32>
    %16 = arith.addf %15, %8 : vector<8x384xf32>
    %17 = vector.extract_strided_slice %5 {offsets = [0, 0], sizes = [8, 384], strides = [1, 1]} : vector<64x384xf32> to vector<8x384xf32>
    %18 = vector.extract_strided_slice %17 {offsets = [0, 0], sizes = [8, 128], strides = [1, 1]} : vector<8x384xf32> to vector<8x128xf32>
    %19 = vector.extract_strided_slice %16 {offsets = [0, 0], sizes = [8, 128], strides = [1, 1]} : vector<8x384xf32> to vector<8x128xf32>
    %20 = arith.addf %18, %19 : vector<8x128xf32>
    %21 = arith.negf %20 : vector<8x128xf32>
    %22 = math.exp %21 : vector<8x128xf32>
    %cst_15 = arith.constant 1.000000e+00 : f32
    %23 = vector.broadcast %cst_15 : f32 to vector<8x128xf32>
    %24 = arith.addf %23, %22 : vector<8x128xf32>
    %25 = arith.divf %23, %24 : vector<8x128xf32>
    %26 = vector.extract_strided_slice %17 {offsets = [0, 128], sizes = [8, 128], strides = [1, 1]} : vector<8x384xf32> to vector<8x128xf32>
    %27 = vector.extract_strided_slice %16 {offsets = [0, 128], sizes = [8, 128], strides = [1, 1]} : vector<8x384xf32> to vector<8x128xf32>
    %28 = arith.addf %26, %27 : vector<8x128xf32>
    %29 = arith.negf %28 : vector<8x128xf32>
    %30 = math.exp %29 : vector<8x128xf32>
    %cst_16 = arith.constant 1.000000e+00 : f32
    %31 = vector.broadcast %cst_16 : f32 to vector<8x128xf32>
    %32 = arith.addf %31, %30 : vector<8x128xf32>
    %33 = arith.divf %31, %32 : vector<8x128xf32>
    %34 = vector.extract_strided_slice %17 {offsets = [0, 256], sizes = [8, 128], strides = [1, 1]} : vector<8x384xf32> to vector<8x128xf32>
    %35 = vector.extract_strided_slice %16 {offsets = [0, 256], sizes = [8, 128], strides = [1, 1]} : vector<8x384xf32> to vector<8x128xf32>
    %36 = arith.mulf %25, %35 : vector<8x128xf32>
    %37 = arith.addf %34, %36 : vector<8x128xf32>
    %38 = math.tanh %37 : vector<8x128xf32>
    %39 = arith.subf %12, %38 : vector<8x128xf32>
    %40 = arith.mulf %33, %39 : vector<8x128xf32>
    %41 = arith.addf %38, %40 : vector<8x128xf32>
    %c0_17 = arith.constant 0 : index
    %c0_18 = arith.constant 0 : index
    %c0_19 = arith.constant 0 : index
    %42 = vector.load %arg12[%c0_17, %c0_18, %c0_19] : memref<8x8x128xf32, #tpu.memory_space<vmem>>, vector<1x8x128xf32>
    %43 = vector.shape_cast %42 : vector<1x8x128xf32> to vector<8x128xf32>
    %44 = vector.shape_cast %41 : vector<8x128xf32> to vector<1x8x128xf32>
    tpu.vector_store %arg12[%c0_17, %c0_18, %c0_19], %44 {strides = array<i32>} : memref<8x8x128xf32, #tpu.memory_space<vmem>>, vector<1x8x128xf32>,
    %c1 = arith.constant 1 : index
    %c0_20 = arith.constant 0 : index
    %c0_21 = arith.constant 0 : index
    %45 = vector.load %arg2[%c1, %c0_20, %c0_21] : memref<8x8x128xf32, #tpu.memory_space<vmem>>, vector<1x8x128xf32>
    %46 = vector.shape_cast %45 : vector<1x8x128xf32> to vector<8x128xf32>
    %47 = arith.mulf %41, %46 : vector<8x128xf32>
    %48 = arith.truncf %47 : vector<8x128xf32> to vector<8x128xbf16>
    %c0_22 = arith.constant 0 : index
    %c0_23 = arith.constant 0 : index
    %49 = vector.load %arg5[%c0_22, %c0_23] : memref<128x384xbf16, #tpu.memory_space<vmem>>, vector<128x384xbf16>
    %cst_24 = arith.constant dense<0.000000e+00> : vector<8x384xf32>
    %50 = tpu.matmul %48, %49, %cst_24 {dimension_numbers = #tpu.dot_dimension_numbers<[1], [0], [0], [1], [0, 0, 1, 1], [], []>} : vector<8x128xbf16>, vector<128x384xbf16>, vector<8x384xf32> -> vector<8x384xf32>
    %51 = arith.addf %50, %8 : vector<8x384xf32>
    %52 = vector.extract_strided_slice %5 {offsets = [8, 0], sizes = [8, 384], strides = [1, 1]} : vector<64x384xf32> to vector<8x384xf32>
    %53 = vector.extract_strided_slice %52 {offsets = [0, 0], sizes = [8, 128], strides = [1, 1]} : vector<8x384xf32> to vector<8x128xf32>
    %54 = vector.extract_strided_slice %51 {offsets = [0, 0], sizes = [8, 128], strides = [1, 1]} : vector<8x384xf32> to vector<8x128xf32>
    %55 = arith.addf %53, %54 : vector<8x128xf32>
    %56 = arith.negf %55 : vector<8x128xf32>
    %57 = math.exp %56 : vector<8x128xf32>
    %cst_25 = arith.constant 1.000000e+00 : f32
    %58 = vector.broadcast %cst_25 : f32 to vector<8x128xf32>
    %59 = arith.addf %58, %57 : vector<8x128xf32>
    %60 = arith.divf %58, %59 : vector<8x128xf32>
    %61 = vector.extract_strided_slice %52 {offsets = [0, 128], sizes = [8, 128], strides = [1, 1]} : vector<8x384xf32> to vector<8x128xf32>
    %62 = vector.extract_strided_slice %51 {offsets = [0, 128], sizes = [8, 128], strides = [1, 1]} : vector<8x384xf32> to vector<8x128xf32>
    %63 = arith.addf %61, %62 : vector<8x128xf32>
    %64 = arith.negf %63 : vector<8x128xf32>
    %65 = math.exp %64 : vector<8x128xf32>
    %cst_26 = arith.constant 1.000000e+00 : f32
    %66 = vector.broadcast %cst_26 : f32 to vector<8x128xf32>
    %67 = arith.addf %66, %65 : vector<8x128xf32>
    %68 = arith.divf %66, %67 : vector<8x128xf32>
    %69 = vector.extract_strided_slice %52 {offsets = [0, 256], sizes = [8, 128], strides = [1, 1]} : vector<8x384xf32> to vector<8x128xf32>
    %70 = vector.extract_strided_slice %51 {offsets = [0, 256], sizes = [8, 128], strides = [1, 1]} : vector<8x384xf32> to vector<8x128xf32>
    %71 = arith.mulf %60, %70 : vector<8x128xf32>
    %72 = arith.addf %69, %71 : vector<8x128xf32>
    %73 = math.tanh %72 : vector<8x128xf32>
    %74 = arith.subf %47, %73 : vector<8x128xf32>
    %75 = arith.mulf %68, %74 : vector<8x128xf32>
    %76 = arith.addf %73, %75 : vector<8x128xf32>
    %c1_27 = arith.constant 1 : index
    %c0_28 = arith.constant 0 : index
    %c0_29 = arith.constant 0 : index
    %77 = vector.load %arg12[%c1_27, %c0_28, %c0_29] : memref<8x8x128xf32, #tpu.memory_space<vmem>>, vector<1x8x128xf32>
    %78 = vector.shape_cast %77 : vector<1x8x128xf32> to vector<8x128xf32>
    %79 = vector.shape_cast %76 : vector<8x128xf32> to vector<1x8x128xf32>
    tpu.vector_store %arg12[%c1_27, %c0_28, %c0_29], %79 {strides = array<i32>} : memref<8x8x128xf32, #tpu.memory_space<vmem>>, vector<1x8x128xf32>,
    %c2 = arith.constant 2 : index
    %c0_30 = arith.constant 0 : index
    %c0_31 = arith.constant 0 : index
    %80 = vector.load %arg2[%c2, %c0_30, %c0_31] : memref<8x8x128xf32, #tpu.memory_space<vmem>>, vector<1x8x128xf32>
    %81 = vector.shape_cast %80 : vector<1x8x128xf32> to vector<8x128xf32>
    %82 = arith.mulf %76, %81 : vector<8x128xf32>
    %83 = arith.truncf %82 : vector<8x128xf32> to vector<8x128xbf16>
    %c0_32 = arith.constant 0 : index
    %c0_33 = arith.constant 0 : index
    %84 = vector.load %arg5[%c0_32, %c0_33] : memref<128x384xbf16, #tpu.memory_space<vmem>>, vector<128x384xbf16>
    %cst_34 = arith.constant dense<0.000000e+00> : vector<8x384xf32>
    %85 = tpu.matmul %83, %84, %cst_34 {dimension_numbers = #tpu.dot_dimension_numbers<[1], [0], [0], [1], [0, 0, 1, 1], [], []>} : vector<8x128xbf16>, vector<128x384xbf16>, vector<8x384xf32> -> vector<8x384xf32>
    %86 = arith.addf %85, %8 : vector<8x384xf32>
    %87 = vector.extract_strided_slice %5 {offsets = [16, 0], sizes = [8, 384], strides = [1, 1]} : vector<64x384xf32> to vector<8x384xf32>
    %88 = vector.extract_strided_slice %87 {offsets = [0, 0], sizes = [8, 128], strides = [1, 1]} : vector<8x384xf32> to vector<8x128xf32>
    %89 = vector.extract_strided_slice %86 {offsets = [0, 0], sizes = [8, 128], strides = [1, 1]} : vector<8x384xf32> to vector<8x128xf32>
    %90 = arith.addf %88, %89 : vector<8x128xf32>
    %91 = arith.negf %90 : vector<8x128xf32>
    %92 = math.exp %91 : vector<8x128xf32>
    %cst_35 = arith.constant 1.000000e+00 : f32
    %93 = vector.broadcast %cst_35 : f32 to vector<8x128xf32>
    %94 = arith.addf %93, %92 : vector<8x128xf32>
    %95 = arith.divf %93, %94 : vector<8x128xf32>
    %96 = vector.extract_strided_slice %87 {offsets = [0, 128], sizes = [8, 128], strides = [1, 1]} : vector<8x384xf32> to vector<8x128xf32>
    %97 = vector.extract_strided_slice %86 {offsets = [0, 128], sizes = [8, 128], strides = [1, 1]} : vector<8x384xf32> to vector<8x128xf32>
    %98 = arith.addf %96, %97 : vector<8x128xf32>
    %99 = arith.negf %98 : vector<8x128xf32>
    %100 = math.exp %99 : vector<8x128xf32>
    %cst_36 = arith.constant 1.000000e+00 : f32
    %101 = vector.broadcast %cst_36 : f32 to vector<8x128xf32>
    %102 = arith.addf %101, %100 : vector<8x128xf32>
    %103 = arith.divf %101, %102 : vector<8x128xf32>
    %104 = vector.extract_strided_slice %87 {offsets = [0, 256], sizes = [8, 128], strides = [1, 1]} : vector<8x384xf32> to vector<8x128xf32>
    %105 = vector.extract_strided_slice %86 {offsets = [0, 256], sizes = [8, 128], strides = [1, 1]} : vector<8x384xf32> to vector<8x128xf32>
    %106 = arith.mulf %95, %105 : vector<8x128xf32>
    %107 = arith.addf %104, %106 : vector<8x128xf32>
    %108 = math.tanh %107 : vector<8x128xf32>
    %109 = arith.subf %82, %108 : vector<8x128xf32>
    %110 = arith.mulf %103, %109 : vector<8x128xf32>
    %111 = arith.addf %108, %110 : vector<8x128xf32>
    %c2_37 = arith.constant 2 : index
    %c0_38 = arith.constant 0 : index
    %c0_39 = arith.constant 0 : index
    %112 = vector.load %arg12[%c2_37, %c0_38, %c0_39] : memref<8x8x128xf32, #tpu.memory_space<vmem>>, vector<1x8x128xf32>
    %113 = vector.shape_cast %112 : vector<1x8x128xf32> to vector<8x128xf32>
    %114 = vector.shape_cast %111 : vector<8x128xf32> to vector<1x8x128xf32>
    tpu.vector_store %arg12[%c2_37, %c0_38, %c0_39], %114 {strides = array<i32>} : memref<8x8x128xf32, #tpu.memory_space<vmem>>, vector<1x8x128xf32>,
    %c3 = arith.constant 3 : index
    %c0_40 = arith.constant 0 : index
    %c0_41 = arith.constant 0 : index
    %115 = vector.load %arg2[%c3, %c0_40, %c0_41] : memref<8x8x128xf32, #tpu.memory_space<vmem>>, vector<1x8x128xf32>
    %116 = vector.shape_cast %115 : vector<1x8x128xf32> to vector<8x128xf32>
    %117 = arith.mulf %111, %116 : vector<8x128xf32>
    %118 = arith.truncf %117 : vector<8x128xf32> to vector<8x128xbf16>
    %c0_42 = arith.constant 0 : index
    %c0_43 = arith.constant 0 : index
    %119 = vector.load %arg5[%c0_42, %c0_43] : memref<128x384xbf16, #tpu.memory_space<vmem>>, vector<128x384xbf16>
    %cst_44 = arith.constant dense<0.000000e+00> : vector<8x384xf32>
    %120 = tpu.matmul %118, %119, %cst_44 {dimension_numbers = #tpu.dot_dimension_numbers<[1], [0], [0], [1], [0, 0, 1, 1], [], []>} : vector<8x128xbf16>, vector<128x384xbf16>, vector<8x384xf32> -> vector<8x384xf32>
    %121 = arith.addf %120, %8 : vector<8x384xf32>
    %122 = vector.extract_strided_slice %5 {offsets = [24, 0], sizes = [8, 384], strides = [1, 1]} : vector<64x384xf32> to vector<8x384xf32>
    %123 = vector.extract_strided_slice %122 {offsets = [0, 0], sizes = [8, 128], strides = [1, 1]} : vector<8x384xf32> to vector<8x128xf32>
    %124 = vector.extract_strided_slice %121 {offsets = [0, 0], sizes = [8, 128], strides = [1, 1]} : vector<8x384xf32> to vector<8x128xf32>
    %125 = arith.addf %123, %124 : vector<8x128xf32>
    %126 = arith.negf %125 : vector<8x128xf32>
    %127 = math.exp %126 : vector<8x128xf32>
    %cst_45 = arith.constant 1.000000e+00 : f32
    %128 = vector.broadcast %cst_45 : f32 to vector<8x128xf32>
    %129 = arith.addf %128, %127 : vector<8x128xf32>
    %130 = arith.divf %128, %129 : vector<8x128xf32>
    %131 = vector.extract_strided_slice %122 {offsets = [0, 128], sizes = [8, 128], strides = [1, 1]} : vector<8x384xf32> to vector<8x128xf32>
    %132 = vector.extract_strided_slice %121 {offsets = [0, 128], sizes = [8, 128], strides = [1, 1]} : vector<8x384xf32> to vector<8x128xf32>
    %133 = arith.addf %131, %132 : vector<8x128xf32>
    %134 = arith.negf %133 : vector<8x128xf32>
    %135 = math.exp %134 : vector<8x128xf32>
    %cst_46 = arith.constant 1.000000e+00 : f32
    %136 = vector.broadcast %cst_46 : f32 to vector<8x128xf32>
    %137 = arith.addf %136, %135 : vector<8x128xf32>
    %138 = arith.divf %136, %137 : vector<8x128xf32>
    %139 = vector.extract_strided_slice %122 {offsets = [0, 256], sizes = [8, 128], strides = [1, 1]} : vector<8x384xf32> to vector<8x128xf32>
    %140 = vector.extract_strided_slice %121 {offsets = [0, 256], sizes = [8, 128], strides = [1, 1]} : vector<8x384xf32> to vector<8x128xf32>
    %141 = arith.mulf %130, %140 : vector<8x128xf32>
    %142 = arith.addf %139, %141 : vector<8x128xf32>
    %143 = math.tanh %142 : vector<8x128xf32>
    %144 = arith.subf %117, %143 : vector<8x128xf32>
    %145 = arith.mulf %138, %144 : vector<8x128xf32>
    %146 = arith.addf %143, %145 : vector<8x128xf32>
    %c3_47 = arith.constant 3 : index
    %c0_48 = arith.constant 0 : index
    %c0_49 = arith.constant 0 : index
    %147 = vector.load %arg12[%c3_47, %c0_48, %c0_49] : memref<8x8x128xf32, #tpu.memory_space<vmem>>, vector<1x8x128xf32>
    %148 = vector.shape_cast %147 : vector<1x8x128xf32> to vector<8x128xf32>
    %149 = vector.shape_cast %146 : vector<8x128xf32> to vector<1x8x128xf32>
    tpu.vector_store %arg12[%c3_47, %c0_48, %c0_49], %149 {strides = array<i32>} : memref<8x8x128xf32, #tpu.memory_space<vmem>>, vector<1x8x128xf32>,
    %c4 = arith.constant 4 : index
    %c0_50 = arith.constant 0 : index
    %c0_51 = arith.constant 0 : index
    %150 = vector.load %arg2[%c4, %c0_50, %c0_51] : memref<8x8x128xf32, #tpu.memory_space<vmem>>, vector<1x8x128xf32>
    %151 = vector.shape_cast %150 : vector<1x8x128xf32> to vector<8x128xf32>
    %152 = arith.mulf %146, %151 : vector<8x128xf32>
    %153 = arith.truncf %152 : vector<8x128xf32> to vector<8x128xbf16>
    %c0_52 = arith.constant 0 : index
    %c0_53 = arith.constant 0 : index
    %154 = vector.load %arg5[%c0_52, %c0_53] : memref<128x384xbf16, #tpu.memory_space<vmem>>, vector<128x384xbf16>
    %cst_54 = arith.constant dense<0.000000e+00> : vector<8x384xf32>
    %155 = tpu.matmul %153, %154, %cst_54 {dimension_numbers = #tpu.dot_dimension_numbers<[1], [0], [0], [1], [0, 0, 1, 1], [], []>} : vector<8x128xbf16>, vector<128x384xbf16>, vector<8x384xf32> -> vector<8x384xf32>
    %156 = arith.addf %155, %8 : vector<8x384xf32>
    %157 = vector.extract_strided_slice %5 {offsets = [32, 0], sizes = [8, 384], strides = [1, 1]} : vector<64x384xf32> to vector<8x384xf32>
    %158 = vector.extract_strided_slice %157 {offsets = [0, 0], sizes = [8, 128], strides = [1, 1]} : vector<8x384xf32> to vector<8x128xf32>
    %159 = vector.extract_strided_slice %156 {offsets = [0, 0], sizes = [8, 128], strides = [1, 1]} : vector<8x384xf32> to vector<8x128xf32>
    %160 = arith.addf %158, %159 : vector<8x128xf32>
    %161 = arith.negf %160 : vector<8x128xf32>
    %162 = math.exp %161 : vector<8x128xf32>
    %cst_55 = arith.constant 1.000000e+00 : f32
    %163 = vector.broadcast %cst_55 : f32 to vector<8x128xf32>
    %164 = arith.addf %163, %162 : vector<8x128xf32>
    %165 = arith.divf %163, %164 : vector<8x128xf32>
    %166 = vector.extract_strided_slice %157 {offsets = [0, 128], sizes = [8, 128], strides = [1, 1]} : vector<8x384xf32> to vector<8x128xf32>
    %167 = vector.extract_strided_slice %156 {offsets = [0, 128], sizes = [8, 128], strides = [1, 1]} : vector<8x384xf32> to vector<8x128xf32>
    %168 = arith.addf %166, %167 : vector<8x128xf32>
    %169 = arith.negf %168 : vector<8x128xf32>
    %170 = math.exp %169 : vector<8x128xf32>
    %cst_56 = arith.constant 1.000000e+00 : f32
    %171 = vector.broadcast %cst_56 : f32 to vector<8x128xf32>
    %172 = arith.addf %171, %170 : vector<8x128xf32>
    %173 = arith.divf %171, %172 : vector<8x128xf32>
    %174 = vector.extract_strided_slice %157 {offsets = [0, 256], sizes = [8, 128], strides = [1, 1]} : vector<8x384xf32> to vector<8x128xf32>
    %175 = vector.extract_strided_slice %156 {offsets = [0, 256], sizes = [8, 128], strides = [1, 1]} : vector<8x384xf32> to vector<8x128xf32>
    %176 = arith.mulf %165, %175 : vector<8x128xf32>
    %177 = arith.addf %174, %176 : vector<8x128xf32>
    %178 = math.tanh %177 : vector<8x128xf32>
    %179 = arith.subf %152, %178 : vector<8x128xf32>
    %180 = arith.mulf %173, %179 : vector<8x128xf32>
    %181 = arith.addf %178, %180 : vector<8x128xf32>
    %c4_57 = arith.constant 4 : index
    %c0_58 = arith.constant 0 : index
    %c0_59 = arith.constant 0 : index
    %182 = vector.load %arg12[%c4_57, %c0_58, %c0_59] : memref<8x8x128xf32, #tpu.memory_space<vmem>>, vector<1x8x128xf32>
    %183 = vector.shape_cast %182 : vector<1x8x128xf32> to vector<8x128xf32>
    %184 = vector.shape_cast %181 : vector<8x128xf32> to vector<1x8x128xf32>
    tpu.vector_store %arg12[%c4_57, %c0_58, %c0_59], %184 {strides = array<i32>} : memref<8x8x128xf32, #tpu.memory_space<vmem>>, vector<1x8x128xf32>,
    %c5 = arith.constant 5 : index
    %c0_60 = arith.constant 0 : index
    %c0_61 = arith.constant 0 : index
    %185 = vector.load %arg2[%c5, %c0_60, %c0_61] : memref<8x8x128xf32, #tpu.memory_space<vmem>>, vector<1x8x128xf32>
    %186 = vector.shape_cast %185 : vector<1x8x128xf32> to vector<8x128xf32>
    %187 = arith.mulf %181, %186 : vector<8x128xf32>
    %188 = arith.truncf %187 : vector<8x128xf32> to vector<8x128xbf16>
    %c0_62 = arith.constant 0 : index
    %c0_63 = arith.constant 0 : index
    %189 = vector.load %arg5[%c0_62, %c0_63] : memref<128x384xbf16, #tpu.memory_space<vmem>>, vector<128x384xbf16>
    %cst_64 = arith.constant dense<0.000000e+00> : vector<8x384xf32>
    %190 = tpu.matmul %188, %189, %cst_64 {dimension_numbers = #tpu.dot_dimension_numbers<[1], [0], [0], [1], [0, 0, 1, 1], [], []>} : vector<8x128xbf16>, vector<128x384xbf16>, vector<8x384xf32> -> vector<8x384xf32>
    %191 = arith.addf %190, %8 : vector<8x384xf32>
    %192 = vector.extract_strided_slice %5 {offsets = [40, 0], sizes = [8, 384], strides = [1, 1]} : vector<64x384xf32> to vector<8x384xf32>
    %193 = vector.extract_strided_slice %192 {offsets = [0, 0], sizes = [8, 128], strides = [1, 1]} : vector<8x384xf32> to vector<8x128xf32>
    %194 = vector.extract_strided_slice %191 {offsets = [0, 0], sizes = [8, 128], strides = [1, 1]} : vector<8x384xf32> to vector<8x128xf32>
    %195 = arith.addf %193, %194 : vector<8x128xf32>
    %196 = arith.negf %195 : vector<8x128xf32>
    %197 = math.exp %196 : vector<8x128xf32>
    %cst_65 = arith.constant 1.000000e+00 : f32
    %198 = vector.broadcast %cst_65 : f32 to vector<8x128xf32>
    %199 = arith.addf %198, %197 : vector<8x128xf32>
    %200 = arith.divf %198, %199 : vector<8x128xf32>
    %201 = vector.extract_strided_slice %192 {offsets = [0, 128], sizes = [8, 128], strides = [1, 1]} : vector<8x384xf32> to vector<8x128xf32>
    %202 = vector.extract_strided_slice %191 {offsets = [0, 128], sizes = [8, 128], strides = [1, 1]} : vector<8x384xf32> to vector<8x128xf32>
    %203 = arith.addf %201, %202 : vector<8x128xf32>
    %204 = arith.negf %203 : vector<8x128xf32>
    %205 = math.exp %204 : vector<8x128xf32>
    %cst_66 = arith.constant 1.000000e+00 : f32
    %206 = vector.broadcast %cst_66 : f32 to vector<8x128xf32>
    %207 = arith.addf %206, %205 : vector<8x128xf32>
    %208 = arith.divf %206, %207 : vector<8x128xf32>
    %209 = vector.extract_strided_slice %192 {offsets = [0, 256], sizes = [8, 128], strides = [1, 1]} : vector<8x384xf32> to vector<8x128xf32>
    %210 = vector.extract_strided_slice %191 {offsets = [0, 256], sizes = [8, 128], strides = [1, 1]} : vector<8x384xf32> to vector<8x128xf32>
    %211 = arith.mulf %200, %210 : vector<8x128xf32>
    %212 = arith.addf %209, %211 : vector<8x128xf32>
    %213 = math.tanh %212 : vector<8x128xf32>
    %214 = arith.subf %187, %213 : vector<8x128xf32>
    %215 = arith.mulf %208, %214 : vector<8x128xf32>
    %216 = arith.addf %213, %215 : vector<8x128xf32>
    %c5_67 = arith.constant 5 : index
    %c0_68 = arith.constant 0 : index
    %c0_69 = arith.constant 0 : index
    %217 = vector.load %arg12[%c5_67, %c0_68, %c0_69] : memref<8x8x128xf32, #tpu.memory_space<vmem>>, vector<1x8x128xf32>
    %218 = vector.shape_cast %217 : vector<1x8x128xf32> to vector<8x128xf32>
    %219 = vector.shape_cast %216 : vector<8x128xf32> to vector<1x8x128xf32>
    tpu.vector_store %arg12[%c5_67, %c0_68, %c0_69], %219 {strides = array<i32>} : memref<8x8x128xf32, #tpu.memory_space<vmem>>, vector<1x8x128xf32>,
    %c6 = arith.constant 6 : index
    %c0_70 = arith.constant 0 : index
    %c0_71 = arith.constant 0 : index
    %220 = vector.load %arg2[%c6, %c0_70, %c0_71] : memref<8x8x128xf32, #tpu.memory_space<vmem>>, vector<1x8x128xf32>
    %221 = vector.shape_cast %220 : vector<1x8x128xf32> to vector<8x128xf32>
    %222 = arith.mulf %216, %221 : vector<8x128xf32>
    %223 = arith.truncf %222 : vector<8x128xf32> to vector<8x128xbf16>
    %c0_72 = arith.constant 0 : index
    %c0_73 = arith.constant 0 : index
    %224 = vector.load %arg5[%c0_72, %c0_73] : memref<128x384xbf16, #tpu.memory_space<vmem>>, vector<128x384xbf16>
    %cst_74 = arith.constant dense<0.000000e+00> : vector<8x384xf32>
    %225 = tpu.matmul %223, %224, %cst_74 {dimension_numbers = #tpu.dot_dimension_numbers<[1], [0], [0], [1], [0, 0, 1, 1], [], []>} : vector<8x128xbf16>, vector<128x384xbf16>, vector<8x384xf32> -> vector<8x384xf32>
    %226 = arith.addf %225, %8 : vector<8x384xf32>
    %227 = vector.extract_strided_slice %5 {offsets = [48, 0], sizes = [8, 384], strides = [1, 1]} : vector<64x384xf32> to vector<8x384xf32>
    %228 = vector.extract_strided_slice %227 {offsets = [0, 0], sizes = [8, 128], strides = [1, 1]} : vector<8x384xf32> to vector<8x128xf32>
    %229 = vector.extract_strided_slice %226 {offsets = [0, 0], sizes = [8, 128], strides = [1, 1]} : vector<8x384xf32> to vector<8x128xf32>
    %230 = arith.addf %228, %229 : vector<8x128xf32>
    %231 = arith.negf %230 : vector<8x128xf32>
    %232 = math.exp %231 : vector<8x128xf32>
    %cst_75 = arith.constant 1.000000e+00 : f32
    %233 = vector.broadcast %cst_75 : f32 to vector<8x128xf32>
    %234 = arith.addf %233, %232 : vector<8x128xf32>
    %235 = arith.divf %233, %234 : vector<8x128xf32>
    %236 = vector.extract_strided_slice %227 {offsets = [0, 128], sizes = [8, 128], strides = [1, 1]} : vector<8x384xf32> to vector<8x128xf32>
    %237 = vector.extract_strided_slice %226 {offsets = [0, 128], sizes = [8, 128], strides = [1, 1]} : vector<8x384xf32> to vector<8x128xf32>
    %238 = arith.addf %236, %237 : vector<8x128xf32>
    %239 = arith.negf %238 : vector<8x128xf32>
    %240 = math.exp %239 : vector<8x128xf32>
    %cst_76 = arith.constant 1.000000e+00 : f32
    %241 = vector.broadcast %cst_76 : f32 to vector<8x128xf32>
    %242 = arith.addf %241, %240 : vector<8x128xf32>
    %243 = arith.divf %241, %242 : vector<8x128xf32>
    %244 = vector.extract_strided_slice %227 {offsets = [0, 256], sizes = [8, 128], strides = [1, 1]} : vector<8x384xf32> to vector<8x128xf32>
    %245 = vector.extract_strided_slice %226 {offsets = [0, 256], sizes = [8, 128], strides = [1, 1]} : vector<8x384xf32> to vector<8x128xf32>
    %246 = arith.mulf %235, %245 : vector<8x128xf32>
    %247 = arith.addf %244, %246 : vector<8x128xf32>
    %248 = math.tanh %247 : vector<8x128xf32>
    %249 = arith.subf %222, %248 : vector<8x128xf32>
    %250 = arith.mulf %243, %249 : vector<8x128xf32>
    %251 = arith.addf %248, %250 : vector<8x128xf32>
    %c6_77 = arith.constant 6 : index
    %c0_78 = arith.constant 0 : index
    %c0_79 = arith.constant 0 : index
    %252 = vector.load %arg12[%c6_77, %c0_78, %c0_79] : memref<8x8x128xf32, #tpu.memory_space<vmem>>, vector<1x8x128xf32>
    %253 = vector.shape_cast %252 : vector<1x8x128xf32> to vector<8x128xf32>
    %254 = vector.shape_cast %251 : vector<8x128xf32> to vector<1x8x128xf32>
    tpu.vector_store %arg12[%c6_77, %c0_78, %c0_79], %254 {strides = array<i32>} : memref<8x8x128xf32, #tpu.memory_space<vmem>>, vector<1x8x128xf32>,
    %c7 = arith.constant 7 : index
    %c0_80 = arith.constant 0 : index
    %c0_81 = arith.constant 0 : index
    %255 = vector.load %arg2[%c7, %c0_80, %c0_81] : memref<8x8x128xf32, #tpu.memory_space<vmem>>, vector<1x8x128xf32>
    %256 = vector.shape_cast %255 : vector<1x8x128xf32> to vector<8x128xf32>
    %257 = arith.mulf %251, %256 : vector<8x128xf32>
    %258 = arith.truncf %257 : vector<8x128xf32> to vector<8x128xbf16>
    %c0_82 = arith.constant 0 : index
    %c0_83 = arith.constant 0 : index
    %259 = vector.load %arg5[%c0_82, %c0_83] : memref<128x384xbf16, #tpu.memory_space<vmem>>, vector<128x384xbf16>
    %cst_84 = arith.constant dense<0.000000e+00> : vector<8x384xf32>
    %260 = tpu.matmul %258, %259, %cst_84 {dimension_numbers = #tpu.dot_dimension_numbers<[1], [0], [0], [1], [0, 0, 1, 1], [], []>} : vector<8x128xbf16>, vector<128x384xbf16>, vector<8x384xf32> -> vector<8x384xf32>
    %261 = arith.addf %260, %8 : vector<8x384xf32>
    %262 = vector.extract_strided_slice %5 {offsets = [56, 0], sizes = [8, 384], strides = [1, 1]} : vector<64x384xf32> to vector<8x384xf32>
    %263 = vector.extract_strided_slice %262 {offsets = [0, 0], sizes = [8, 128], strides = [1, 1]} : vector<8x384xf32> to vector<8x128xf32>
    %264 = vector.extract_strided_slice %261 {offsets = [0, 0], sizes = [8, 128], strides = [1, 1]} : vector<8x384xf32> to vector<8x128xf32>
    %265 = arith.addf %263, %264 : vector<8x128xf32>
    %266 = arith.negf %265 : vector<8x128xf32>
    %267 = math.exp %266 : vector<8x128xf32>
    %cst_85 = arith.constant 1.000000e+00 : f32
    %268 = vector.broadcast %cst_85 : f32 to vector<8x128xf32>
    %269 = arith.addf %268, %267 : vector<8x128xf32>
    %270 = arith.divf %268, %269 : vector<8x128xf32>
    %271 = vector.extract_strided_slice %262 {offsets = [0, 128], sizes = [8, 128], strides = [1, 1]} : vector<8x384xf32> to vector<8x128xf32>
    %272 = vector.extract_strided_slice %261 {offsets = [0, 128], sizes = [8, 128], strides = [1, 1]} : vector<8x384xf32> to vector<8x128xf32>
    %273 = arith.addf %271, %272 : vector<8x128xf32>
    %274 = arith.negf %273 : vector<8x128xf32>
    %275 = math.exp %274 : vector<8x128xf32>
    %cst_86 = arith.constant 1.000000e+00 : f32
    %276 = vector.broadcast %cst_86 : f32 to vector<8x128xf32>
    %277 = arith.addf %276, %275 : vector<8x128xf32>
    %278 = arith.divf %276, %277 : vector<8x128xf32>
    %279 = vector.extract_strided_slice %262 {offsets = [0, 256], sizes = [8, 128], strides = [1, 1]} : vector<8x384xf32> to vector<8x128xf32>
    %280 = vector.extract_strided_slice %261 {offsets = [0, 256], sizes = [8, 128], strides = [1, 1]} : vector<8x384xf32> to vector<8x128xf32>
    %281 = arith.mulf %270, %280 : vector<8x128xf32>
    %282 = arith.addf %279, %281 : vector<8x128xf32>
    %283 = math.tanh %282 : vector<8x128xf32>
    %284 = arith.subf %257, %283 : vector<8x128xf32>
    %285 = arith.mulf %278, %284 : vector<8x128xf32>
    %286 = arith.addf %283, %285 : vector<8x128xf32>
    %c7_87 = arith.constant 7 : index
    %c0_88 = arith.constant 0 : index
    %c0_89 = arith.constant 0 : index
    %287 = vector.load %arg12[%c7_87, %c0_88, %c0_89] : memref<8x8x128xf32, #tpu.memory_space<vmem>>, vector<1x8x128xf32>
    %288 = vector.shape_cast %287 : vector<1x8x128xf32> to vector<8x128xf32>
    %289 = vector.shape_cast %286 : vector<8x128xf32> to vector<1x8x128xf32>
    tpu.vector_store %arg12[%c7_87, %c0_88, %c0_89], %289 {strides = array<i32>} : memref<8x8x128xf32, #tpu.memory_space<vmem>>, vector<1x8x128xf32>,
    %c0_90 = arith.constant 0 : index
    %c0_91 = arith.constant 0 : index
    %290 = vector.load %arg11[%c0_90, %c0_91] : memref<8x128xf32, #tpu.memory_space<vmem>>, vector<8x128xf32>
    tpu.vector_store %arg11[%c0_90, %c0_91], %286 {strides = array<i32>} : memref<8x128xf32, #tpu.memory_space<vmem>>, vector<8x128xf32>,
    %c0_92 = arith.constant 0 : index
    %c0_93 = arith.constant 0 : index
    %c0_94 = arith.constant 0 : index
    %291 = vector.load %arg12[%c0_92, %c0_93, %c0_94] : memref<8x8x128xf32, #tpu.memory_space<vmem>>, vector<8x8x128xf32>
    %292 = vector.shape_cast %291 : vector<8x8x128xf32> to vector<64x128xf32>
    %293 = arith.truncf %292 : vector<64x128xf32> to vector<64x128xbf16>
    %c0_95 = arith.constant 0 : index
    %c0_96 = arith.constant 0 : index
    %294 = vector.load %arg8[%c0_95, %c0_96] : memref<128x128xbf16, #tpu.memory_space<vmem>>, vector<128x128xbf16>
    %cst_97 = arith.constant dense<0.000000e+00> : vector<64x128xf32>
    %295 = tpu.matmul %293, %294, %cst_97 {dimension_numbers = #tpu.dot_dimension_numbers<[1], [0], [0], [1], [0, 0, 1, 1], [], []>} : vector<64x128xbf16>, vector<128x128xbf16>, vector<64x128xf32> -> vector<64x128xf32>
    %c0_98 = arith.constant 0 : index
    %c0_99 = arith.constant 0 : index
    %296 = vector.load %arg9[%c0_98, %c0_99] : memref<1x128xf32, #tpu.memory_space<vmem>>, vector<1x128xf32>
    %297 = vector.broadcast %296 : vector<1x128xf32> to vector<64x128xf32>
    %298 = arith.addf %295, %297 : vector<64x128xf32>
    %cst_100 = arith.constant 0.000000e+00 : f32
    %299 = vector.broadcast %cst_100 : f32 to vector<64x128xf32>
    %300 = arith.maximumf %298, %299 : vector<64x128xf32>
    %c0_101 = arith.constant 0 : index
    %c0_102 = arith.constant 0 : index
    %301 = vector.load %arg10[%c0_101, %c0_102] : memref<64x128xf32, #tpu.memory_space<vmem>>, vector<64x128xf32>
    tpu.vector_store %arg10[%c0_101, %c0_102], %300 {strides = array<i32>} : memref<64x128xf32, #tpu.memory_space<vmem>>, vector<64x128xf32>,
    return
  }
  func.func @transform_0(%arg0: i32) -> (i32, i32) {
    %c0_i32 = arith.constant 0 : i32
    %c0_i32_0 = arith.constant 0 : i32
    %c0_i32_1 = arith.constant 0 : i32
    return %c0_i32, %c0_i32_0 : i32, i32
  }
  func.func @transform_1(%arg0: i32) -> (i32, i32, i32) {
    %c0_i32 = arith.constant 0 : i32
    %c0_i32_0 = arith.constant 0 : i32
    %c0_i32_1 = arith.constant 0 : i32
    %c0_i32_2 = arith.constant 0 : i32
    return %c0_i32, %c0_i32_0, %c0_i32_1 : i32, i32, i32
  }
  func.func @transform_2(%arg0: i32) -> (i32, i32) {
    %c0_i32 = arith.constant 0 : i32
    %c0_i32_0 = arith.constant 0 : i32
    %c0_i32_1 = arith.constant 0 : i32
    return %c0_i32, %c0_i32_0 : i32, i32
  }
  func.func @transform_3(%arg0: i32) -> (i32, i32) {
    %c0_i32 = arith.constant 0 : i32
    %c0_i32_0 = arith.constant 0 : i32
    %c0_i32_1 = arith.constant 0 : i32
    return %c0_i32, %c0_i32_0 : i32, i32
  }
  func.func @transform_4(%arg0: i32) -> (i32, i32) {
    %c0_i32 = arith.constant 0 : i32
    %c0_i32_0 = arith.constant 0 : i32
    %c0_i32_1 = arith.constant 0 : i32
    return %c0_i32, %c0_i32_0 : i32, i32
  }
  func.func @transform_5(%arg0: i32) -> (i32, i32) {
    %c0_i32 = arith.constant 0 : i32
    %c0_i32_0 = arith.constant 0 : i32
    %c0_i32_1 = arith.constant 0 : i32
    return %c0_i32, %c0_i32_0 : i32, i32
  }
  func.func @transform_6(%arg0: i32) -> (i32, i32) {
    %c0_i32 = arith.constant 0 : i32
    %c0_i32_0 = arith.constant 0 : i32
    %c0_i32_1 = arith.constant 0 : i32
    return %c0_i32, %c0_i32_0 : i32, i32
  }
  func.func @transform_7(%arg0: i32) -> (i32, i32) {
    %c0_i32 = arith.constant 0 : i32
    %c0_i32_0 = arith.constant 0 : i32
    %c0_i32_1 = arith.constant 0 : i32
    return %c0_i32, %c0_i32_0 : i32, i32
  }
  func.func @transform_8(%arg0: i32) -> (i32, i32) {
    %c0_i32 = arith.constant 0 : i32
    %c0_i32_0 = arith.constant 0 : i32
    %c0_i32_1 = arith.constant 0 : i32
    return %c0_i32, %c0_i32_0 : i32, i32
  }
  func.func @transform_9(%arg0: i32) -> (i32, i32) {
    %c0_i32 = arith.constant 0 : i32
    %c0_i32_0 = arith.constant 0 : i32
    %c0_i32_1 = arith.constant 0 : i32
    return %c0_i32, %c0_i32_0 : i32, i32
  }
  func.func @transform_10(%arg0: i32) -> (i32, i32) {
    %c0_i32 = arith.constant 0 : i32
    %c0_i32_0 = arith.constant 0 : i32
    %c0_i32_1 = arith.constant 0 : i32
    return %c0_i32, %c0_i32_0 : i32, i32
  }
}

</mosaic_0001>

<llo_original>
// kernel: gru_net_forward.1
$region0: #{gru_net_forward.1}
  #allocation0 [shape = 'u32[]', space=smem, size = 0x4, offset = 0x4, fixed_abs, tag = 'smem constant byte address 0x4 - core index']
  #allocation1 [shape = 'u32[144,128]{1,0:T(1,128)}', space=vmem, size = 0x12000, scoped, tag = 'internal scratch']
  #allocation2 [shape = 'f32[8,8,128]{2,1,0:T(8,128)}', space=vmem, size = 0x8000, scoped, tag = 'scratch operand']
  %s0 = inlined_call_operand.vmem [shape: bf16[64,128], index: 0, kind: input, shape index: {}]
  %s1 = inlined_call_operand.vmem [shape: f32[8,8,128], index: 1, kind: input, shape index: {}]
  %s2 = inlined_call_operand.vmem [shape: f32[8,128], index: 2, kind: input, shape index: {}]
  %s3 = inlined_call_operand.vmem [shape: bf16[128,384], index: 3, kind: input, shape index: {}]
  %s4 = inlined_call_operand.hbm [shape: bf16[128,384], index: 4, kind: input, shape index: {}]
  %s5 = inlined_call_operand.vmem [shape: f32[1,384], index: 5, kind: input, shape index: {}]
  %s6 = inlined_call_operand.vmem [shape: f32[1,384], index: 6, kind: input, shape index: {}]
  %s7 = inlined_call_operand.hbm [shape: bf16[128,128], index: 7, kind: input, shape index: {}]
  %s8 = inlined_call_operand.vmem [shape: f32[1,128], index: 8, kind: input, shape index: {}]
  %s9 = inlined_call_operand.vmem [shape: f32[64,128], index: 9, kind: output, shape index: {0}]
  %s10 = inlined_call_operand.vmem [shape: f32[8,128], index: 10, kind: output, shape index: {1}]
  %11 = xla_tuple %s9, %s10
  %s12 = sld [smem:[#allocation0]]
  $region62: #{gru_net_forward.1} parent=0
    _
  %s14 = ssub.s32 1, %s12
  %s15 = scalar_select 0, %s14, %s12
  $region1: #{gru_net_forward.1} parent=0
    #allocation3 [shape = 'u8[98304]{0}', space=vmem, size = 0x18000, scoped, tag = 'input window, operand 4, single buffered']
    #allocation4 [shape = 's32[1]{0}', space=sflag, size = 0x4, scoped, tag = 'scoped memory for gru_net_forward.1']
    #allocation5 [shape = 'u8[32768]{0}', space=vmem, size = 0x8000, scoped, tag = 'input window, operand 7, single buffered']
    #allocation6 [shape = 's32[1]{0}', space=sflag, size = 0x4, scoped, tag = 'scoped memory for gru_net_forward.1']
    %16 = vsyncpa [#allocation4], 0
    %17 = vsyncpa [#allocation6], 0
    // Predicated region
    $region2: #{gru_net_forward.1} parent=1 // pred_check
      _
    $region3: #{gru_net_forward.1} parent=1 // pred_check_branch
      %19 = sbr.rel (0) target = $region5
    $region4: #{gru_net_forward.1} parent=1 // pred_region
      _
    $region5: #{gru_net_forward.1} parent=1 // pred_fallthru
      _
    // Predicated region
    $region6: #{gru_net_forward.1} parent=1 // pred_check
      _
    $region7: #{gru_net_forward.1} parent=1 // pred_check_branch
      %21 = sbr.rel (0) target = $region9
    $region8: #{gru_net_forward.1} parent=1 // pred_region
      _
    $region9: #{gru_net_forward.1} parent=1 // pred_fallthru
      _
    // Predicated region
    $region10: #{gru_net_forward.1} parent=1 // pred_check
      _
    $region11: #{gru_net_forward.1} parent=1 // pred_check_branch
      %23 = sbr.rel (0) target = $region13
    $region12: #{gru_net_forward.1} parent=1 // pred_region
      _
    $region13: #{gru_net_forward.1} parent=1 // pred_fallthru
      _
    // Predicated region
    $region14: #{gru_net_forward.1} parent=1 // pred_check
      _
    $region15: #{gru_net_forward.1} parent=1 // pred_check_branch
      %25 = sbr.rel (0) target = $region17
    $region16: #{gru_net_forward.1} parent=1 // pred_region
      _
    $region17: #{gru_net_forward.1} parent=1 // pred_fallthru
      _
    // Predicated region
    $region18: #{gru_net_forward.1} parent=1 // pred_check
      _
    $region19: #{gru_net_forward.1} parent=1 // pred_check_branch
      %27 = sbr.rel (0) target = $region21
    $region20: #{gru_net_forward.1} parent=1 // pred_region
      %s29 = ssub.s32 3072, 3072
      %30 = vsyncadd [#allocation4], %s29
      %s31 = sshll.u32 [#allocation3], 4
      %s32 = int_to_ptr.vmem [resolvable:$true] %s31
      %37 = dma.hbm_to_vmem [thread:$0]  %s4, 3072, %s32, [#allocation4], 192, 192, 12
    $region21: #{gru_net_forward.1} parent=1 // pred_fallthru
      _
    // Predicated region
    $region22: #{gru_net_forward.1} parent=1 // pred_check
      _
    $region23: #{gru_net_forward.1} parent=1 // pred_check_branch
      %39 = sbr.rel (0) target = $region25
    $region24: #{gru_net_forward.1} parent=1 // pred_region
      _
    $region25: #{gru_net_forward.1} parent=1 // pred_fallthru
      _
    // Predicated region
    $region26: #{gru_net_forward.1} parent=1 // pred_check
      _
    $region27: #{gru_net_forward.1} parent=1 // pred_check_branch
      %41 = sbr.rel (0) target = $region29
    $region28: #{gru_net_forward.1} parent=1 // pred_region
      _
    $region29: #{gru_net_forward.1} parent=1 // pred_fallthru
      _
    // Predicated region
    $region30: #{gru_net_forward.1} parent=1 // pred_check
      _
    $region31: #{gru_net_forward.1} parent=1 // pred_check_branch
      %43 = sbr.rel (0) target = $region33
    $region32: #{gru_net_forward.1} parent=1 // pred_region
      %s45 = ssub.s32 1024, 1024
      %46 = vsyncadd [#allocation6], %s45
      %s47 = sshll.u32 [#allocation5], 4
      %s48 = int_to_ptr.vmem [resolvable:$true] %s47
      %53 = dma.hbm_to_vmem [thread:$0]  %s7, 1024, %s48, [#allocation6], 64, 64, 4
    $region33: #{gru_net_forward.1} parent=1 // pred_fallthru
      _
    // Predicated region
    $region34: #{gru_net_forward.1} parent=1 // pred_check
      _
    $region35: #{gru_net_forward.1} parent=1 // pred_check_branch
      %55 = sbr.rel (0) target = $region37
    $region36: #{gru_net_forward.1} parent=1 // pred_region
      _
    $region37: #{gru_net_forward.1} parent=1 // pred_fallthru
      _
    // Predicated region
    $region38: #{gru_net_forward.1} parent=1 // pred_check
      _
    $region39: #{gru_net_forward.1} parent=1 // pred_check_branch
      %57 = sbr.rel (0) target = $region41
    $region40: #{gru_net_forward.1} parent=1 // pred_region
      %58 = dma.done [#allocation4], 3072
    $region41: #{gru_net_forward.1} parent=1 // pred_fallthru
      _
    // Predicated region
    $region42: #{gru_net_forward.1} parent=1 // pred_check
      _
    $region43: #{gru_net_forward.1} parent=1 // pred_check_branch
      %60 = sbr.rel (0) target = $region45
    $region44: #{gru_net_forward.1} parent=1 // pred_region
      %61 = dma.done [#allocation6], 1024
    $region45: #{gru_net_forward.1} parent=1 // pred_fallthru
      _
    %v63 = vld [vmem:[%s0] sm:$0xf]
    %v64 = vld [vmem:[%s0 + $0x4] sm:$0xf]
    %v65 = vld [vmem:[%s0 + $0x8] sm:$0xf]
    %v66 = vld [vmem:[%s0 + $0xc] sm:$0xf]
    %v67 = vld [vmem:[%s0 + $0x10] sm:$0xf]
    %v68 = vld [vmem:[%s0 + $0x14] sm:$0xf]
    %v69 = vld [vmem:[%s0 + $0x18] sm:$0xf]
    %v70 = vld [vmem:[%s0 + $0x1c] sm:$0xf]
    %v71 = vld [vmem:[%s3] sm:$0xff]
    %v72 = vld [vmem:[%s3 + $0x8] sm:$0xf]
    %v73 = vld [vmem:[%s3 + $0xc] sm:$0xff]
    %v74 = vld [vmem:[%s3 + $0x14] sm:$0xf]
    %v75 = vld [vmem:[%s3 + $0x18] sm:$0xff]
    %v76 = vld [vmem:[%s3 + $0x20] sm:$0xf]
    %v77 = vld [vmem:[%s3 + $0x24] sm:$0xff]
    %v78 = vld [vmem:[%s3 + $0x2c] sm:$0xf]
    %v79 = vld [vmem:[%s3 + $0x30] sm:$0xff]
    %v80 = vld [vmem:[%s3 + $0x38] sm:$0xf]
    %v81 = vld [vmem:[%s3 + $0x3c] sm:$0xff]
    %v82 = vld [vmem:[%s3 + $0x44] sm:$0xf]
    %v83 = vld [vmem:[%s3 + $0x48] sm:$0xff]
    %v84 = vld [vmem:[%s3 + $0x50] sm:$0xf]
    %v85 = vld [vmem:[%s3 + $0x54] sm:$0xff]
    %v86 = vld [vmem:[%s3 + $0x5c] sm:$0xf]
    %v87 = vld [vmem:[%s3 + $0x60] sm:$0xff]
    %v88 = vld [vmem:[%s3 + $0x68] sm:$0xf]
    %v89 = vld [vmem:[%s3 + $0x6c] sm:$0xff]
    %v90 = vld [vmem:[%s3 + $0x74] sm:$0xf]
    %v91 = vld [vmem:[%s3 + $0x78] sm:$0xff]
    %v92 = vld [vmem:[%s3 + $0x80] sm:$0xf]
    %v93 = vld [vmem:[%s3 + $0x84] sm:$0xff]
    %v94 = vld [vmem:[%s3 + $0x8c] sm:$0xf]
    %v95 = vld [vmem:[%s3 + $0x90] sm:$0xff]
    %v96 = vld [vmem:[%s3 + $0x98] sm:$0xf]
    %v97 = vld [vmem:[%s3 + $0x9c] sm:$0xff]
    %v98 = vld [vmem:[%s3 + $0xa4] sm:$0xf]
    %v99 = vld [vmem:[%s3 + $0xa8] sm:$0xff]
    %v100 = vld [vmem:[%s3 + $0xb0] sm:$0xf]
    %v101 = vld [vmem:[%s3 + $0xb4] sm:$0xff]
    %v102 = vld [vmem:[%s3 + $0xbc] sm:$0xf]
    %v103 = vld [vmem:[%s5] sm:$0x7]
    %v105 = vlaneseq
    %v106 = vshrl.u32 %v105, 7
    %v107 = vsub.s32 0, %v106
    %v108 = vrot.slane %v103, %v107
    %v109 = vlaneseq
    %v110 = vshrl.u32 %v109, 7
    %v111 = vsub.s32 1, %v110
    %v112 = vrot.slane %v103, %v111
    %v113 = vlaneseq
    %v114 = vshrl.u32 %v113, 7
    %v115 = vsub.s32 2, %v114
    %v116 = vrot.slane %v103, %v115
    %v128 = vunpack.c.l.b16 %v63
    %v129 = vunpack.c.l.b16 %v64
    %v130 = vunpack.c.l.b16 %v65
    %v131 = vunpack.c.l.b16 %v66
    %v132 = vunpack.c.l.b16 %v67
    %v133 = vunpack.c.l.b16 %v68
    %v134 = vunpack.c.l.b16 %v69
    %v135 = vunpack.c.l.b16 %v70
    %v136 = vpack.c.b16 %v129, %v128
    %v137 = vpack.c.b16 %v131, %v130
    %v138 = vpack.c.b16 %v133, %v132
    %v139 = vpack.c.b16 %v135, %v134
    %v176 = vunpack.c.l.b16 %v71
    %v177 = vunpack.c.h.b16 %v71
    %v178 = vunpack.c.l.b16 %v72
    %v179 = vunpack.c.l.b16 %v73
    %v180 = vunpack.c.h.b16 %v73
    %v181 = vunpack.c.l.b16 %v74
    %v182 = vunpack.c.l.b16 %v75
    %v183 = vunpack.c.h.b16 %v75
    %v184 = vunpack.c.l.b16 %v76
    %v185 = vunpack.c.l.b16 %v77
    %v186 = vunpack.c.h.b16 %v77
    %v187 = vunpack.c.l.b16 %v78
    %v188 = vunpack.c.l.b16 %v79
    %v189 = vunpack.c.h.b16 %v79
    %v190 = vunpack.c.l.b16 %v80
    %v191 = vunpack.c.l.b16 %v81
    %v192 = vunpack.c.h.b16 %v81
    %v193 = vunpack.c.l.b16 %v82
    %v194 = vunpack.c.l.b16 %v83
    %v195 = vunpack.c.h.b16 %v83
    %v196 = vunpack.c.l.b16 %v84
    %v197 = vunpack.c.l.b16 %v85
    %v198 = vunpack.c.h.b16 %v85
    %v199 = vunpack.c.l.b16 %v86
    %v200 = vunpack.c.l.b16 %v87
    %v201 = vunpack.c.h.b16 %v87
    %v202 = vunpack.c.l.b16 %v88
    %v203 = vunpack.c.l.b16 %v89
    %v204 = vunpack.c.h.b16 %v89
    %v205 = vunpack.c.l.b16 %v90
    %v206 = vunpack.c.l.b16 %v91
    %v207 = vunpack.c.h.b16 %v91
    %v208 = vunpack.c.l.b16 %v92
    %v209 = vunpack.c.l.b16 %v93
    %v210 = vunpack.c.h.b16 %v93
    %v211 = vunpack.c.l.b16 %v94
    %v212 = vunpack.c.l.b16 %v95
    %v213 = vunpack.c.h.b16 %v95
    %v214 = vunpack.c.l.b16 %v96
    %v215 = vunpack.c.l.b16 %v97
    %v216 = vunpack.c.h.b16 %v97
    %v217 = vunpack.c.l.b16 %v98
    %v218 = vunpack.c.l.b16 %v99
    %v219 = vunpack.c.h.b16 %v99
    %v220 = vunpack.c.l.b16 %v100
    %v221 = vunpack.c.l.b16 %v101
    %v222 = vunpack.c.h.b16 %v101
    %v223 = vunpack.c.l.b16 %v102
    %v224 = vpack.c.b16 %v179, %v176
    %v225 = vpack.c.b16 %v180, %v177
    %v226 = vpack.c.b16 %v181, %v178
    %v227 = vpack.c.b16 %v185, %v182
    %v228 = vpack.c.b16 %v186, %v183
    %v229 = vpack.c.b16 %v187, %v184
    %v230 = vpack.c.b16 %v191, %v188
    %v231 = vpack.c.b16 %v192, %v189
    %v232 = vpack.c.b16 %v193, %v190
    %v233 = vpack.c.b16 %v197, %v194
    %v234 = vpack.c.b16 %v198, %v195
    %v235 = vpack.c.b16 %v199, %v196
    %v236 = vpack.c.b16 %v203, %v200
    %v237 = vpack.c.b16 %v204, %v201
    %v238 = vpack.c.b16 %v205, %v202
    %v239 = vpack.c.b16 %v209, %v206
    %v240 = vpack.c.b16 %v210, %v207
    %v241 = vpack.c.b16 %v211, %v208
    %v242 = vpack.c.b16 %v215, %v212
    %v243 = vpack.c.b16 %v216, %v213
    %v244 = vpack.c.b16 %v217, %v214
    %v245 = vpack.c.b16 %v221, %v218
    %v246 = vpack.c.b16 %v222, %v219
    %v247 = vpack.c.b16 %v223, %v220
    %272 = vmatprep.subr.bf16.mxu0 %v225
    %273 = vmatpush1.bf16.msra.mxu0 %v224
    %274 = vmatprep.subr.bf16.mxu0 %v228
    %275 = vmatpush1.bf16.msra.mxu0 %v227
    %276 = vmatprep.subr.bf16.mxu0 %v231
    %277 = vmatpush1.bf16.msra.mxu0 %v230
    %278 = vmatprep.subr.bf16.mxu0 %v234
    %279 = vmatpush1.bf16.msra.mxu0 %v233
    %280 = vmatprep.subr.bf16.mxu0 %v237
    %281 = vmatpush1.bf16.msra.mxu0 %v236
    %282 = vmatprep.subr.bf16.mxu0 %v240
    %283 = vmatpush1.bf16.msra.mxu0 %v239
    %284 = vmatprep.subr.bf16.mxu0 %v243
    %285 = vmatpush1.bf16.msra.mxu0 %v242
    %286 = vmatprep.subr.bf16.mxu0 %v246
    %287 = vmatpush1.bf16.msra.mxu0 %v245
    %288 = vmatprep.subr.bf16.mxu0 0
    %289 = vmatpush1.bf16.msra.mxu0 0
    %290 = vmatprep.subr.bf16.mxu0 0
    %291 = vmatpush1.bf16.msra.mxu0 0
    %292 = vmatprep.subr.bf16.mxu0 0
    %293 = vmatpush1.bf16.msra.mxu0 0
    %294 = vmatprep.subr.bf16.mxu0 0
    %295 = vmatpush1.bf16.msra.mxu0 0
    %296 = vmatprep.subr.bf16.mxu0 0
    %297 = vmatpush1.bf16.msra.mxu0 0
    %298 = vmatprep.subr.bf16.mxu0 0
    %299 = vmatpush1.bf16.msra.mxu0 0
    %300 = vmatprep.subr.bf16.mxu0 0
    %301 = vmatpush1.bf16.msra.mxu0 0
    %302 = vmatprep.subr.bf16.mxu0 0
    %303 = vmatpush1.bf16.msra.mxu0 0
    %304 = vmatprep.mubr.bf16.mxu0 0
    %305 = vmatmul.mubr.bf16.gmra.mrb[0].mxu0 %v136
    %v306 = vpop.f32.mrb[0].mxu0
    %v307 = vadd.f32 %v108, %v306
    %v308 = vpop.f32.mrb[0].mxu0
    %v309 = vadd.f32 %v112, %v308
    %v310 = vpop.f32.mrb[0].mxu0
    %v311 = vadd.f32 %v108, %v310
    %v312 = vpop.f32.mrb[0].mxu0
    %v313 = vadd.f32 %v112, %v312
    %314 = vmatprep.mubr.bf16.mxu0 0
    %315 = vmatmul.mubr.bf16.gmra.mrb[0].mxu0 %v137
    %v316 = vpop.f32.mrb[0].mxu0
    %v317 = vadd.f32 %v108, %v316
    %v318 = vpop.f32.mrb[0].mxu0
    %v319 = vadd.f32 %v112, %v318
    %v320 = vpop.f32.mrb[0].mxu0
    %v321 = vadd.f32 %v108, %v320
    %v322 = vpop.f32.mrb[0].mxu0
    %v323 = vadd.f32 %v112, %v322
    %324 = vmatprep.mubr.bf16.mxu0 0
    %325 = vmatmul.mubr.bf16.gmra.mrb[0].mxu0 %v138
    %v326 = vpop.f32.mrb[0].mxu0
    %v327 = vadd.f32 %v108, %v326
    %v328 = vpop.f32.mrb[0].mxu0
    %v329 = vadd.f32 %v112, %v328
    %v330 = vpop.f32.mrb[0].mxu0
    %v331 = vadd.f32 %v108, %v330
    %v332 = vpop.f32.mrb[0].mxu0
    %v333 = vadd.f32 %v112, %v332
    %334 = vmatprep.mubr.bf16.mxu0 0
    %335 = vmatmul.mubr.bf16.gmra.mrb[0].mxu0 %v139
    %v336 = vpop.f32.mrb[0].mxu0
    %v337 = vadd.f32 %v108, %v336
    %v338 = vpop.f32.mrb[0].mxu0
    %v339 = vadd.f32 %v112, %v338
    %v340 = vpop.f32.mrb[0].mxu0
    %v341 = vadd.f32 %v108, %v340
    %v342 = vpop.f32.mrb[0].mxu0
    %v343 = vadd.f32 %v112, %v342
    %344 = vdwg.mxu0
    %345 = vmatprep.subr.bf16.mxu0 0
    %346 = vmatpush1.bf16.msra.mxu0 %v226
    %347 = vmatprep.subr.bf16.mxu0 0
    %348 = vmatpush1.bf16.msra.mxu0 %v229
    %349 = vmatprep.subr.bf16.mxu0 0
    %350 = vmatpush1.bf16.msra.mxu0 %v232
    %351 = vmatprep.subr.bf16.mxu0 0
    %352 = vmatpush1.bf16.msra.mxu0 %v235
    %353 = vmatprep.subr.bf16.mxu0 0
    %354 = vmatpush1.bf16.msra.mxu0 %v238
    %355 = vmatprep.subr.bf16.mxu0 0
    %356 = vmatpush1.bf16.msra.mxu0 %v241
    %357 = vmatprep.subr.bf16.mxu0 0
    %358 = vmatpush1.bf16.msra.mxu0 %v244
    %359 = vmatprep.subr.bf16.mxu0 0
    %360 = vmatpush1.bf16.msra.mxu0 %v247
    %361 = vmatprep.subr.bf16.mxu0 0
    %362 = vmatpush1.bf16.msra.mxu0 0
    %363 = vmatprep.subr.bf16.mxu0 0
    %364 = vmatpush1.bf16.msra.mxu0 0
    %365 = vmatprep.subr.bf16.mxu0 0
    %366 = vmatpush1.bf16.msra.mxu0 0
    %367 = vmatprep.subr.bf16.mxu0 0
    %368 = vmatpush1.bf16.msra.mxu0 0
    %369 = vmatprep.subr.bf16.mxu0 0
    %370 = vmatpush1.bf16.msra.mxu0 0
    %371 = vmatprep.subr.bf16.mxu0 0
    %372 = vmatpush1.bf16.msra.mxu0 0
    %373 = vmatprep.subr.bf16.mxu0 0
    %374 = vmatpush1.bf16.msra.mxu0 0
    %375 = vmatprep.subr.bf16.mxu0 0
    %376 = vmatpush1.bf16.msra.mxu0 0
    %377 = vmatprep.mubr.bf16.mxu0 0
    %378 = vmatmul.mubr.bf16.gmra.mrb[0].mxu0 %v136
    %v379 = vpop.f32.mrb[0].mxu0
    %v380 = vadd.f32 %v116, %v379
    %v381 = vpop.f32.mrb[0].mxu0
    %v382 = vpop.f32.mrb[0].mxu0
    %v383 = vadd.f32 %v116, %v382
    %v384 = vpop.f32.mrb[0].mxu0
    %385 = vmatprep.mubr.bf16.mxu0 0
    %386 = vmatmul.mubr.bf16.gmra.mrb[0].mxu0 %v137
    %v387 = vpop.f32.mrb[0].mxu0
    %v388 = vadd.f32 %v116, %v387
    %v389 = vpop.f32.mrb[0].mxu0
    %v390 = vpop.f32.mrb[0].mxu0
    %v391 = vadd.f32 %v116, %v390
    %v392 = vpop.f32.mrb[0].mxu0
    %393 = vmatprep.mubr.bf16.mxu0 0
    %394 = vmatmul.mubr.bf16.gmra.mrb[0].mxu0 %v138
    %v395 = vpop.f32.mrb[0].mxu0
    %v396 = vadd.f32 %v116, %v395
    %v397 = vpop.f32.mrb[0].mxu0
    %v398 = vpop.f32.mrb[0].mxu0
    %v399 = vadd.f32 %v116, %v398
    %v400 = vpop.f32.mrb[0].mxu0
    %401 = vmatprep.mubr.bf16.mxu0 0
    %402 = vmatmul.mubr.bf16.gmra.mrb[0].mxu0 %v139
    %v403 = vpop.f32.mrb[0].mxu0
    %v404 = vadd.f32 %v116, %v403
    %v405 = vpop.f32.mrb[0].mxu0
    %v406 = vpop.f32.mrb[0].mxu0
    %v407 = vadd.f32 %v116, %v406
    %v408 = vpop.f32.mrb[0].mxu0
    %409 = vdwg.mxu0
    %v410 = vld [vmem:[%s6] sm:$0x7]
    %v412 = vlaneseq
    %v413 = vshrl.u32 %v412, 7
    %v414 = vsub.s32 0, %v413
    %v415 = vrot.slane %v410, %v414
    %v416 = vlaneseq
    %v417 = vshrl.u32 %v416, 7
    %v418 = vsub.s32 1, %v417
    %v419 = vrot.slane %v410, %v418
    %v420 = vlaneseq
    %v421 = vshrl.u32 %v420, 7
    %v422 = vsub.s32 2, %v421
    %v423 = vrot.slane %v410, %v422
    %v427 = vld [vmem:[%s2] sm:$0xff]
    %v428 = vld [vmem:[%s1] sm:$0xff]
    %v429 = vmul.f32 %v427, %v428
    %v430 = vpack.c.bf16 %v429, %v429
    %v431 = vld [vmem:[#allocation3] sm:$0xff]
    %v432 = vld [vmem:[#allocation3 + $0x8] sm:$0xf]
    %v433 = vld [vmem:[#allocation3 + $0xc] sm:$0xff]
    %v434 = vld [vmem:[#allocation3 + $0x14] sm:$0xf]
    %v435 = vld [vmem:[#allocation3 + $0x18] sm:$0xff]
    %v436 = vld [vmem:[#allocation3 + $0x20] sm:$0xf]
    %v437 = vld [vmem:[#allocation3 + $0x24] sm:$0xff]
    %v438 = vld [vmem:[#allocation3 + $0x2c] sm:$0xf]
    %v439 = vld [vmem:[#allocation3 + $0x30] sm:$0xff]
    %v440 = vld [vmem:[#allocation3 + $0x38] sm:$0xf]
    %v441 = vld [vmem:[#allocation3 + $0x3c] sm:$0xff]
    %v442 = vld [vmem:[#allocation3 + $0x44] sm:$0xf]
    %v443 = vld [vmem:[#allocation3 + $0x48] sm:$0xff]
    %v444 = vld [vmem:[#allocation3 + $0x50] sm:$0xf]
    %v445 = vld [vmem:[#allocation3 + $0x54] sm:$0xff]
    %v446 = vld [vmem:[#allocation3 + $0x5c] sm:$0xf]
    %v447 = vld [vmem:[#allocation3 + $0x60] sm:$0xff]
    %v448 = vld [vmem:[#allocation3 + $0x68] sm:$0xf]
    %v449 = vld [vmem:[#allocation3 + $0x6c] sm:$0xff]
    %v450 = vld [vmem:[#allocation3 + $0x74] sm:$0xf]
    %v451 = vld [vmem:[#allocation3 + $0x78] sm:$0xff]
    %v452 = vld [vmem:[#allocation3 + $0x80] sm:$0xf]
    %v453 = vld [vmem:[#allocation3 + $0x84] sm:$0xff]
    %v454 = vld [vmem:[#allocation3 + $0x8c] sm:$0xf]
    %v455 = vld [vmem:[#allocation3 + $0x90] sm:$0xff]
    %v456 = vld [vmem:[#allocation3 + $0x98] sm:$0xf]
    %v457 = vld [vmem:[#allocation3 + $0x9c] sm:$0xff]
    %v458 = vld [vmem:[#allocation3 + $0xa4] sm:$0xf]
    %v459 = vld [vmem:[#allocation3 + $0xa8] sm:$0xff]
    %v460 = vld [vmem:[#allocation3 + $0xb0] sm:$0xf]
    %v461 = vld [vmem:[#allocation3 + $0xb4] sm:$0xff]
    %v462 = vld [vmem:[#allocation3 + $0xbc] sm:$0xf]
    %v495 = vunpack.c.l.b16 %v431
    %v496 = vunpack.c.h.b16 %v431
    %v497 = vunpack.c.l.b16 %v432
    %v498 = vunpack.c.l.b16 %v433
    %v499 = vunpack.c.h.b16 %v433
    %v500 = vunpack.c.l.b16 %v434
    %v501 = vunpack.c.l.b16 %v435
    %v502 = vunpack.c.h.b16 %v435
    %v503 = vunpack.c.l.b16 %v436
    %v504 = vunpack.c.l.b16 %v437
    %v505 = vunpack.c.h.b16 %v437
    %v506 = vunpack.c.l.b16 %v438
    %v507 = vunpack.c.l.b16 %v439
    %v508 = vunpack.c.h.b16 %v439
    %v509 = vunpack.c.l.b16 %v440
    %v510 = vunpack.c.l.b16 %v441
    %v511 = vunpack.c.h.b16 %v441
    %v512 = vunpack.c.l.b16 %v442
    %v513 = vunpack.c.l.b16 %v443
    %v514 = vunpack.c.h.b16 %v443
    %v515 = vunpack.c.l.b16 %v444
    %v516 = vunpack.c.l.b16 %v445
    %v517 = vunpack.c.h.b16 %v445
    %v518 = vunpack.c.l.b16 %v446
    %v519 = vunpack.c.l.b16 %v447
    %v520 = vunpack.c.h.b16 %v447
    %v521 = vunpack.c.l.b16 %v448
    %v522 = vunpack.c.l.b16 %v449
    %v523 = vunpack.c.h.b16 %v449
    %v524 = vunpack.c.l.b16 %v450
    %v525 = vunpack.c.l.b16 %v451
    %v526 = vunpack.c.h.b16 %v451
    %v527 = vunpack.c.l.b16 %v452
    %v528 = vunpack.c.l.b16 %v453
    %v529 = vunpack.c.h.b16 %v453
    %v530 = vunpack.c.l.b16 %v454
    %v531 = vunpack.c.l.b16 %v455
    %v532 = vunpack.c.h.b16 %v455
    %v533 = vunpack.c.l.b16 %v456
    %v534 = vunpack.c.l.b16 %v457
    %v535 = vunpack.c.h.b16 %v457
    %v536 = vunpack.c.l.b16 %v458
    %v537 = vunpack.c.l.b16 %v459
    %v538 = vunpack.c.h.b16 %v459
    %v539 = vunpack.c.l.b16 %v460
    %v540 = vunpack.c.l.b16 %v461
    %v541 = vunpack.c.h.b16 %v461
    %v542 = vunpack.c.l.b16 %v462
    %v543 = vpack.c.b16 %v498, %v495
    %v544 = vpack.c.b16 %v499, %v496
    %v545 = vpack.c.b16 %v500, %v497
    %v546 = vpack.c.b16 %v504, %v501
    %v547 = vpack.c.b16 %v505, %v502
    %v548 = vpack.c.b16 %v506, %v503
    %v549 = vpack.c.b16 %v510, %v507
    %v550 = vpack.c.b16 %v511, %v508
    %v551 = vpack.c.b16 %v512, %v509
    %v552 = vpack.c.b16 %v516, %v513
    %v553 = vpack.c.b16 %v517, %v514
    %v554 = vpack.c.b16 %v518, %v515
    %v555 = vpack.c.b16 %v522, %v519
    %v556 = vpack.c.b16 %v523, %v520
    %v557 = vpack.c.b16 %v524, %v521
    %v558 = vpack.c.b16 %v528, %v525
    %v559 = vpack.c.b16 %v529, %v526
    %v560 = vpack.c.b16 %v530, %v527
    %v561 = vpack.c.b16 %v534, %v531
    %v562 = vpack.c.b16 %v535, %v532
    %v563 = vpack.c.b16 %v536, %v533
    %v564 = vpack.c.b16 %v540, %v537
    %v565 = vpack.c.b16 %v541, %v538
    %v566 = vpack.c.b16 %v542, %v539
    %591 = vmatprep.subr.bf16.mxu0 %v544
    %592 = vmatpush1.bf16.msra.mxu0 %v543
    %593 = vmatprep.subr.bf16.mxu0 %v547
    %594 = vmatpush1.bf16.msra.mxu0 %v546
    %595 = vmatprep.subr.bf16.mxu0 %v550
    %596 = vmatpush1.bf16.msra.mxu0 %v549
    %597 = vmatprep.subr.bf16.mxu0 %v553
    %598 = vmatpush1.bf16.msra.mxu0 %v552
    %599 = vmatprep.subr.bf16.mxu0 %v556
    %600 = vmatpush1.bf16.msra.mxu0 %v555
    %601 = vmatprep.subr.bf16.mxu0 %v559
    %602 = vmatpush1.bf16.msra.mxu0 %v558
    %603 = vmatprep.subr.bf16.mxu0 %v562
    %604 = vmatpush1.bf16.msra.mxu0 %v561
    %605 = vmatprep.subr.bf16.mxu0 %v565
    %606 = vmatpush1.bf16.msra.mxu0 %v564
    %607 = vmatprep.subr.bf16.mxu0 0
    %608 = vmatpush1.bf16.msra.mxu0 0
    %609 = vmatprep.subr.bf16.mxu0 0
    %610 = vmatpush1.bf16.msra.mxu0 0
    %611 = vmatprep.subr.bf16.mxu0 0
    %612 = vmatpush1.bf16.msra.mxu0 0
    %613 = vmatprep.subr.bf16.mxu0 0
    %614 = vmatpush1.bf16.msra.mxu0 0
    %615 = vmatprep.subr.bf16.mxu0 0
    %616 = vmatpush1.bf16.msra.mxu0 0
    %617 = vmatprep.subr.bf16.mxu0 0
    %618 = vmatpush1.bf16.msra.mxu0 0
    %619 = vmatprep.subr.bf16.mxu0 0
    %620 = vmatpush1.bf16.msra.mxu0 0
    %621 = vmatprep.subr.bf16.mxu0 0
    %622 = vmatpush1.bf16.msra.mxu0 0
    %623 = vmatprep.mubr.bf16.mxu0 0
    %624 = vmatmul.mubr.bf16.gmra.mrb[0].mxu0 %v430
    %v625 = vpop.f32.mrb[0].mxu0
    %v626 = vadd.f32 %v415, %v625
    %v627 = vpop.f32.mrb[0].mxu0
    %v628 = vadd.f32 %v419, %v627
    %v629 = vpop.f32.mrb[0].mxu0
    %v630 = vpop.f32.mrb[0].mxu0
    %631 = vdwg.mxu0
    %632 = vmatprep.subr.bf16.mxu0 0
    %633 = vmatpush1.bf16.msra.mxu0 %v545
    %634 = vmatprep.subr.bf16.mxu0 0
    %635 = vmatpush1.bf16.msra.mxu0 %v548
    %636 = vmatprep.subr.bf16.mxu0 0
    %637 = vmatpush1.bf16.msra.mxu0 %v551
    %638 = vmatprep.subr.bf16.mxu0 0
    %639 = vmatpush1.bf16.msra.mxu0 %v554
    %640 = vmatprep.subr.bf16.mxu0 0
    %641 = vmatpush1.bf16.msra.mxu0 %v557
    %642 = vmatprep.subr.bf16.mxu0 0
    %643 = vmatpush1.bf16.msra.mxu0 %v560
    %644 = vmatprep.subr.bf16.mxu0 0
    %645 = vmatpush1.bf16.msra.mxu0 %v563
    %646 = vmatprep.subr.bf16.mxu0 0
    %647 = vmatpush1.bf16.msra.mxu0 %v566
    %648 = vmatprep.subr.bf16.mxu0 0
    %649 = vmatpush1.bf16.msra.mxu0 0
    %650 = vmatprep.subr.bf16.mxu0 0
    %651 = vmatpush1.bf16.msra.mxu0 0
    %652 = vmatprep.subr.bf16.mxu0 0
    %653 = vmatpush1.bf16.msra.mxu0 0
    %654 = vmatprep.subr.bf16.mxu0 0
    %655 = vmatpush1.bf16.msra.mxu0 0
    %656 = vmatprep.subr.bf16.mxu0 0
    %657 = vmatpush1.bf16.msra.mxu0 0
    %658 = vmatprep.subr.bf16.mxu0 0
    %659 = vmatpush1.bf16.msra.mxu0 0
    %660 = vmatprep.subr.bf16.mxu0 0
    %661 = vmatpush1.bf16.msra.mxu0 0
    %662 = vmatprep.subr.bf16.mxu0 0
    %663 = vmatpush1.bf16.msra.mxu0 0
    %664 = vmatprep.mubr.bf16.mxu0 0
    %665 = vmatmul.mubr.bf16.gmra.mrb[0].mxu0 %v430
    %v666 = vpop.f32.mrb[0].mxu0
    %v667 = vadd.f32 %v423, %v666
    %v668 = vpop.f32.mrb[0].mxu0
    %v669 = vpop.f32.mrb[0].mxu0
    %v670 = vpop.f32.mrb[0].mxu0
    %671 = vdwg.mxu0
    %v672 = vadd.f32 %v307, %v626
    %v673 = vxor.u32 %v672, 2147483648
    %v674 = vmul.f32 %v673, 1.442695
    %v675 = vpow.pop %v674
    %v676 = vadd.f32 %v675, 1.0
    %v677 = vrcp.pop %v676
    %v678 = vmul.f32 1.0, %v677
    %v679 = vadd.f32 %v309, %v628
    %v680 = vxor.u32 %v679, 2147483648
    %v681 = vmul.f32 %v680, 1.442695
    %v682 = vpow.pop %v681
    %v683 = vadd.f32 %v682, 1.0
    %v684 = vrcp.pop %v683
    %v685 = vmul.f32 1.0, %v684
    %v686 = vmul.f32 %v678, %v667
    %v687 = vadd.f32 %v380, %v686
    %v688 = vtanh.pop %v687
    %v689 = vsub.f32 %v429, %v688
    %v690 = vmul.f32 %v685, %v689
    %v691 = vadd.f32 %v688, %v690
    %692 = vst [vmem:[#allocation2] sm:$0xff] %v691
    %s693 = scalar_lea.vmem %s1, 8
    %v694 = vld [vmem:[%s693] sm:$0xff]
    %v695 = vmul.f32 %v691, %v694
    %v696 = vpack.c.bf16 %v695, %v695
    %v697 = vld [vmem:[#allocation3] sm:$0xff]
    %v698 = vld [vmem:[#allocation3 + $0x8] sm:$0xf]
    %v699 = vld [vmem:[#allocation3 + $0xc] sm:$0xff]
    %v700 = vld [vmem:[#allocation3 + $0x14] sm:$0xf]
    %v701 = vld [vmem:[#allocation3 + $0x18] sm:$0xff]
    %v702 = vld [vmem:[#allocation3 + $0x20] sm:$0xf]
    %v703 = vld [vmem:[#allocation3 + $0x24] sm:$0xff]
    %v704 = vld [vmem:[#allocation3 + $0x2c] sm:$0xf]
    %v705 = vld [vmem:[#allocation3 + $0x30] sm:$0xff]
    %v706 = vld [vmem:[#allocation3 + $0x38] sm:$0xf]
    %v707 = vld [vmem:[#allocation3 + $0x3c] sm:$0xff]
    %v708 = vld [vmem:[#allocation3 + $0x44] sm:$0xf]
    %v709 = vld [vmem:[#allocation3 + $0x48] sm:$0xff]
    %v710 = vld [vmem:[#allocation3 + $0x50] sm:$0xf]
    %v711 = vld [vmem:[#allocation3 + $0x54] sm:$0xff]
    %v712 = vld [vmem:[#allocation3 + $0x5c] sm:$0xf]
    %v713 = vld [vmem:[#allocation3 + $0x60] sm:$0xff]
    %v714 = vld [vmem:[#allocation3 + $0x68] sm:$0xf]
    %v715 = vld [vmem:[#allocation3 + $0x6c] sm:$0xff]
    %v716 = vld [vmem:[#allocation3 + $0x74] sm:$0xf]
    %v717 = vld [vmem:[#allocation3 + $0x78] sm:$0xff]
    %v718 = vld [vmem:[#allocation3 + $0x80] sm:$0xf]
    %v719 = vld [vmem:[#allocation3 + $0x84] sm:$0xff]
    %v720 = vld [vmem:[#allocation3 + $0x8c] sm:$0xf]
    %v721 = vld [vmem:[#allocation3 + $0x90] sm:$0xff]
    %v722 = vld [vmem:[#allocation3 + $0x98] sm:$0xf]
    %v723 = vld [vmem:[#allocation3 + $0x9c] sm:$0xff]
    %v724 = vld [vmem:[#allocation3 + $0xa4] sm:$0xf]
    %v725 = vld [vmem:[#allocation3 + $0xa8] sm:$0xff]
    %v726 = vld [vmem:[#allocation3 + $0xb0] sm:$0xf]
    %v727 = vld [vmem:[#allocation3 + $0xb4] sm:$0xff]
    %v728 = vld [vmem:[#allocation3 + $0xbc] sm:$0xf]
    %v761 = vunpack.c.l.b16 %v697
    %v762 = vunpack.c.h.b16 %v697
    %v763 = vunpack.c.l.b16 %v698
    %v764 = vunpack.c.l.b16 %v699
    %v765 = vunpack.c.h.b16 %v699
    %v766 = vunpack.c.l.b16 %v700
    %v767 = vunpack.c.l.b16 %v701
    %v768 = vunpack.c.h.b16 %v701
    %v769 = vunpack.c.l.b16 %v702
    %v770 = vunpack.c.l.b16 %v703
    %v771 = vunpack.c.h.b16 %v703
    %v772 = vunpack.c.l.b16 %v704
    %v773 = vunpack.c.l.b16 %v705
    %v774 = vunpack.c.h.b16 %v705
    %v775 = vunpack.c.l.b16 %v706
    %v776 = vunpack.c.l.b16 %v707
    %v777 = vunpack.c.h.b16 %v707
    %v778 = vunpack.c.l.b16 %v708
    %v779 = vunpack.c.l.b16 %v709
    %v780 = vunpack.c.h.b16 %v709
    %v781 = vunpack.c.l.b16 %v710
    %v782 = vunpack.c.l.b16 %v711
    %v783 = vunpack.c.h.b16 %v711
    %v784 = vunpack.c.l.b16 %v712
    %v785 = vunpack.c.l.b16 %v713
    %v786 = vunpack.c.h.b16 %v713
    %v787 = vunpack.c.l.b16 %v714
    %v788 = vunpack.c.l.b16 %v715
    %v789 = vunpack.c.h.b16 %v715
    %v790 = vunpack.c.l.b16 %v716
    %v791 = vunpack.c.l.b16 %v717
    %v792 = vunpack.c.h.b16 %v717
    %v793 = vunpack.c.l.b16 %v718
    %v794 = vunpack.c.l.b16 %v719
    %v795 = vunpack.c.h.b16 %v719
    %v796 = vunpack.c.l.b16 %v720
    %v797 = vunpack.c.l.b16 %v721
    %v798 = vunpack.c.h.b16 %v721
    %v799 = vunpack.c.l.b16 %v722
    %v800 = vunpack.c.l.b16 %v723
    %v801 = vunpack.c.h.b16 %v723
    %v802 = vunpack.c.l.b16 %v724
    %v803 = vunpack.c.l.b16 %v725
    %v804 = vunpack.c.h.b16 %v725
    %v805 = vunpack.c.l.b16 %v726
    %v806 = vunpack.c.l.b16 %v727
    %v807 = vunpack.c.h.b16 %v727
    %v808 = vunpack.c.l.b16 %v728
    %v809 = vpack.c.b16 %v764, %v761
    %v810 = vpack.c.b16 %v765, %v762
    %v811 = vpack.c.b16 %v766, %v763
    %v812 = vpack.c.b16 %v770, %v767
    %v813 = vpack.c.b16 %v771, %v768
    %v814 = vpack.c.b16 %v772, %v769
    %v815 = vpack.c.b16 %v776, %v773
    %v816 = vpack.c.b16 %v777, %v774
    %v817 = vpack.c.b16 %v778, %v775
    %v818 = vpack.c.b16 %v782, %v779
    %v819 = vpack.c.b16 %v783, %v780
    %v820 = vpack.c.b16 %v784, %v781
    %v821 = vpack.c.b16 %v788, %v785
    %v822 = vpack.c.b16 %v789, %v786
    %v823 = vpack.c.b16 %v790, %v787
    %v824 = vpack.c.b16 %v794, %v791
    %v825 = vpack.c.b16 %v795, %v792
    %v826 = vpack.c.b16 %v796, %v793
    %v827 = vpack.c.b16 %v800, %v797
    %v828 = vpack.c.b16 %v801, %v798
    %v829 = vpack.c.b16 %v802, %v799
    %v830 = vpack.c.b16 %v806, %v803
    %v831 = vpack.c.b16 %v807, %v804
    %v832 = vpack.c.b16 %v808, %v805
    %857 = vmatprep.subr.bf16.mxu0 %v810
    %858 = vmatpush1.bf16.msra.mxu0 %v809
    %859 = vmatprep.subr.bf16.mxu0 %v813
    %860 = vmatpush1.bf16.msra.mxu0 %v812
    %861 = vmatprep.subr.bf16.mxu0 %v816
    %862 = vmatpush1.bf16.msra.mxu0 %v815
    %863 = vmatprep.subr.bf16.mxu0 %v819
    %864 = vmatpush1.bf16.msra.mxu0 %v818
    %865 = vmatprep.subr.bf16.mxu0 %v822
    %866 = vmatpush1.bf16.msra.mxu0 %v821
    %867 = vmatprep.subr.bf16.mxu0 %v825
    %868 = vmatpush1.bf16.msra.mxu0 %v824
    %869 = vmatprep.subr.bf16.mxu0 %v828
    %870 = vmatpush1.bf16.msra.mxu0 %v827
    %871 = vmatprep.subr.bf16.mxu0 %v831
    %872 = vmatpush1.bf16.msra.mxu0 %v830
    %873 = vmatprep.subr.bf16.mxu0 0
    %874 = vmatpush1.bf16.msra.mxu0 0
    %875 = vmatprep.subr.bf16.mxu0 0
    %876 = vmatpush1.bf16.msra.mxu0 0
    %877 = vmatprep.subr.bf16.mxu0 0
    %878 = vmatpush1.bf16.msra.mxu0 0
    %879 = vmatprep.subr.bf16.mxu0 0
    %880 = vmatpush1.bf16.msra.mxu0 0
    %881 = vmatprep.subr.bf16.mxu0 0
    %882 = vmatpush1.bf16.msra.mxu0 0
    %883 = vmatprep.subr.bf16.mxu0 0
    %884 = vmatpush1.bf16.msra.mxu0 0
    %885 = vmatprep.subr.bf16.mxu0 0
    %886 = vmatpush1.bf16.msra.mxu0 0
    %887 = vmatprep.subr.bf16.mxu0 0
    %888 = vmatpush1.bf16.msra.mxu0 0
    %889 = vmatprep.mubr.bf16.mxu0 0
    %890 = vmatmul.mubr.bf16.gmra.mrb[0].mxu0 %v696
    %v891 = vpop.f32.mrb[0].mxu0
    %v892 = vadd.f32 %v415, %v891
    %v893 = vpop.f32.mrb[0].mxu0
    %v894 = vadd.f32 %v419, %v893
    %v895 = vpop.f32.mrb[0].mxu0
    %v896 = vpop.f32.mrb[0].mxu0
    %897 = vdwg.mxu0
    %898 = vmatprep.subr.bf16.mxu0 0
    %899 = vmatpush1.bf16.msra.mxu0 %v811
    %900 = vmatprep.subr.bf16.mxu0 0
    %901 = vmatpush1.bf16.msra.mxu0 %v814
    %902 = vmatprep.subr.bf16.mxu0 0
    %903 = vmatpush1.bf16.msra.mxu0 %v817
    %904 = vmatprep.subr.bf16.mxu0 0
    %905 = vmatpush1.bf16.msra.mxu0 %v820
    %906 = vmatprep.subr.bf16.mxu0 0
    %907 = vmatpush1.bf16.msra.mxu0 %v823
    %908 = vmatprep.subr.bf16.mxu0 0
    %909 = vmatpush1.bf16.msra.mxu0 %v826
    %910 = vmatprep.subr.bf16.mxu0 0
    %911 = vmatpush1.bf16.msra.mxu0 %v829
    %912 = vmatprep.subr.bf16.mxu0 0
    %913 = vmatpush1.bf16.msra.mxu0 %v832
    %914 = vmatprep.subr.bf16.mxu0 0
    %915 = vmatpush1.bf16.msra.mxu0 0
    %916 = vmatprep.subr.bf16.mxu0 0
    %917 = vmatpush1.bf16.msra.mxu0 0
    %918 = vmatprep.subr.bf16.mxu0 0
    %919 = vmatpush1.bf16.msra.mxu0 0
    %920 = vmatprep.subr.bf16.mxu0 0
    %921 = vmatpush1.bf16.msra.mxu0 0
    %922 = vmatprep.subr.bf16.mxu0 0
    %923 = vmatpush1.bf16.msra.mxu0 0
    %924 = vmatprep.subr.bf16.mxu0 0
    %925 = vmatpush1.bf16.msra.mxu0 0
    %926 = vmatprep.subr.bf16.mxu0 0
    %927 = vmatpush1.bf16.msra.mxu0 0
    %928 = vmatprep.subr.bf16.mxu0 0
    %929 = vmatpush1.bf16.msra.mxu0 0
    %930 = vmatprep.mubr.bf16.mxu0 0
    %931 = vmatmul.mubr.bf16.gmra.mrb[0].mxu0 %v696
    %v932 = vpop.f32.mrb[0].mxu0
    %v933 = vadd.f32 %v423, %v932
    %v934 = vpop.f32.mrb[0].mxu0
    %v935 = vpop.f32.mrb[0].mxu0
    %v936 = vpop.f32.mrb[0].mxu0
    %937 = vdwg.mxu0
    %v938 = vadd.f32 %v311, %v892
    %v939 = vxor.u32 %v938, 2147483648
    %v940 = vmul.f32 %v939, 1.442695
    %v941 = vpow.pop %v940
    %v942 = vadd.f32 %v941, 1.0
    %v943 = vrcp.pop %v942
    %v944 = vmul.f32 1.0, %v943
    %v945 = vadd.f32 %v313, %v894
    %v946 = vxor.u32 %v945, 2147483648
    %v947 = vmul.f32 %v946, 1.442695
    %v948 = vpow.pop %v947
    %v949 = vadd.f32 %v948, 1.0
    %v950 = vrcp.pop %v949
    %v951 = vmul.f32 1.0, %v950
    %v952 = vmul.f32 %v944, %v933
    %v953 = vadd.f32 %v383, %v952
    %v954 = vtanh.pop %v953
    %v955 = vsub.f32 %v695, %v954
    %v956 = vmul.f32 %v951, %v955
    %v957 = vadd.f32 %v954, %v956
    %s958 = scalar_lea.vmem [#allocation2], 8
    %959 = vst [vmem:[%s958] sm:$0xff] %v957
    %s960 = scalar_lea.vmem %s1, 16
    %v961 = vld [vmem:[%s960] sm:$0xff]
    %v962 = vmul.f32 %v957, %v961
    %v963 = vpack.c.bf16 %v962, %v962
    %v964 = vld [vmem:[#allocation3] sm:$0xff]
    %v965 = vld [vmem:[#allocation3 + $0x8] sm:$0xf]
    %v966 = vld [vmem:[#allocation3 + $0xc] sm:$0xff]
    %v967 = vld [vmem:[#allocation3 + $0x14] sm:$0xf]
    %v968 = vld [vmem:[#allocation3 + $0x18] sm:$0xff]
    %v969 = vld [vmem:[#allocation3 + $0x20] sm:$0xf]
    %v970 = vld [vmem:[#allocation3 + $0x24] sm:$0xff]
    %v971 = vld [vmem:[#allocation3 + $0x2c] sm:$0xf]
    %v972 = vld [vmem:[#allocation3 + $0x30] sm:$0xff]
    %v973 = vld [vmem:[#allocation3 + $0x38] sm:$0xf]
    %v974 = vld [vmem:[#allocation3 + $0x3c] sm:$0xff]
    %v975 = vld [vmem:[#allocation3 + $0x44] sm:$0xf]
    %v976 = vld [vmem:[#allocation3 + $0x48] sm:$0xff]
    %v977 = vld [vmem:[#allocation3 + $0x50] sm:$0xf]
    %v978 = vld [vmem:[#allocation3 + $0x54] sm:$0xff]
    %v979 = vld [vmem:[#allocation3 + $0x5c] sm:$0xf]
    %v980 = vld [vmem:[#allocation3 + $0x60] sm:$0xff]
    %v981 = vld [vmem:[#allocation3 + $0x68] sm:$0xf]
    %v982 = vld [vmem:[#allocation3 + $0x6c] sm:$0xff]
    %v983 = vld [vmem:[#allocation3 + $0x74] sm:$0xf]
    %v984 = vld [vmem:[#allocation3 + $0x78] sm:$0xff]
    %v985 = vld [vmem:[#allocation3 + $0x80] sm:$0xf]
    %v986 = vld [vmem:[#allocation3 + $0x84] sm:$0xff]
    %v987 = vld [vmem:[#allocation3 + $0x8c] sm:$0xf]
    %v988 = vld [vmem:[#allocation3 + $0x90] sm:$0xff]
    %v989 = vld [vmem:[#allocation3 + $0x98] sm:$0xf]
    %v990 = vld [vmem:[#allocation3 + $0x9c] sm:$0xff]
    %v991 = vld [vmem:[#allocation3 + $0xa4] sm:$0xf]
    %v992 = vld [vmem:[#allocation3 + $0xa8] sm:$0xff]
    %v993 = vld [vmem:[#allocation3 + $0xb0] sm:$0xf]
    %v994 = vld [vmem:[#allocation3 + $0xb4] sm:$0xff]
    %v995 = vld [vmem:[#allocation3 + $0xbc] sm:$0xf]
    %v1028 = vunpack.c.l.b16 %v964
    %v1029 = vunpack.c.h.b16 %v964
    %v1030 = vunpack.c.l.b16 %v965
    %v1031 = vunpack.c.l.b16 %v966
    %v1032 = vunpack.c.h.b16 %v966
    %v1033 = vunpack.c.l.b16 %v967
    %v1034 = vunpack.c.l.b16 %v968
    %v1035 = vunpack.c.h.b16 %v968
    %v1036 = vunpack.c.l.b16 %v969
    %v1037 = vunpack.c.l.b16 %v970
    %v1038 = vunpack.c.h.b16 %v970
    %v1039 = vunpack.c.l.b16 %v971
    %v1040 = vunpack.c.l.b16 %v972
    %v1041 = vunpack.c.h.b16 %v972
    %v1042 = vunpack.c.l.b16 %v973
    %v1043 = vunpack.c.l.b16 %v974
    %v1044 = vunpack.c.h.b16 %v974
    %v1045 = vunpack.c.l.b16 %v975
    %v1046 = vunpack.c.l.b16 %v976
    %v1047 = vunpack.c.h.b16 %v976
    %v1048 = vunpack.c.l.b16 %v977
    %v1049 = vunpack.c.l.b16 %v978
    %v1050 = vunpack.c.h.b16 %v978
    %v1051 = vunpack.c.l.b16 %v979
    %v1052 = vunpack.c.l.b16 %v980
    %v1053 = vunpack.c.h.b16 %v980
    %v1054 = vunpack.c.l.b16 %v981
    %v1055 = vunpack.c.l.b16 %v982
    %v1056 = vunpack.c.h.b16 %v982
    %v1057 = vunpack.c.l.b16 %v983
    %v1058 = vunpack.c.l.b16 %v984
    %v1059 = vunpack.c.h.b16 %v984
    %v1060 = vunpack.c.l.b16 %v985
    %v1061 = vunpack.c.l.b16 %v986
    %v1062 = vunpack.c.h.b16 %v986
    %v1063 = vunpack.c.l.b16 %v987
    %v1064 = vunpack.c.l.b16 %v988
    %v1065 = vunpack.c.h.b16 %v988
    %v1066 = vunpack.c.l.b16 %v989
    %v1067 = vunpack.c.l.b16 %v990
    %v1068 = vunpack.c.h.b16 %v990
    %v1069 = vunpack.c.l.b16 %v991
    %v1070 = vunpack.c.l.b16 %v992
    %v1071 = vunpack.c.h.b16 %v992
    %v1072 = vunpack.c.l.b16 %v993
    %v1073 = vunpack.c.l.b16 %v994
    %v1074 = vunpack.c.h.b16 %v994
    %v1075 = vunpack.c.l.b16 %v995
    %v1076 = vpack.c.b16 %v1031, %v1028
    %v1077 = vpack.c.b16 %v1032, %v1029
    %v1078 = vpack.c.b16 %v1033, %v1030
    %v1079 = vpack.c.b16 %v1037, %v1034
    %v1080 = vpack.c.b16 %v1038, %v1035
    %v1081 = vpack.c.b16 %v1039, %v1036
    %v1082 = vpack.c.b16 %v1043, %v1040
    %v1083 = vpack.c.b16 %v1044, %v1041
    %v1084 = vpack.c.b16 %v1045, %v1042
    %v1085 = vpack.c.b16 %v1049, %v1046
    %v1086 = vpack.c.b16 %v1050, %v1047
    %v1087 = vpack.c.b16 %v1051, %v1048
    %v1088 = vpack.c.b16 %v1055, %v1052
    %v1089 = vpack.c.b16 %v1056, %v1053
    %v1090 = vpack.c.b16 %v1057, %v1054
    %v1091 = vpack.c.b16 %v1061, %v1058
    %v1092 = vpack.c.b16 %v1062, %v1059
    %v1093 = vpack.c.b16 %v1063, %v1060
    %v1094 = vpack.c.b16 %v1067, %v1064
    %v1095 = vpack.c.b16 %v1068, %v1065
    %v1096 = vpack.c.b16 %v1069, %v1066
    %v1097 = vpack.c.b16 %v1073, %v1070
    %v1098 = vpack.c.b16 %v1074, %v1071
    %v1099 = vpack.c.b16 %v1075, %v1072
    %1124 = vmatprep.subr.bf16.mxu0 %v1077
    %1125 = vmatpush1.bf16.msra.mxu0 %v1076
    %1126 = vmatprep.subr.bf16.mxu0 %v1080
    %1127 = vmatpush1.bf16.msra.mxu0 %v1079
    %1128 = vmatprep.subr.bf16.mxu0 %v1083
    %1129 = vmatpush1.bf16.msra.mxu0 %v1082
    %1130 = vmatprep.subr.bf16.mxu0 %v1086
    %1131 = vmatpush1.bf16.msra.mxu0 %v1085
    %1132 = vmatprep.subr.bf16.mxu0 %v1089
    %1133 = vmatpush1.bf16.msra.mxu0 %v1088
    %1134 = vmatprep.subr.bf16.mxu0 %v1092
    %1135 = vmatpush1.bf16.msra.mxu0 %v1091
    %1136 = vmatprep.subr.bf16.mxu0 %v1095
    %1137 = vmatpush1.bf16.msra.mxu0 %v1094
    %1138 = vmatprep.subr.bf16.mxu0 %v1098
    %1139 = vmatpush1.bf16.msra.mxu0 %v1097
    %1140 = vmatprep.subr.bf16.mxu0 0
    %1141 = vmatpush1.bf16.msra.mxu0 0
    %1142 = vmatprep.subr.bf16.mxu0 0
    %1143 = vmatpush1.bf16.msra.mxu0 0
    %1144 = vmatprep.subr.bf16.mxu0 0
    %1145 = vmatpush1.bf16.msra.mxu0 0
    %1146 = vmatprep.subr.bf16.mxu0 0
    %1147 = vmatpush1.bf16.msra.mxu0 0
    %1148 = vmatprep.subr.bf16.mxu0 0
    %1149 = vmatpush1.bf16.msra.mxu0 0
    %1150 = vmatprep.subr.bf16.mxu0 0
    %1151 = vmatpush1.bf16.msra.mxu0 0
    %1152 = vmatprep.subr.bf16.mxu0 0
    %1153 = vmatpush1.bf16.msra.mxu0 0
    %1154 = vmatprep.subr.bf16.mxu0 0
    %1155 = vmatpush1.bf16.msra.mxu0 0
    %1156 = vmatprep.mubr.bf16.mxu0 0
    %1157 = vmatmul.mubr.bf16.gmra.mrb[0].mxu0 %v963
    %v1158 = vpop.f32.mrb[0].mxu0
    %v1159 = vadd.f32 %v415, %v1158
    %v1160 = vpop.f32.mrb[0].mxu0
    %v1161 = vadd.f32 %v419, %v1160
    %v1162 = vpop.f32.mrb[0].mxu0
    %v1163 = vpop.f32.mrb[0].mxu0
    %1164 = vdwg.mxu0
    %1165 = vmatprep.subr.bf16.mxu0 0
    %1166 = vmatpush1.bf16.msra.mxu0 %v1078
    %1167 = vmatprep.subr.bf16.mxu0 0
    %1168 = vmatpush1.bf16.msra.mxu0 %v1081
    %1169 = vmatprep.subr.bf16.mxu0 0
    %1170 = vmatpush1.bf16.msra.mxu0 %v1084
    %1171 = vmatprep.subr.bf16.mxu0 0
    %1172 = vmatpush1.bf16.msra.mxu0 %v1087
    %1173 = vmatprep.subr.bf16.mxu0 0
    %1174 = vmatpush1.bf16.msra.mxu0 %v1090
    %1175 = vmatprep.subr.bf16.mxu0 0
    %1176 = vmatpush1.bf16.msra.mxu0 %v1093
    %1177 = vmatprep.subr.bf16.mxu0 0
    %1178 = vmatpush1.bf16.msra.mxu0 %v1096
    %1179 = vmatprep.subr.bf16.mxu0 0
    %1180 = vmatpush1.bf16.msra.mxu0 %v1099
    %1181 = vmatprep.subr.bf16.mxu0 0
    %1182 = vmatpush1.bf16.msra.mxu0 0
    %1183 = vmatprep.subr.bf16.mxu0 0
    %1184 = vmatpush1.bf16.msra.mxu0 0
    %1185 = vmatprep.subr.bf16.mxu0 0
    %1186 = vmatpush1.bf16.msra.mxu0 0
    %1187 = vmatprep.subr.bf16.mxu0 0
    %1188 = vmatpush1.bf16.msra.mxu0 0
    %1189 = vmatprep.subr.bf16.mxu0 0
    %1190 = vmatpush1.bf16.msra.mxu0 0
    %1191 = vmatprep.subr.bf16.mxu0 0
    %1192 = vmatpush1.bf16.msra.mxu0 0
    %1193 = vmatprep.subr.bf16.mxu0 0
    %1194 = vmatpush1.bf16.msra.mxu0 0
    %1195 = vmatprep.subr.bf16.mxu0 0
    %1196 = vmatpush1.bf16.msra.mxu0 0
    %1197 = vmatprep.mubr.bf16.mxu0 0
    %1198 = vmatmul.mubr.bf16.gmra.mrb[0].mxu0 %v963
    %v1199 = vpop.f32.mrb[0].mxu0
    %v1200 = vadd.f32 %v423, %v1199
    %v1201 = vpop.f32.mrb[0].mxu0
    %v1202 = vpop.f32.mrb[0].mxu0
    %v1203 = vpop.f32.mrb[0].mxu0
    %1204 = vdwg.mxu0
    %v1205 = vadd.f32 %v317, %v1159
    %v1206 = vxor.u32 %v1205, 2147483648
    %v1207 = vmul.f32 %v1206, 1.442695
    %v1208 = vpow.pop %v1207
    %v1209 = vadd.f32 %v1208, 1.0
    %v1210 = vrcp.pop %v1209
    %v1211 = vmul.f32 1.0, %v1210
    %v1212 = vadd.f32 %v319, %v1161
    %v1213 = vxor.u32 %v1212, 2147483648
    %v1214 = vmul.f32 %v1213, 1.442695
    %v1215 = vpow.pop %v1214
    %v1216 = vadd.f32 %v1215, 1.0
    %v1217 = vrcp.pop %v1216
    %v1218 = vmul.f32 1.0, %v1217
    %v1219 = vmul.f32 %v1211, %v1200
    %v1220 = vadd.f32 %v388, %v1219
    %v1221 = vtanh.pop %v1220
    %v1222 = vsub.f32 %v962, %v1221
    %v1223 = vmul.f32 %v1218, %v1222
    %v1224 = vadd.f32 %v1221, %v1223
    %s1225 = scalar_lea.vmem [#allocation2], 16
    %1226 = vst [vmem:[%s1225] sm:$0xff] %v1224
    %s1227 = scalar_lea.vmem %s1, 24
    %v1228 = vld [vmem:[%s1227] sm:$0xff]
    %v1229 = vmul.f32 %v1224, %v1228
    %v1230 = vpack.c.bf16 %v1229, %v1229
    %v1231 = vld [vmem:[#allocation3] sm:$0xff]
    %v1232 = vld [vmem:[#allocation3 + $0x8] sm:$0xf]
    %v1233 = vld [vmem:[#allocation3 + $0xc] sm:$0xff]
    %v1234 = vld [vmem:[#allocation3 + $0x14] sm:$0xf]
    %v1235 = vld [vmem:[#allocation3 + $0x18] sm:$0xff]
    %v1236 = vld [vmem:[#allocation3 + $0x20] sm:$0xf]
    %v1237 = vld [vmem:[#allocation3 + $0x24] sm:$0xff]
    %v1238 = vld [vmem:[#allocation3 + $0x2c] sm:$0xf]
    %v1239 = vld [vmem:[#allocation3 + $0x30] sm:$0xff]
    %v1240 = vld [vmem:[#allocation3 + $0x38] sm:$0xf]
    %v1241 = vld [vmem:[#allocation3 + $0x3c] sm:$0xff]
    %v1242 = vld [vmem:[#allocation3 + $0x44] sm:$0xf]
    %v1243 = vld [vmem:[#allocation3 + $0x48] sm:$0xff]
    %v1244 = vld [vmem:[#allocation3 + $0x50] sm:$0xf]
    %v1245 = vld [vmem:[#allocation3 + $0x54] sm:$0xff]
    %v1246 = vld [vmem:[#allocation3 + $0x5c] sm:$0xf]
    %v1247 = vld [vmem:[#allocation3 + $0x60] sm:$0xff]
    %v1248 = vld [vmem:[#allocation3 + $0x68] sm:$0xf]
    %v1249 = vld [vmem:[#allocation3 + $0x6c] sm:$0xff]
    %v1250 = vld [vmem:[#allocation3 + $0x74] sm:$0xf]
    %v1251 = vld [vmem:[#allocation3 + $0x78] sm:$0xff]
    %v1252 = vld [vmem:[#allocation3 + $0x80] sm:$0xf]
    %v1253 = vld [vmem:[#allocation3 + $0x84] sm:$0xff]
    %v1254 = vld [vmem:[#allocation3 + $0x8c] sm:$0xf]
    %v1255 = vld [vmem:[#allocation3 + $0x90] sm:$0xff]
    %v1256 = vld [vmem:[#allocation3 + $0x98] sm:$0xf]
    %v1257 = vld [vmem:[#allocation3 + $0x9c] sm:$0xff]
    %v1258 = vld [vmem:[#allocation3 + $0xa4] sm:$0xf]
    %v1259 = vld [vmem:[#allocation3 + $0xa8] sm:$0xff]
    %v1260 = vld [vmem:[#allocation3 + $0xb0] sm:$0xf]
    %v1261 = vld [vmem:[#allocation3 + $0xb4] sm:$0xff]
    %v1262 = vld [vmem:[#allocation3 + $0xbc] sm:$0xf]
    %v1295 = vunpack.c.l.b16 %v1231
    %v1296 = vunpack.c.h.b16 %v1231
    %v1297 = vunpack.c.l.b16 %v1232
    %v1298 = vunpack.c.l.b16 %v1233
    %v1299 = vunpack.c.h.b16 %v1233
    %v1300 = vunpack.c.l.b16 %v1234
    %v1301 = vunpack.c.l.b16 %v1235
    %v1302 = vunpack.c.h.b16 %v1235
    %v1303 = vunpack.c.l.b16 %v1236
    %v1304 = vunpack.c.l.b16 %v1237
    %v1305 = vunpack.c.h.b16 %v1237
    %v1306 = vunpack.c.l.b16 %v1238
    %v1307 = vunpack.c.l.b16 %v1239
    %v1308 = vunpack.c.h.b16 %v1239
    %v1309 = vunpack.c.l.b16 %v1240
    %v1310 = vunpack.c.l.b16 %v1241
    %v1311 = vunpack.c.h.b16 %v1241
    %v1312 = vunpack.c.l.b16 %v1242
    %v1313 = vunpack.c.l.b16 %v1243
    %v1314 = vunpack.c.h.b16 %v1243
    %v1315 = vunpack.c.l.b16 %v1244
    %v1316 = vunpack.c.l.b16 %v1245
    %v1317 = vunpack.c.h.b16 %v1245
    %v1318 = vunpack.c.l.b16 %v1246
    %v1319 = vunpack.c.l.b16 %v1247
    %v1320 = vunpack.c.h.b16 %v1247
    %v1321 = vunpack.c.l.b16 %v1248
    %v1322 = vunpack.c.l.b16 %v1249
    %v1323 = vunpack.c.h.b16 %v1249
    %v1324 = vunpack.c.l.b16 %v1250
    %v1325 = vunpack.c.l.b16 %v1251
    %v1326 = vunpack.c.h.b16 %v1251
    %v1327 = vunpack.c.l.b16 %v1252
    %v1328 = vunpack.c.l.b16 %v1253
    %v1329 = vunpack.c.h.b16 %v1253
    %v1330 = vunpack.c.l.b16 %v1254
    %v1331 = vunpack.c.l.b16 %v1255
    %v1332 = vunpack.c.h.b16 %v1255
    %v1333 = vunpack.c.l.b16 %v1256
    %v1334 = vunpack.c.l.b16 %v1257
    %v1335 = vunpack.c.h.b16 %v1257
    %v1336 = vunpack.c.l.b16 %v1258
    %v1337 = vunpack.c.l.b16 %v1259
    %v1338 = vunpack.c.h.b16 %v1259
    %v1339 = vunpack.c.l.b16 %v1260
    %v1340 = vunpack.c.l.b16 %v1261
    %v1341 = vunpack.c.h.b16 %v1261
    %v1342 = vunpack.c.l.b16 %v1262
    %v1343 = vpack.c.b16 %v1298, %v1295
    %v1344 = vpack.c.b16 %v1299, %v1296
    %v1345 = vpack.c.b16 %v1300, %v1297
    %v1346 = vpack.c.b16 %v1304, %v1301
    %v1347 = vpack.c.b16 %v1305, %v1302
    %v1348 = vpack.c.b16 %v1306, %v1303
    %v1349 = vpack.c.b16 %v1310, %v1307
    %v1350 = vpack.c.b16 %v1311, %v1308
    %v1351 = vpack.c.b16 %v1312, %v1309
    %v1352 = vpack.c.b16 %v1316, %v1313
    %v1353 = vpack.c.b16 %v1317, %v1314
    %v1354 = vpack.c.b16 %v1318, %v1315
    %v1355 = vpack.c.b16 %v1322, %v1319
    %v1356 = vpack.c.b16 %v1323, %v1320
    %v1357 = vpack.c.b16 %v1324, %v1321
    %v1358 = vpack.c.b16 %v1328, %v1325
    %v1359 = vpack.c.b16 %v1329, %v1326
    %v1360 = vpack.c.b16 %v1330, %v1327
    %v1361 = vpack.c.b16 %v1334, %v1331
    %v1362 = vpack.c.b16 %v1335, %v1332
    %v1363 = vpack.c.b16 %v1336, %v1333
    %v1364 = vpack.c.b16 %v1340, %v1337
    %v1365 = vpack.c.b16 %v1341, %v1338
    %v1366 = vpack.c.b16 %v1342, %v1339
    %1391 = vmatprep.subr.bf16.mxu0 %v1344
    %1392 = vmatpush1.bf16.msra.mxu0 %v1343
    %1393 = vmatprep.subr.bf16.mxu0 %v1347
    %1394 = vmatpush1.bf16.msra.mxu0 %v1346
    %1395 = vmatprep.subr.bf16.mxu0 %v1350
    %1396 = vmatpush1.bf16.msra.mxu0 %v1349
    %1397 = vmatprep.subr.bf16.mxu0 %v1353
    %1398 = vmatpush1.bf16.msra.mxu0 %v1352
    %1399 = vmatprep.subr.bf16.mxu0 %v1356
    %1400 = vmatpush1.bf16.msra.mxu0 %v1355
    %1401 = vmatprep.subr.bf16.mxu0 %v1359
    %1402 = vmatpush1.bf16.msra.mxu0 %v1358
    %1403 = vmatprep.subr.bf16.mxu0 %v1362
    %1404 = vmatpush1.bf16.msra.mxu0 %v1361
    %1405 = vmatprep.subr.bf16.mxu0 %v1365
    %1406 = vmatpush1.bf16.msra.mxu0 %v1364
    %1407 = vmatprep.subr.bf16.mxu0 0
    %1408 = vmatpush1.bf16.msra.mxu0 0
    %1409 = vmatprep.subr.bf16.mxu0 0
    %1410 = vmatpush1.bf16.msra.mxu0 0
    %1411 = vmatprep.subr.bf16.mxu0 0
    %1412 = vmatpush1.bf16.msra.mxu0 0
    %1413 = vmatprep.subr.bf16.mxu0 0
    %1414 = vmatpush1.bf16.msra.mxu0 0
    %1415 = vmatprep.subr.bf16.mxu0 0
    %1416 = vmatpush1.bf16.msra.mxu0 0
    %1417 = vmatprep.subr.bf16.mxu0 0
    %1418 = vmatpush1.bf16.msra.mxu0 0
    %1419 = vmatprep.subr.bf16.mxu0 0
    %1420 = vmatpush1.bf16.msra.mxu0 0
    %1421 = vmatprep.subr.bf16.mxu0 0
    %1422 = vmatpush1.bf16.msra.mxu0 0
    %1423 = vmatprep.mubr.bf16.mxu0 0
    %1424 = vmatmul.mubr.bf16.gmra.mrb[0].mxu0 %v1230
    %v1425 = vpop.f32.mrb[0].mxu0
    %v1426 = vadd.f32 %v415, %v1425
    %v1427 = vpop.f32.mrb[0].mxu0
    %v1428 = vadd.f32 %v419, %v1427
    %v1429 = vpop.f32.mrb[0].mxu0
    %v1430 = vpop.f32.mrb[0].mxu0
    %1431 = vdwg.mxu0
    %1432 = vmatprep.subr.bf16.mxu0 0
    %1433 = vmatpush1.bf16.msra.mxu0 %v1345
    %1434 = vmatprep.subr.bf16.mxu0 0
    %1435 = vmatpush1.bf16.msra.mxu0 %v1348
    %1436 = vmatprep.subr.bf16.mxu0 0
    %1437 = vmatpush1.bf16.msra.mxu0 %v1351
    %1438 = vmatprep.subr.bf16.mxu0 0
    %1439 = vmatpush1.bf16.msra.mxu0 %v1354
    %1440 = vmatprep.subr.bf16.mxu0 0
    %1441 = vmatpush1.bf16.msra.mxu0 %v1357
    %1442 = vmatprep.subr.bf16.mxu0 0
    %1443 = vmatpush1.bf16.msra.mxu0 %v1360
    %1444 = vmatprep.subr.bf16.mxu0 0
    %1445 = vmatpush1.bf16.msra.mxu0 %v1363
    %1446 = vmatprep.subr.bf16.mxu0 0
    %1447 = vmatpush1.bf16.msra.mxu0 %v1366
    %1448 = vmatprep.subr.bf16.mxu0 0
    %1449 = vmatpush1.bf16.msra.mxu0 0
    %1450 = vmatprep.subr.bf16.mxu0 0
    %1451 = vmatpush1.bf16.msra.mxu0 0
    %1452 = vmatprep.subr.bf16.mxu0 0
    %1453 = vmatpush1.bf16.msra.mxu0 0
    %1454 = vmatprep.subr.bf16.mxu0 0
    %1455 = vmatpush1.bf16.msra.mxu0 0
    %1456 = vmatprep.subr.bf16.mxu0 0
    %1457 = vmatpush1.bf16.msra.mxu0 0
    %1458 = vmatprep.subr.bf16.mxu0 0
    %1459 = vmatpush1.bf16.msra.mxu0 0
    %1460 = vmatprep.subr.bf16.mxu0 0
    %1461 = vmatpush1.bf16.msra.mxu0 0
    %1462 = vmatprep.subr.bf16.mxu0 0
    %1463 = vmatpush1.bf16.msra.mxu0 0
    %1464 = vmatprep.mubr.bf16.mxu0 0
    %1465 = vmatmul.mubr.bf16.gmra.mrb[0].mxu0 %v1230
    %v1466 = vpop.f32.mrb[0].mxu0
    %v1467 = vadd.f32 %v423, %v1466
    %v1468 = vpop.f32.mrb[0].mxu0
    %v1469 = vpop.f32.mrb[0].mxu0
    %v1470 = vpop.f32.mrb[0].mxu0
    %1471 = vdwg.mxu0
    %v1472 = vadd.f32 %v321, %v1426
    %v1473 = vxor.u32 %v1472, 2147483648
    %v1474 = vmul.f32 %v1473, 1.442695
    %v1475 = vpow.pop %v1474
    %v1476 = vadd.f32 %v1475, 1.0
    %v1477 = vrcp.pop %v1476
    %v1478 = vmul.f32 1.0, %v1477
    %v1479 = vadd.f32 %v323, %v1428
    %v1480 = vxor.u32 %v1479, 2147483648
    %v1481 = vmul.f32 %v1480, 1.442695
    %v1482 = vpow.pop %v1481
    %v1483 = vadd.f32 %v1482, 1.0
    %v1484 = vrcp.pop %v1483
    %v1485 = vmul.f32 1.0, %v1484
    %v1486 = vmul.f32 %v1478, %v1467
    %v1487 = vadd.f32 %v391, %v1486
    %v1488 = vtanh.pop %v1487
    %v1489 = vsub.f32 %v1229, %v1488
    %v1490 = vmul.f32 %v1485, %v1489
    %v1491 = vadd.f32 %v1488, %v1490
    %s1492 = scalar_lea.vmem [#allocation2], 24
    %1493 = vst [vmem:[%s1492] sm:$0xff] %v1491
    %s1494 = scalar_lea.vmem %s1, 32
    %v1495 = vld [vmem:[%s1494] sm:$0xff]
    %v1496 = vmul.f32 %v1491, %v1495
    %v1497 = vpack.c.bf16 %v1496, %v1496
    %v1498 = vld [vmem:[#allocation3] sm:$0xff]
    %v1499 = vld [vmem:[#allocation3 + $0x8] sm:$0xf]
    %v1500 = vld [vmem:[#allocation3 + $0xc] sm:$0xff]
    %v1501 = vld [vmem:[#allocation3 + $0x14] sm:$0xf]
    %v1502 = vld [vmem:[#allocation3 + $0x18] sm:$0xff]
    %v1503 = vld [vmem:[#allocation3 + $0x20] sm:$0xf]
    %v1504 = vld [vmem:[#allocation3 + $0x24] sm:$0xff]
    %v1505 = vld [vmem:[#allocation3 + $0x2c] sm:$0xf]
    %v1506 = vld [vmem:[#allocation3 + $0x30] sm:$0xff]
    %v1507 = vld [vmem:[#allocation3 + $0x38] sm:$0xf]
    %v1508 = vld [vmem:[#allocation3 + $0x3c] sm:$0xff]
    %v1509 = vld [vmem:[#allocation3 + $0x44] sm:$0xf]
    %v1510 = vld [vmem:[#allocation3 + $0x48] sm:$0xff]
    %v1511 = vld [vmem:[#allocation3 + $0x50] sm:$0xf]
    %v1512 = vld [vmem:[#allocation3 + $0x54] sm:$0xff]
    %v1513 = vld [vmem:[#allocation3 + $0x5c] sm:$0xf]
    %v1514 = vld [vmem:[#allocation3 + $0x60] sm:$0xff]
    %v1515 = vld [vmem:[#allocation3 + $0x68] sm:$0xf]
    %v1516 = vld [vmem:[#allocation3 + $0x6c] sm:$0xff]
    %v1517 = vld [vmem:[#allocation3 + $0x74] sm:$0xf]
    %v1518 = vld [vmem:[#allocation3 + $0x78] sm:$0xff]
    %v1519 = vld [vmem:[#allocation3 + $0x80] sm:$0xf]
    %v1520 = vld [vmem:[#allocation3 + $0x84] sm:$0xff]
    %v1521 = vld [vmem:[#allocation3 + $0x8c] sm:$0xf]
    %v1522 = vld [vmem:[#allocation3 + $0x90] sm:$0xff]
    %v1523 = vld [vmem:[#allocation3 + $0x98] sm:$0xf]
    %v1524 = vld [vmem:[#allocation3 + $0x9c] sm:$0xff]
    %v1525 = vld [vmem:[#allocation3 + $0xa4] sm:$0xf]
    %v1526 = vld [vmem:[#allocation3 + $0xa8] sm:$0xff]
    %v1527 = vld [vmem:[#allocation3 + $0xb0] sm:$0xf]
    %v1528 = vld [vmem:[#allocation3 + $0xb4] sm:$0xff]
    %v1529 = vld [vmem:[#allocation3 + $0xbc] sm:$0xf]
    %v1562 = vunpack.c.l.b16 %v1498
    %v1563 = vunpack.c.h.b16 %v1498
    %v1564 = vunpack.c.l.b16 %v1499
    %v1565 = vunpack.c.l.b16 %v1500
    %v1566 = vunpack.c.h.b16 %v1500
    %v1567 = vunpack.c.l.b16 %v1501
    %v1568 = vunpack.c.l.b16 %v1502
    %v1569 = vunpack.c.h.b16 %v1502
    %v1570 = vunpack.c.l.b16 %v1503
    %v1571 = vunpack.c.l.b16 %v1504
    %v1572 = vunpack.c.h.b16 %v1504
    %v1573 = vunpack.c.l.b16 %v1505
    %v1574 = vunpack.c.l.b16 %v1506
    %v1575 = vunpack.c.h.b16 %v1506
    %v1576 = vunpack.c.l.b16 %v1507
    %v1577 = vunpack.c.l.b16 %v1508
    %v1578 = vunpack.c.h.b16 %v1508
    %v1579 = vunpack.c.l.b16 %v1509
    %v1580 = vunpack.c.l.b16 %v1510
    %v1581 = vunpack.c.h.b16 %v1510
    %v1582 = vunpack.c.l.b16 %v1511
    %v1583 = vunpack.c.l.b16 %v1512
    %v1584 = vunpack.c.h.b16 %v1512
    %v1585 = vunpack.c.l.b16 %v1513
    %v1586 = vunpack.c.l.b16 %v1514
    %v1587 = vunpack.c.h.b16 %v1514
    %v1588 = vunpack.c.l.b16 %v1515
    %v1589 = vunpack.c.l.b16 %v1516
    %v1590 = vunpack.c.h.b16 %v1516
    %v1591 = vunpack.c.l.b16 %v1517
    %v1592 = vunpack.c.l.b16 %v1518
    %v1593 = vunpack.c.h.b16 %v1518
    %v1594 = vunpack.c.l.b16 %v1519
    %v1595 = vunpack.c.l.b16 %v1520
    %v1596 = vunpack.c.h.b16 %v1520
    %v1597 = vunpack.c.l.b16 %v1521
    %v1598 = vunpack.c.l.b16 %v1522
    %v1599 = vunpack.c.h.b16 %v1522
    %v1600 = vunpack.c.l.b16 %v1523
    %v1601 = vunpack.c.l.b16 %v1524
    %v1602 = vunpack.c.h.b16 %v1524
    %v1603 = vunpack.c.l.b16 %v1525
    %v1604 = vunpack.c.l.b16 %v1526
    %v1605 = vunpack.c.h.b16 %v1526
    %v1606 = vunpack.c.l.b16 %v1527
    %v1607 = vunpack.c.l.b16 %v1528
    %v1608 = vunpack.c.h.b16 %v1528
    %v1609 = vunpack.c.l.b16 %v1529
    %v1610 = vpack.c.b16 %v1565, %v1562
    %v1611 = vpack.c.b16 %v1566, %v1563
    %v1612 = vpack.c.b16 %v1567, %v1564
    %v1613 = vpack.c.b16 %v1571, %v1568
    %v1614 = vpack.c.b16 %v1572, %v1569
    %v1615 = vpack.c.b16 %v1573, %v1570
    %v1616 = vpack.c.b16 %v1577, %v1574
    %v1617 = vpack.c.b16 %v1578, %v1575
    %v1618 = vpack.c.b16 %v1579, %v1576
    %v1619 = vpack.c.b16 %v1583, %v1580
    %v1620 = vpack.c.b16 %v1584, %v1581
    %v1621 = vpack.c.b16 %v1585, %v1582
    %v1622 = vpack.c.b16 %v1589, %v1586
    %v1623 = vpack.c.b16 %v1590, %v1587
    %v1624 = vpack.c.b16 %v1591, %v1588
    %v1625 = vpack.c.b16 %v1595, %v1592
    %v1626 = vpack.c.b16 %v1596, %v1593
    %v1627 = vpack.c.b16 %v1597, %v1594
    %v1628 = vpack.c.b16 %v1601, %v1598
    %v1629 = vpack.c.b16 %v1602, %v1599
    %v1630 = vpack.c.b16 %v1603, %v1600
    %v1631 = vpack.c.b16 %v1607, %v1604
    %v1632 = vpack.c.b16 %v1608, %v1605
    %v1633 = vpack.c.b16 %v1609, %v1606
    %1658 = vmatprep.subr.bf16.mxu0 %v1611
    %1659 = vmatpush1.bf16.msra.mxu0 %v1610
    %1660 = vmatprep.subr.bf16.mxu0 %v1614
    %1661 = vmatpush1.bf16.msra.mxu0 %v1613
    %1662 = vmatprep.subr.bf16.mxu0 %v1617
    %1663 = vmatpush1.bf16.msra.mxu0 %v1616
    %1664 = vmatprep.subr.bf16.mxu0 %v1620
    %1665 = vmatpush1.bf16.msra.mxu0 %v1619
    %1666 = vmatprep.subr.bf16.mxu0 %v1623
    %1667 = vmatpush1.bf16.msra.mxu0 %v1622
    %1668 = vmatprep.subr.bf16.mxu0 %v1626
    %1669 = vmatpush1.bf16.msra.mxu0 %v1625
    %1670 = vmatprep.subr.bf16.mxu0 %v1629
    %1671 = vmatpush1.bf16.msra.mxu0 %v1628
    %1672 = vmatprep.subr.bf16.mxu0 %v1632
    %1673 = vmatpush1.bf16.msra.mxu0 %v1631
    %1674 = vmatprep.subr.bf16.mxu0 0
    %1675 = vmatpush1.bf16.msra.mxu0 0
    %1676 = vmatprep.subr.bf16.mxu0 0
    %1677 = vmatpush1.bf16.msra.mxu0 0
    %1678 = vmatprep.subr.bf16.mxu0 0
    %1679 = vmatpush1.bf16.msra.mxu0 0
    %1680 = vmatprep.subr.bf16.mxu0 0
    %1681 = vmatpush1.bf16.msra.mxu0 0
    %1682 = vmatprep.subr.bf16.mxu0 0
    %1683 = vmatpush1.bf16.msra.mxu0 0
    %1684 = vmatprep.subr.bf16.mxu0 0
    %1685 = vmatpush1.bf16.msra.mxu0 0
    %1686 = vmatprep.subr.bf16.mxu0 0
    %1687 = vmatpush1.bf16.msra.mxu0 0
    %1688 = vmatprep.subr.bf16.mxu0 0
    %1689 = vmatpush1.bf16.msra.mxu0 0
    %1690 = vmatprep.mubr.bf16.mxu0 0
    %1691 = vmatmul.mubr.bf16.gmra.mrb[0].mxu0 %v1497
    %v1692 = vpop.f32.mrb[0].mxu0
    %v1693 = vadd.f32 %v415, %v1692
    %v1694 = vpop.f32.mrb[0].mxu0
    %v1695 = vadd.f32 %v419, %v1694
    %v1696 = vpop.f32.mrb[0].mxu0
    %v1697 = vpop.f32.mrb[0].mxu0
    %1698 = vdwg.mxu0
    %1699 = vmatprep.subr.bf16.mxu0 0
    %1700 = vmatpush1.bf16.msra.mxu0 %v1612
    %1701 = vmatprep.subr.bf16.mxu0 0
    %1702 = vmatpush1.bf16.msra.mxu0 %v1615
    %1703 = vmatprep.subr.bf16.mxu0 0
    %1704 = vmatpush1.bf16.msra.mxu0 %v1618
    %1705 = vmatprep.subr.bf16.mxu0 0
    %1706 = vmatpush1.bf16.msra.mxu0 %v1621
    %1707 = vmatprep.subr.bf16.mxu0 0
    %1708 = vmatpush1.bf16.msra.mxu0 %v1624
    %1709 = vmatprep.subr.bf16.mxu0 0
    %1710 = vmatpush1.bf16.msra.mxu0 %v1627
    %1711 = vmatprep.subr.bf16.mxu0 0
    %1712 = vmatpush1.bf16.msra.mxu0 %v1630
    %1713 = vmatprep.subr.bf16.mxu0 0
    %1714 = vmatpush1.bf16.msra.mxu0 %v1633
    %1715 = vmatprep.subr.bf16.mxu0 0
    %1716 = vmatpush1.bf16.msra.mxu0 0
    %1717 = vmatprep.subr.bf16.mxu0 0
    %1718 = vmatpush1.bf16.msra.mxu0 0
    %1719 = vmatprep.subr.bf16.mxu0 0
    %1720 = vmatpush1.bf16.msra.mxu0 0
    %1721 = vmatprep.subr.bf16.mxu0 0
    %1722 = vmatpush1.bf16.msra.mxu0 0
    %1723 = vmatprep.subr.bf16.mxu0 0
    %1724 = vmatpush1.bf16.msra.mxu0 0
    %1725 = vmatprep.subr.bf16.mxu0 0
    %1726 = vmatpush1.bf16.msra.mxu0 0
    %1727 = vmatprep.subr.bf16.mxu0 0
    %1728 = vmatpush1.bf16.msra.mxu0 0
    %1729 = vmatprep.subr.bf16.mxu0 0
    %1730 = vmatpush1.bf16.msra.mxu0 0
    %1731 = vmatprep.mubr.bf16.mxu0 0
    %1732 = vmatmul.mubr.bf16.gmra.mrb[0].mxu0 %v1497
    %v1733 = vpop.f32.mrb[0].mxu0
    %v1734 = vadd.f32 %v423, %v1733
    %v1735 = vpop.f32.mrb[0].mxu0
    %v1736 = vpop.f32.mrb[0].mxu0
    %v1737 = vpop.f32.mrb[0].mxu0
    %1738 = vdwg.mxu0
    %v1739 = vadd.f32 %v327, %v1693
    %v1740 = vxor.u32 %v1739, 2147483648
    %v1741 = vmul.f32 %v1740, 1.442695
    %v1742 = vpow.pop %v1741
    %v1743 = vadd.f32 %v1742, 1.0
    %v1744 = vrcp.pop %v1743
    %v1745 = vmul.f32 1.0, %v1744
    %v1746 = vadd.f32 %v329, %v1695
    %v1747 = vxor.u32 %v1746, 2147483648
    %v1748 = vmul.f32 %v1747, 1.442695
    %v1749 = vpow.pop %v1748
    %v1750 = vadd.f32 %v1749, 1.0
    %v1751 = vrcp.pop %v1750
    %v1752 = vmul.f32 1.0, %v1751
    %v1753 = vmul.f32 %v1745, %v1734
    %v1754 = vadd.f32 %v396, %v1753
    %v1755 = vtanh.pop %v1754
    %v1756 = vsub.f32 %v1496, %v1755
    %v1757 = vmul.f32 %v1752, %v1756
    %v1758 = vadd.f32 %v1755, %v1757
    %s1759 = scalar_lea.vmem [#allocation2], 32
    %1760 = vst [vmem:[%s1759] sm:$0xff] %v1758
    %s1761 = scalar_lea.vmem %s1, 40
    %v1762 = vld [vmem:[%s1761] sm:$0xff]
    %v1763 = vmul.f32 %v1758, %v1762
    %v1764 = vpack.c.bf16 %v1763, %v1763
    %v1765 = vld [vmem:[#allocation3] sm:$0xff]
    %v1766 = vld [vmem:[#allocation3 + $0x8] sm:$0xf]
    %v1767 = vld [vmem:[#allocation3 + $0xc] sm:$0xff]
    %v1768 = vld [vmem:[#allocation3 + $0x14] sm:$0xf]
    %v1769 = vld [vmem:[#allocation3 + $0x18] sm:$0xff]
    %v1770 = vld [vmem:[#allocation3 + $0x20] sm:$0xf]
    %v1771 = vld [vmem:[#allocation3 + $0x24] sm:$0xff]
    %v1772 = vld [vmem:[#allocation3 + $0x2c] sm:$0xf]
    %v1773 = vld [vmem:[#allocation3 + $0x30] sm:$0xff]
    %v1774 = vld [vmem:[#allocation3 + $0x38] sm:$0xf]
    %v1775 = vld [vmem:[#allocation3 + $0x3c] sm:$0xff]
    %v1776 = vld [vmem:[#allocation3 + $0x44] sm:$0xf]
    %v1777 = vld [vmem:[#allocation3 + $0x48] sm:$0xff]
    %v1778 = vld [vmem:[#allocation3 + $0x50] sm:$0xf]
    %v1779 = vld [vmem:[#allocation3 + $0x54] sm:$0xff]
    %v1780 = vld [vmem:[#allocation3 + $0x5c] sm:$0xf]
    %v1781 = vld [vmem:[#allocation3 + $0x60] sm:$0xff]
    %v1782 = vld [vmem:[#allocation3 + $0x68] sm:$0xf]
    %v1783 = vld [vmem:[#allocation3 + $0x6c] sm:$0xff]
    %v1784 = vld [vmem:[#allocation3 + $0x74] sm:$0xf]
    %v1785 = vld [vmem:[#allocation3 + $0x78] sm:$0xff]
    %v1786 = vld [vmem:[#allocation3 + $0x80] sm:$0xf]
    %v1787 = vld [vmem:[#allocation3 + $0x84] sm:$0xff]
    %v1788 = vld [vmem:[#allocation3 + $0x8c] sm:$0xf]
    %v1789 = vld [vmem:[#allocation3 + $0x90] sm:$0xff]
    %v1790 = vld [vmem:[#allocation3 + $0x98] sm:$0xf]
    %v1791 = vld [vmem:[#allocation3 + $0x9c] sm:$0xff]
    %v1792 = vld [vmem:[#allocation3 + $0xa4] sm:$0xf]
    %v1793 = vld [vmem:[#allocation3 + $0xa8] sm:$0xff]
    %v1794 = vld [vmem:[#allocation3 + $0xb0] sm:$0xf]
    %v1795 = vld [vmem:[#allocation3 + $0xb4] sm:$0xff]
    %v1796 = vld [vmem:[#allocation3 + $0xbc] sm:$0xf]
    %v1829 = vunpack.c.l.b16 %v1765
    %v1830 = vunpack.c.h.b16 %v1765
    %v1831 = vunpack.c.l.b16 %v1766
    %v1832 = vunpack.c.l.b16 %v1767
    %v1833 = vunpack.c.h.b16 %v1767
    %v1834 = vunpack.c.l.b16 %v1768
    %v1835 = vunpack.c.l.b16 %v1769
    %v1836 = vunpack.c.h.b16 %v1769
    %v1837 = vunpack.c.l.b16 %v1770
    %v1838 = vunpack.c.l.b16 %v1771
    %v1839 = vunpack.c.h.b16 %v1771
    %v1840 = vunpack.c.l.b16 %v1772
    %v1841 = vunpack.c.l.b16 %v1773
    %v1842 = vunpack.c.h.b16 %v1773
    %v1843 = vunpack.c.l.b16 %v1774
    %v1844 = vunpack.c.l.b16 %v1775
    %v1845 = vunpack.c.h.b16 %v1775
    %v1846 = vunpack.c.l.b16 %v1776
    %v1847 = vunpack.c.l.b16 %v1777
    %v1848 = vunpack.c.h.b16 %v1777
    %v1849 = vunpack.c.l.b16 %v1778
    %v1850 = vunpack.c.l.b16 %v1779
    %v1851 = vunpack.c.h.b16 %v1779
    %v1852 = vunpack.c.l.b16 %v1780
    %v1853 = vunpack.c.l.b16 %v1781
    %v1854 = vunpack.c.h.b16 %v1781
    %v1855 = vunpack.c.l.b16 %v1782
    %v1856 = vunpack.c.l.b16 %v1783
    %v1857 = vunpack.c.h.b16 %v1783
    %v1858 = vunpack.c.l.b16 %v1784
    %v1859 = vunpack.c.l.b16 %v1785
    %v1860 = vunpack.c.h.b16 %v1785
    %v1861 = vunpack.c.l.b16 %v1786
    %v1862 = vunpack.c.l.b16 %v1787
    %v1863 = vunpack.c.h.b16 %v1787
    %v1864 = vunpack.c.l.b16 %v1788
    %v1865 = vunpack.c.l.b16 %v1789
    %v1866 = vunpack.c.h.b16 %v1789
    %v1867 = vunpack.c.l.b16 %v1790
    %v1868 = vunpack.c.l.b16 %v1791
    %v1869 = vunpack.c.h.b16 %v1791
    %v1870 = vunpack.c.l.b16 %v1792
    %v1871 = vunpack.c.l.b16 %v1793
    %v1872 = vunpack.c.h.b16 %v1793
    %v1873 = vunpack.c.l.b16 %v1794
    %v1874 = vunpack.c.l.b16 %v1795
    %v1875 = vunpack.c.h.b16 %v1795
    %v1876 = vunpack.c.l.b16 %v1796
    %v1877 = vpack.c.b16 %v1832, %v1829
    %v1878 = vpack.c.b16 %v1833, %v1830
    %v1879 = vpack.c.b16 %v1834, %v1831
    %v1880 = vpack.c.b16 %v1838, %v1835
    %v1881 = vpack.c.b16 %v1839, %v1836
    %v1882 = vpack.c.b16 %v1840, %v1837
    %v1883 = vpack.c.b16 %v1844, %v1841
    %v1884 = vpack.c.b16 %v1845, %v1842
    %v1885 = vpack.c.b16 %v1846, %v1843
    %v1886 = vpack.c.b16 %v1850, %v1847
    %v1887 = vpack.c.b16 %v1851, %v1848
    %v1888 = vpack.c.b16 %v1852, %v1849
    %v1889 = vpack.c.b16 %v1856, %v1853
    %v1890 = vpack.c.b16 %v1857, %v1854
    %v1891 = vpack.c.b16 %v1858, %v1855
    %v1892 = vpack.c.b16 %v1862, %v1859
    %v1893 = vpack.c.b16 %v1863, %v1860
    %v1894 = vpack.c.b16 %v1864, %v1861
    %v1895 = vpack.c.b16 %v1868, %v1865
    %v1896 = vpack.c.b16 %v1869, %v1866
    %v1897 = vpack.c.b16 %v1870, %v1867
    %v1898 = vpack.c.b16 %v1874, %v1871
    %v1899 = vpack.c.b16 %v1875, %v1872
    %v1900 = vpack.c.b16 %v1876, %v1873
    %1925 = vmatprep.subr.bf16.mxu0 %v1878
    %1926 = vmatpush1.bf16.msra.mxu0 %v1877
    %1927 = vmatprep.subr.bf16.mxu0 %v1881
    %1928 = vmatpush1.bf16.msra.mxu0 %v1880
    %1929 = vmatprep.subr.bf16.mxu0 %v1884
    %1930 = vmatpush1.bf16.msra.mxu0 %v1883
    %1931 = vmatprep.subr.bf16.mxu0 %v1887
    %1932 = vmatpush1.bf16.msra.mxu0 %v1886
    %1933 = vmatprep.subr.bf16.mxu0 %v1890
    %1934 = vmatpush1.bf16.msra.mxu0 %v1889
    %1935 = vmatprep.subr.bf16.mxu0 %v1893
    %1936 = vmatpush1.bf16.msra.mxu0 %v1892
    %1937 = vmatprep.subr.bf16.mxu0 %v1896
    %1938 = vmatpush1.bf16.msra.mxu0 %v1895
    %1939 = vmatprep.subr.bf16.mxu0 %v1899
    %1940 = vmatpush1.bf16.msra.mxu0 %v1898
    %1941 = vmatprep.subr.bf16.mxu0 0
    %1942 = vmatpush1.bf16.msra.mxu0 0
    %1943 = vmatprep.subr.bf16.mxu0 0
    %1944 = vmatpush1.bf16.msra.mxu0 0
    %1945 = vmatprep.subr.bf16.mxu0 0
    %1946 = vmatpush1.bf16.msra.mxu0 0
    %1947 = vmatprep.subr.bf16.mxu0 0
    %1948 = vmatpush1.bf16.msra.mxu0 0
    %1949 = vmatprep.subr.bf16.mxu0 0
    %1950 = vmatpush1.bf16.msra.mxu0 0
    %1951 = vmatprep.subr.bf16.mxu0 0
    %1952 = vmatpush1.bf16.msra.mxu0 0
    %1953 = vmatprep.subr.bf16.mxu0 0
    %1954 = vmatpush1.bf16.msra.mxu0 0
    %1955 = vmatprep.subr.bf16.mxu0 0
    %1956 = vmatpush1.bf16.msra.mxu0 0
    %1957 = vmatprep.mubr.bf16.mxu0 0
    %1958 = vmatmul.mubr.bf16.gmra.mrb[0].mxu0 %v1764
    %v1959 = vpop.f32.mrb[0].mxu0
    %v1960 = vadd.f32 %v415, %v1959
    %v1961 = vpop.f32.mrb[0].mxu0
    %v1962 = vadd.f32 %v419, %v1961
    %v1963 = vpop.f32.mrb[0].mxu0
    %v1964 = vpop.f32.mrb[0].mxu0
    %1965 = vdwg.mxu0
    %1966 = vmatprep.subr.bf16.mxu0 0
    %1967 = vmatpush1.bf16.msra.mxu0 %v1879
    %1968 = vmatprep.subr.bf16.mxu0 0
    %1969 = vmatpush1.bf16.msra.mxu0 %v1882
    %1970 = vmatprep.subr.bf16.mxu0 0
    %1971 = vmatpush1.bf16.msra.mxu0 %v1885
    %1972 = vmatprep.subr.bf16.mxu0 0
    %1973 = vmatpush1.bf16.msra.mxu0 %v1888
    %1974 = vmatprep.subr.bf16.mxu0 0
    %1975 = vmatpush1.bf16.msra.mxu0 %v1891
    %1976 = vmatprep.subr.bf16.mxu0 0
    %1977 = vmatpush1.bf16.msra.mxu0 %v1894
    %1978 = vmatprep.subr.bf16.mxu0 0
    %1979 = vmatpush1.bf16.msra.mxu0 %v1897
    %1980 = vmatprep.subr.bf16.mxu0 0
    %1981 = vmatpush1.bf16.msra.mxu0 %v1900
    %1982 = vmatprep.subr.bf16.mxu0 0
    %1983 = vmatpush1.bf16.msra.mxu0 0
    %1984 = vmatprep.subr.bf16.mxu0 0
    %1985 = vmatpush1.bf16.msra.mxu0 0
    %1986 = vmatprep.subr.bf16.mxu0 0
    %1987 = vmatpush1.bf16.msra.mxu0 0
    %1988 = vmatprep.subr.bf16.mxu0 0
    %1989 = vmatpush1.bf16.msra.mxu0 0
    %1990 = vmatprep.subr.bf16.mxu0 0
    %1991 = vmatpush1.bf16.msra.mxu0 0
    %1992 = vmatprep.subr.bf16.mxu0 0
    %1993 = vmatpush1.bf16.msra.mxu0 0
    %1994 = vmatprep.subr.bf16.mxu0 0
    %1995 = vmatpush1.bf16.msra.mxu0 0
    %1996 = vmatprep.subr.bf16.mxu0 0
    %1997 = vmatpush1.bf16.msra.mxu0 0
    %1998 = vmatprep.mubr.bf16.mxu0 0
    %1999 = vmatmul.mubr.bf16.gmra.mrb[0].mxu0 %v1764
    %v2000 = vpop.f32.mrb[0].mxu0
    %v2001 = vadd.f32 %v423, %v2000
    %v2002 = vpop.f32.mrb[0].mxu0
    %v2003 = vpop.f32.mrb[0].mxu0
    %v2004 = vpop.f32.mrb[0].mxu0
    %2005 = vdwg.mxu0
    %v2006 = vadd.f32 %v331, %v1960
    %v2007 = vxor.u32 %v2006, 2147483648
    %v2008 = vmul.f32 %v2007, 1.442695
    %v2009 = vpow.pop %v2008
    %v2010 = vadd.f32 %v2009, 1.0
    %v2011 = vrcp.pop %v2010
    %v2012 = vmul.f32 1.0, %v2011
    %v2013 = vadd.f32 %v333, %v1962
    %v2014 = vxor.u32 %v2013, 2147483648
    %v2015 = vmul.f32 %v2014, 1.442695
    %v2016 = vpow.pop %v2015
    %v2017 = vadd.f32 %v2016, 1.0
    %v2018 = vrcp.pop %v2017
    %v2019 = vmul.f32 1.0, %v2018
    %v2020 = vmul.f32 %v2012, %v2001
    %v2021 = vadd.f32 %v399, %v2020
    %v2022 = vtanh.pop %v2021
    %v2023 = vsub.f32 %v1763, %v2022
    %v2024 = vmul.f32 %v2019, %v2023
    %v2025 = vadd.f32 %v2022, %v2024
    %s2026 = scalar_lea.vmem [#allocation2], 40
    %2027 = vst [vmem:[%s2026] sm:$0xff] %v2025
    %s2028 = scalar_lea.vmem %s1, 48
    %v2029 = vld [vmem:[%s2028] sm:$0xff]
    %v2030 = vmul.f32 %v2025, %v2029
    %v2031 = vpack.c.bf16 %v2030, %v2030
    %v2032 = vld [vmem:[#allocation3] sm:$0xff]
    %v2033 = vld [vmem:[#allocation3 + $0x8] sm:$0xf]
    %v2034 = vld [vmem:[#allocation3 + $0xc] sm:$0xff]
    %v2035 = vld [vmem:[#allocation3 + $0x14] sm:$0xf]
    %v2036 = vld [vmem:[#allocation3 + $0x18] sm:$0xff]
    %v2037 = vld [vmem:[#allocation3 + $0x20] sm:$0xf]
    %v2038 = vld [vmem:[#allocation3 + $0x24] sm:$0xff]
    %v2039 = vld [vmem:[#allocation3 + $0x2c] sm:$0xf]
    %v2040 = vld [vmem:[#allocation3 + $0x30] sm:$0xff]
    %v2041 = vld [vmem:[#allocation3 + $0x38] sm:$0xf]
    %v2042 = vld [vmem:[#allocation3 + $0x3c] sm:$0xff]
    %v2043 = vld [vmem:[#allocation3 + $0x44] sm:$0xf]
    %v2044 = vld [vmem:[#allocation3 + $0x48] sm:$0xff]
    %v2045 = vld [vmem:[#allocation3 + $0x50] sm:$0xf]
    %v2046 = vld [vmem:[#allocation3 + $0x54] sm:$0xff]
    %v2047 = vld [vmem:[#allocation3 + $0x5c] sm:$0xf]
    %v2048 = vld [vmem:[#allocation3 + $0x60] sm:$0xff]
    %v2049 = vld [vmem:[#allocation3 + $0x68] sm:$0xf]
    %v2050 = vld [vmem:[#allocation3 + $0x6c] sm:$0xff]
    %v2051 = vld [vmem:[#allocation3 + $0x74] sm:$0xf]
    %v2052 = vld [vmem:[#allocation3 + $0x78] sm:$0xff]
    %v2053 = vld [vmem:[#allocation3 + $0x80] sm:$0xf]
    %v2054 = vld [vmem:[#allocation3 + $0x84] sm:$0xff]
    %v2055 = vld [vmem:[#allocation3 + $0x8c] sm:$0xf]
    %v2056 = vld [vmem:[#allocation3 + $0x90] sm:$0xff]
    %v2057 = vld [vmem:[#allocation3 + $0x98] sm:$0xf]
    %v2058 = vld [vmem:[#allocation3 + $0x9c] sm:$0xff]
    %v2059 = vld [vmem:[#allocation3 + $0xa4] sm:$0xf]
    %v2060 = vld [vmem:[#allocation3 + $0xa8] sm:$0xff]
    %v2061 = vld [vmem:[#allocation3 + $0xb0] sm:$0xf]
    %v2062 = vld [vmem:[#allocation3 + $0xb4] sm:$0xff]
    %v2063 = vld [vmem:[#allocation3 + $0xbc] sm:$0xf]
    %v2096 = vunpack.c.l.b16 %v2032
    %v2097 = vunpack.c.h.b16 %v2032
    %v2098 = vunpack.c.l.b16 %v2033
    %v2099 = vunpack.c.l.b16 %v2034
    %v2100 = vunpack.c.h.b16 %v2034
    %v2101 = vunpack.c.l.b16 %v2035
    %v2102 = vunpack.c.l.b16 %v2036
    %v2103 = vunpack.c.h.b16 %v2036
    %v2104 = vunpack.c.l.b16 %v2037
    %v2105 = vunpack.c.l.b16 %v2038
    %v2106 = vunpack.c.h.b16 %v2038
    %v2107 = vunpack.c.l.b16 %v2039
    %v2108 = vunpack.c.l.b16 %v2040
    %v2109 = vunpack.c.h.b16 %v2040
    %v2110 = vunpack.c.l.b16 %v2041
    %v2111 = vunpack.c.l.b16 %v2042
    %v2112 = vunpack.c.h.b16 %v2042
    %v2113 = vunpack.c.l.b16 %v2043
    %v2114 = vunpack.c.l.b16 %v2044
    %v2115 = vunpack.c.h.b16 %v2044
    %v2116 = vunpack.c.l.b16 %v2045
    %v2117 = vunpack.c.l.b16 %v2046
    %v2118 = vunpack.c.h.b16 %v2046
    %v2119 = vunpack.c.l.b16 %v2047
    %v2120 = vunpack.c.l.b16 %v2048
    %v2121 = vunpack.c.h.b16 %v2048
    %v2122 = vunpack.c.l.b16 %v2049
    %v2123 = vunpack.c.l.b16 %v2050
    %v2124 = vunpack.c.h.b16 %v2050
    %v2125 = vunpack.c.l.b16 %v2051
    %v2126 = vunpack.c.l.b16 %v2052
    %v2127 = vunpack.c.h.b16 %v2052
    %v2128 = vunpack.c.l.b16 %v2053
    %v2129 = vunpack.c.l.b16 %v2054
    %v2130 = vunpack.c.h.b16 %v2054
    %v2131 = vunpack.c.l.b16 %v2055
    %v2132 = vunpack.c.l.b16 %v2056
    %v2133 = vunpack.c.h.b16 %v2056
    %v2134 = vunpack.c.l.b16 %v2057
    %v2135 = vunpack.c.l.b16 %v2058
    %v2136 = vunpack.c.h.b16 %v2058
    %v2137 = vunpack.c.l.b16 %v2059
    %v2138 = vunpack.c.l.b16 %v2060
    %v2139 = vunpack.c.h.b16 %v2060
    %v2140 = vunpack.c.l.b16 %v2061
    %v2141 = vunpack.c.l.b16 %v2062
    %v2142 = vunpack.c.h.b16 %v2062
    %v2143 = vunpack.c.l.b16 %v2063
    %v2144 = vpack.c.b16 %v2099, %v2096
    %v2145 = vpack.c.b16 %v2100, %v2097
    %v2146 = vpack.c.b16 %v2101, %v2098
    %v2147 = vpack.c.b16 %v2105, %v2102
    %v2148 = vpack.c.b16 %v2106, %v2103
    %v2149 = vpack.c.b16 %v2107, %v2104
    %v2150 = vpack.c.b16 %v2111, %v2108
    %v2151 = vpack.c.b16 %v2112, %v2109
    %v2152 = vpack.c.b16 %v2113, %v2110
    %v2153 = vpack.c.b16 %v2117, %v2114
    %v2154 = vpack.c.b16 %v2118, %v2115
    %v2155 = vpack.c.b16 %v2119, %v2116
    %v2156 = vpack.c.b16 %v2123, %v2120
    %v2157 = vpack.c.b16 %v2124, %v2121
    %v2158 = vpack.c.b16 %v2125, %v2122
    %v2159 = vpack.c.b16 %v2129, %v2126
    %v2160 = vpack.c.b16 %v2130, %v2127
    %v2161 = vpack.c.b16 %v2131, %v2128
    %v2162 = vpack.c.b16 %v2135, %v2132
    %v2163 = vpack.c.b16 %v2136, %v2133
    %v2164 = vpack.c.b16 %v2137, %v2134
    %v2165 = vpack.c.b16 %v2141, %v2138
    %v2166 = vpack.c.b16 %v2142, %v2139
    %v2167 = vpack.c.b16 %v2143, %v2140
    %2192 = vmatprep.subr.bf16.mxu0 %v2145
    %2193 = vmatpush1.bf16.msra.mxu0 %v2144
    %2194 = vmatprep.subr.bf16.mxu0 %v2148
    %2195 = vmatpush1.bf16.msra.mxu0 %v2147
    %2196 = vmatprep.subr.bf16.mxu0 %v2151
    %2197 = vmatpush1.bf16.msra.mxu0 %v2150
    %2198 = vmatprep.subr.bf16.mxu0 %v2154
    %2199 = vmatpush1.bf16.msra.mxu0 %v2153
    %2200 = vmatprep.subr.bf16.mxu0 %v2157
    %2201 = vmatpush1.bf16.msra.mxu0 %v2156
    %2202 = vmatprep.subr.bf16.mxu0 %v2160
    %2203 = vmatpush1.bf16.msra.mxu0 %v2159
    %2204 = vmatprep.subr.bf16.mxu0 %v2163
    %2205 = vmatpush1.bf16.msra.mxu0 %v2162
    %2206 = vmatprep.subr.bf16.mxu0 %v2166
    %2207 = vmatpush1.bf16.msra.mxu0 %v2165
    %2208 = vmatprep.subr.bf16.mxu0 0
    %2209 = vmatpush1.bf16.msra.mxu0 0
    %2210 = vmatprep.subr.bf16.mxu0 0
    %2211 = vmatpush1.bf16.msra.mxu0 0
    %2212 = vmatprep.subr.bf16.mxu0 0
    %2213 = vmatpush1.bf16.msra.mxu0 0
    %2214 = vmatprep.subr.bf16.mxu0 0
    %2215 = vmatpush1.bf16.msra.mxu0 0
    %2216 = vmatprep.subr.bf16.mxu0 0
    %2217 = vmatpush1.bf16.msra.mxu0 0
    %2218 = vmatprep.subr.bf16.mxu0 0
    %2219 = vmatpush1.bf16.msra.mxu0 0
    %2220 = vmatprep.subr.bf16.mxu0 0
    %2221 = vmatpush1.bf16.msra.mxu0 0
    %2222 = vmatprep.subr.bf16.mxu0 0
    %2223 = vmatpush1.bf16.msra.mxu0 0
    %2224 = vmatprep.mubr.bf16.mxu0 0
    %2225 = vmatmul.mubr.bf16.gmra.mrb[0].mxu0 %v2031
    %v2226 = vpop.f32.mrb[0].mxu0
    %v2227 = vadd.f32 %v415, %v2226
    %v2228 = vpop.f32.mrb[0].mxu0
    %v2229 = vadd.f32 %v419, %v2228
    %v2230 = vpop.f32.mrb[0].mxu0
    %v2231 = vpop.f32.mrb[0].mxu0
    %2232 = vdwg.mxu0
    %2233 = vmatprep.subr.bf16.mxu0 0
    %2234 = vmatpush1.bf16.msra.mxu0 %v2146
    %2235 = vmatprep.subr.bf16.mxu0 0
    %2236 = vmatpush1.bf16.msra.mxu0 %v2149
    %2237 = vmatprep.subr.bf16.mxu0 0
    %2238 = vmatpush1.bf16.msra.mxu0 %v2152
    %2239 = vmatprep.subr.bf16.mxu0 0
    %2240 = vmatpush1.bf16.msra.mxu0 %v2155
    %2241 = vmatprep.subr.bf16.mxu0 0
    %2242 = vmatpush1.bf16.msra.mxu0 %v2158
    %2243 = vmatprep.subr.bf16.mxu0 0
    %2244 = vmatpush1.bf16.msra.mxu0 %v2161
    %2245 = vmatprep.subr.bf16.mxu0 0
    %2246 = vmatpush1.bf16.msra.mxu0 %v2164
    %2247 = vmatprep.subr.bf16.mxu0 0
    %2248 = vmatpush1.bf16.msra.mxu0 %v2167
    %2249 = vmatprep.subr.bf16.mxu0 0
    %2250 = vmatpush1.bf16.msra.mxu0 0
    %2251 = vmatprep.subr.bf16.mxu0 0
    %2252 = vmatpush1.bf16.msra.mxu0 0
    %2253 = vmatprep.subr.bf16.mxu0 0
    %2254 = vmatpush1.bf16.msra.mxu0 0
    %2255 = vmatprep.subr.bf16.mxu0 0
    %2256 = vmatpush1.bf16.msra.mxu0 0
    %2257 = vmatprep.subr.bf16.mxu0 0
    %2258 = vmatpush1.bf16.msra.mxu0 0
    %2259 = vmatprep.subr.bf16.mxu0 0
    %2260 = vmatpush1.bf16.msra.mxu0 0
    %2261 = vmatprep.subr.bf16.mxu0 0
    %2262 = vmatpush1.bf16.msra.mxu0 0
    %2263 = vmatprep.subr.bf16.mxu0 0
    %2264 = vmatpush1.bf16.msra.mxu0 0
    %2265 = vmatprep.mubr.bf16.mxu0 0
    %2266 = vmatmul.mubr.bf16.gmra.mrb[0].mxu0 %v2031
    %v2267 = vpop.f32.mrb[0].mxu0
    %v2268 = vadd.f32 %v423, %v2267
    %v2269 = vpop.f32.mrb[0].mxu0
    %v2270 = vpop.f32.mrb[0].mxu0
    %v2271 = vpop.f32.mrb[0].mxu0
    %2272 = vdwg.mxu0
    %v2273 = vadd.f32 %v337, %v2227
    %v2274 = vxor.u32 %v2273, 2147483648
    %v2275 = vmul.f32 %v2274, 1.442695
    %v2276 = vpow.pop %v2275
    %v2277 = vadd.f32 %v2276, 1.0
    %v2278 = vrcp.pop %v2277
    %v2279 = vmul.f32 1.0, %v2278
    %v2280 = vadd.f32 %v339, %v2229
    %v2281 = vxor.u32 %v2280, 2147483648
    %v2282 = vmul.f32 %v2281, 1.442695
    %v2283 = vpow.pop %v2282
    %v2284 = vadd.f32 %v2283, 1.0
    %v2285 = vrcp.pop %v2284
    %v2286 = vmul.f32 1.0, %v2285
    %v2287 = vmul.f32 %v2279, %v2268
    %v2288 = vadd.f32 %v404, %v2287
    %v2289 = vtanh.pop %v2288
    %v2290 = vsub.f32 %v2030, %v2289
    %v2291 = vmul.f32 %v2286, %v2290
    %v2292 = vadd.f32 %v2289, %v2291
    %s2293 = scalar_lea.vmem [#allocation2], 48
    %2294 = vst [vmem:[%s2293] sm:$0xff] %v2292
    %s2295 = scalar_lea.vmem %s1, 56
    %v2296 = vld [vmem:[%s2295] sm:$0xff]
    %v2297 = vmul.f32 %v2292, %v2296
    %v2298 = vpack.c.bf16 %v2297, %v2297
    %v2299 = vld [vmem:[#allocation3] sm:$0xff]
    %v2300 = vld [vmem:[#allocation3 + $0x8] sm:$0xf]
    %v2301 = vld [vmem:[#allocation3 + $0xc] sm:$0xff]
    %v2302 = vld [vmem:[#allocation3 + $0x14] sm:$0xf]
    %v2303 = vld [vmem:[#allocation3 + $0x18] sm:$0xff]
    %v2304 = vld [vmem:[#allocation3 + $0x20] sm:$0xf]
    %v2305 = vld [vmem:[#allocation3 + $0x24] sm:$0xff]
    %v2306 = vld [vmem:[#allocation3 + $0x2c] sm:$0xf]
    %v2307 = vld [vmem:[#allocation3 + $0x30] sm:$0xff]
    %v2308 = vld [vmem:[#allocation3 + $0x38] sm:$0xf]
    %v2309 = vld [vmem:[#allocation3 + $0x3c] sm:$0xff]
    %v2310 = vld [vmem:[#allocation3 + $0x44] sm:$0xf]
    %v2311 = vld [vmem:[#allocation3 + $0x48] sm:$0xff]
    %v2312 = vld [vmem:[#allocation3 + $0x50] sm:$0xf]
    %v2313 = vld [vmem:[#allocation3 + $0x54] sm:$0xff]
    %v2314 = vld [vmem:[#allocation3 + $0x5c] sm:$0xf]
    %v2315 = vld [vmem:[#allocation3 + $0x60] sm:$0xff]
    %v2316 = vld [vmem:[#allocation3 + $0x68] sm:$0xf]
    %v2317 = vld [vmem:[#allocation3 + $0x6c] sm:$0xff]
    %v2318 = vld [vmem:[#allocation3 + $0x74] sm:$0xf]
    %v2319 = vld [vmem:[#allocation3 + $0x78] sm:$0xff]
    %v2320 = vld [vmem:[#allocation3 + $0x80] sm:$0xf]
    %v2321 = vld [vmem:[#allocation3 + $0x84] sm:$0xff]
    %v2322 = vld [vmem:[#allocation3 + $0x8c] sm:$0xf]
    %v2323 = vld [vmem:[#allocation3 + $0x90] sm:$0xff]
    %v2324 = vld [vmem:[#allocation3 + $0x98] sm:$0xf]
    %v2325 = vld [vmem:[#allocation3 + $0x9c] sm:$0xff]
    %v2326 = vld [vmem:[#allocation3 + $0xa4] sm:$0xf]
    %v2327 = vld [vmem:[#allocation3 + $0xa8] sm:$0xff]
    %v2328 = vld [vmem:[#allocation3 + $0xb0] sm:$0xf]
    %v2329 = vld [vmem:[#allocation3 + $0xb4] sm:$0xff]
    %v2330 = vld [vmem:[#allocation3 + $0xbc] sm:$0xf]
    %v2363 = vunpack.c.l.b16 %v2299
    %v2364 = vunpack.c.h.b16 %v2299
    %v2365 = vunpack.c.l.b16 %v2300
    %v2366 = vunpack.c.l.b16 %v2301
    %v2367 = vunpack.c.h.b16 %v2301
    %v2368 = vunpack.c.l.b16 %v2302
    %v2369 = vunpack.c.l.b16 %v2303
    %v2370 = vunpack.c.h.b16 %v2303
    %v2371 = vunpack.c.l.b16 %v2304
    %v2372 = vunpack.c.l.b16 %v2305
    %v2373 = vunpack.c.h.b16 %v2305
    %v2374 = vunpack.c.l.b16 %v2306
    %v2375 = vunpack.c.l.b16 %v2307
    %v2376 = vunpack.c.h.b16 %v2307
    %v2377 = vunpack.c.l.b16 %v2308
    %v2378 = vunpack.c.l.b16 %v2309
    %v2379 = vunpack.c.h.b16 %v2309
    %v2380 = vunpack.c.l.b16 %v2310
    %v2381 = vunpack.c.l.b16 %v2311
    %v2382 = vunpack.c.h.b16 %v2311
    %v2383 = vunpack.c.l.b16 %v2312
    %v2384 = vunpack.c.l.b16 %v2313
    %v2385 = vunpack.c.h.b16 %v2313
    %v2386 = vunpack.c.l.b16 %v2314
    %v2387 = vunpack.c.l.b16 %v2315
    %v2388 = vunpack.c.h.b16 %v2315
    %v2389 = vunpack.c.l.b16 %v2316
    %v2390 = vunpack.c.l.b16 %v2317
    %v2391 = vunpack.c.h.b16 %v2317
    %v2392 = vunpack.c.l.b16 %v2318
    %v2393 = vunpack.c.l.b16 %v2319
    %v2394 = vunpack.c.h.b16 %v2319
    %v2395 = vunpack.c.l.b16 %v2320
    %v2396 = vunpack.c.l.b16 %v2321
    %v2397 = vunpack.c.h.b16 %v2321
    %v2398 = vunpack.c.l.b16 %v2322
    %v2399 = vunpack.c.l.b16 %v2323
    %v2400 = vunpack.c.h.b16 %v2323
    %v2401 = vunpack.c.l.b16 %v2324
    %v2402 = vunpack.c.l.b16 %v2325
    %v2403 = vunpack.c.h.b16 %v2325
    %v2404 = vunpack.c.l.b16 %v2326
    %v2405 = vunpack.c.l.b16 %v2327
    %v2406 = vunpack.c.h.b16 %v2327
    %v2407 = vunpack.c.l.b16 %v2328
    %v2408 = vunpack.c.l.b16 %v2329
    %v2409 = vunpack.c.h.b16 %v2329
    %v2410 = vunpack.c.l.b16 %v2330
    %v2411 = vpack.c.b16 %v2366, %v2363
    %v2412 = vpack.c.b16 %v2367, %v2364
    %v2413 = vpack.c.b16 %v2368, %v2365
    %v2414 = vpack.c.b16 %v2372, %v2369
    %v2415 = vpack.c.b16 %v2373, %v2370
    %v2416 = vpack.c.b16 %v2374, %v2371
    %v2417 = vpack.c.b16 %v2378, %v2375
    %v2418 = vpack.c.b16 %v2379, %v2376
    %v2419 = vpack.c.b16 %v2380, %v2377
    %v2420 = vpack.c.b16 %v2384, %v2381
    %v2421 = vpack.c.b16 %v2385, %v2382
    %v2422 = vpack.c.b16 %v2386, %v2383
    %v2423 = vpack.c.b16 %v2390, %v2387
    %v2424 = vpack.c.b16 %v2391, %v2388
    %v2425 = vpack.c.b16 %v2392, %v2389
    %v2426 = vpack.c.b16 %v2396, %v2393
    %v2427 = vpack.c.b16 %v2397, %v2394
    %v2428 = vpack.c.b16 %v2398, %v2395
    %v2429 = vpack.c.b16 %v2402, %v2399
    %v2430 = vpack.c.b16 %v2403, %v2400
    %v2431 = vpack.c.b16 %v2404, %v2401
    %v2432 = vpack.c.b16 %v2408, %v2405
    %v2433 = vpack.c.b16 %v2409, %v2406
    %v2434 = vpack.c.b16 %v2410, %v2407
    %2459 = vmatprep.subr.bf16.mxu0 %v2412
    %2460 = vmatpush1.bf16.msra.mxu0 %v2411
    %2461 = vmatprep.subr.bf16.mxu0 %v2415
    %2462 = vmatpush1.bf16.msra.mxu0 %v2414
    %2463 = vmatprep.subr.bf16.mxu0 %v2418
    %2464 = vmatpush1.bf16.msra.mxu0 %v2417
    %2465 = vmatprep.subr.bf16.mxu0 %v2421
    %2466 = vmatpush1.bf16.msra.mxu0 %v2420
    %2467 = vmatprep.subr.bf16.mxu0 %v2424
    %2468 = vmatpush1.bf16.msra.mxu0 %v2423
    %2469 = vmatprep.subr.bf16.mxu0 %v2427
    %2470 = vmatpush1.bf16.msra.mxu0 %v2426
    %2471 = vmatprep.subr.bf16.mxu0 %v2430
    %2472 = vmatpush1.bf16.msra.mxu0 %v2429
    %2473 = vmatprep.subr.bf16.mxu0 %v2433
    %2474 = vmatpush1.bf16.msra.mxu0 %v2432
    %2475 = vmatprep.subr.bf16.mxu0 0
    %2476 = vmatpush1.bf16.msra.mxu0 0
    %2477 = vmatprep.subr.bf16.mxu0 0
    %2478 = vmatpush1.bf16.msra.mxu0 0
    %2479 = vmatprep.subr.bf16.mxu0 0
    %2480 = vmatpush1.bf16.msra.mxu0 0
    %2481 = vmatprep.subr.bf16.mxu0 0
    %2482 = vmatpush1.bf16.msra.mxu0 0
    %2483 = vmatprep.subr.bf16.mxu0 0
    %2484 = vmatpush1.bf16.msra.mxu0 0
    %2485 = vmatprep.subr.bf16.mxu0 0
    %2486 = vmatpush1.bf16.msra.mxu0 0
    %2487 = vmatprep.subr.bf16.mxu0 0
    %2488 = vmatpush1.bf16.msra.mxu0 0
    %2489 = vmatprep.subr.bf16.mxu0 0
    %2490 = vmatpush1.bf16.msra.mxu0 0
    %2491 = vmatprep.mubr.bf16.mxu0 0
    %2492 = vmatmul.mubr.bf16.gmra.mrb[0].mxu0 %v2298
    %v2493 = vpop.f32.mrb[0].mxu0
    %v2494 = vadd.f32 %v415, %v2493
    %v2495 = vpop.f32.mrb[0].mxu0
    %v2496 = vadd.f32 %v419, %v2495
    %v2497 = vpop.f32.mrb[0].mxu0
    %v2498 = vpop.f32.mrb[0].mxu0
    %2499 = vdwg.mxu0
    %2500 = vmatprep.subr.bf16.mxu0 0
    %2501 = vmatpush1.bf16.msra.mxu0 %v2413
    %2502 = vmatprep.subr.bf16.mxu0 0
    %2503 = vmatpush1.bf16.msra.mxu0 %v2416
    %2504 = vmatprep.subr.bf16.mxu0 0
    %2505 = vmatpush1.bf16.msra.mxu0 %v2419
    %2506 = vmatprep.subr.bf16.mxu0 0
    %2507 = vmatpush1.bf16.msra.mxu0 %v2422
    %2508 = vmatprep.subr.bf16.mxu0 0
    %2509 = vmatpush1.bf16.msra.mxu0 %v2425
    %2510 = vmatprep.subr.bf16.mxu0 0
    %2511 = vmatpush1.bf16.msra.mxu0 %v2428
    %2512 = vmatprep.subr.bf16.mxu0 0
    %2513 = vmatpush1.bf16.msra.mxu0 %v2431
    %2514 = vmatprep.subr.bf16.mxu0 0
    %2515 = vmatpush1.bf16.msra.mxu0 %v2434
    %2516 = vmatprep.subr.bf16.mxu0 0
    %2517 = vmatpush1.bf16.msra.mxu0 0
    %2518 = vmatprep.subr.bf16.mxu0 0
    %2519 = vmatpush1.bf16.msra.mxu0 0
    %2520 = vmatprep.subr.bf16.mxu0 0
    %2521 = vmatpush1.bf16.msra.mxu0 0
    %2522 = vmatprep.subr.bf16.mxu0 0
    %2523 = vmatpush1.bf16.msra.mxu0 0
    %2524 = vmatprep.subr.bf16.mxu0 0
    %2525 = vmatpush1.bf16.msra.mxu0 0
    %2526 = vmatprep.subr.bf16.mxu0 0
    %2527 = vmatpush1.bf16.msra.mxu0 0
    %2528 = vmatprep.subr.bf16.mxu0 0
    %2529 = vmatpush1.bf16.msra.mxu0 0
    %2530 = vmatprep.subr.bf16.mxu0 0
    %2531 = vmatpush1.bf16.msra.mxu0 0
    %2532 = vmatprep.mubr.bf16.mxu0 0
    %2533 = vmatmul.mubr.bf16.gmra.mrb[0].mxu0 %v2298
    %v2534 = vpop.f32.mrb[0].mxu0
    %v2535 = vadd.f32 %v423, %v2534
    %v2536 = vpop.f32.mrb[0].mxu0
    %v2537 = vpop.f32.mrb[0].mxu0
    %v2538 = vpop.f32.mrb[0].mxu0
    %2539 = vdwg.mxu0
    %v2540 = vadd.f32 %v341, %v2494
    %v2541 = vxor.u32 %v2540, 2147483648
    %v2542 = vmul.f32 %v2541, 1.442695
    %v2543 = vpow.pop %v2542
    %v2544 = vadd.f32 %v2543, 1.0
    %v2545 = vrcp.pop %v2544
    %v2546 = vmul.f32 1.0, %v2545
    %v2547 = vadd.f32 %v343, %v2496
    %v2548 = vxor.u32 %v2547, 2147483648
    %v2549 = vmul.f32 %v2548, 1.442695
    %v2550 = vpow.pop %v2549
    %v2551 = vadd.f32 %v2550, 1.0
    %v2552 = vrcp.pop %v2551
    %v2553 = vmul.f32 1.0, %v2552
    %v2554 = vmul.f32 %v2546, %v2535
    %v2555 = vadd.f32 %v407, %v2554
    %v2556 = vtanh.pop %v2555
    %v2557 = vsub.f32 %v2297, %v2556
    %v2558 = vmul.f32 %v2553, %v2557
    %v2559 = vadd.f32 %v2556, %v2558
    %s2560 = scalar_lea.vmem [#allocation2], 56
    %2561 = vst [vmem:[%s2560] sm:$0xff] %v2559
    %2562 = vst [vmem:[%s10] sm:$0xff] %v2559
    %v2563 = vld [vmem:[#allocation2] sm:$0xff]
    %v2564 = vld [vmem:[#allocation2 + $0x8] sm:$0xff]
    %v2565 = vld [vmem:[#allocation2 + $0x10] sm:$0xff]
    %v2566 = vld [vmem:[#allocation2 + $0x18] sm:$0xff]
    %v2567 = vld [vmem:[#allocation2 + $0x20] sm:$0xff]
    %v2568 = vld [vmem:[#allocation2 + $0x28] sm:$0xff]
    %v2569 = vld [vmem:[#allocation2 + $0x30] sm:$0xff]
    %v2570 = vld [vmem:[#allocation2 + $0x38] sm:$0xff]
    %v2571 = vpack.c.bf16 %v2564, %v2563
    %v2572 = vpack.c.bf16 %v2566, %v2565
    %v2573 = vpack.c.bf16 %v2568, %v2567
    %v2574 = vpack.c.bf16 %v2570, %v2569
    %v2575 = vld [vmem:[#allocation5] sm:$0xf]
    %v2576 = vld [vmem:[#allocation5 + $0x4] sm:$0xf]
    %v2577 = vld [vmem:[#allocation5 + $0x8] sm:$0xf]
    %v2578 = vld [vmem:[#allocation5 + $0xc] sm:$0xf]
    %v2579 = vld [vmem:[#allocation5 + $0x10] sm:$0xf]
    %v2580 = vld [vmem:[#allocation5 + $0x14] sm:$0xf]
    %v2581 = vld [vmem:[#allocation5 + $0x18] sm:$0xf]
    %v2582 = vld [vmem:[#allocation5 + $0x1c] sm:$0xf]
    %v2583 = vld [vmem:[#allocation5 + $0x20] sm:$0xf]
    %v2584 = vld [vmem:[#allocation5 + $0x24] sm:$0xf]
    %v2585 = vld [vmem:[#allocation5 + $0x28] sm:$0xf]
    %v2586 = vld [vmem:[#allocation5 + $0x2c] sm:$0xf]
    %v2587 = vld [vmem:[#allocation5 + $0x30] sm:$0xf]
    %v2588 = vld [vmem:[#allocation5 + $0x34] sm:$0xf]
    %v2589 = vld [vmem:[#allocation5 + $0x38] sm:$0xf]
    %v2590 = vld [vmem:[#allocation5 + $0x3c] sm:$0xf]
    %v2591 = vld [vmem:[%s8] sm:$0x1]
    %v2593 = vlaneseq
    %v2594 = vshrl.u32 %v2593, 7
    %v2595 = vsub.s32 0, %v2594
    %v2596 = vrot.slane %v2591, %v2595
    %v2614 = vunpack.c.l.b16 %v2575
    %v2615 = vunpack.c.l.b16 %v2576
    %v2616 = vunpack.c.l.b16 %v2577
    %v2617 = vunpack.c.l.b16 %v2578
    %v2618 = vunpack.c.l.b16 %v2579
    %v2619 = vunpack.c.l.b16 %v2580
    %v2620 = vunpack.c.l.b16 %v2581
    %v2621 = vunpack.c.l.b16 %v2582
    %v2622 = vunpack.c.l.b16 %v2583
    %v2623 = vunpack.c.l.b16 %v2584
    %v2624 = vunpack.c.l.b16 %v2585
    %v2625 = vunpack.c.l.b16 %v2586
    %v2626 = vunpack.c.l.b16 %v2587
    %v2627 = vunpack.c.l.b16 %v2588
    %v2628 = vunpack.c.l.b16 %v2589
    %v2629 = vunpack.c.l.b16 %v2590
    %v2630 = vpack.c.b16 %v2615, %v2614
    %v2631 = vpack.c.b16 %v2617, %v2616
    %v2632 = vpack.c.b16 %v2619, %v2618
    %v2633 = vpack.c.b16 %v2621, %v2620
    %v2634 = vpack.c.b16 %v2623, %v2622
    %v2635 = vpack.c.b16 %v2625, %v2624
    %v2636 = vpack.c.b16 %v2627, %v2626
    %v2637 = vpack.c.b16 %v2629, %v2628
    %2646 = vmatprep.subr.bf16.mxu0 0
    %2647 = vmatpush1.bf16.msra.mxu0 %v2630
    %2648 = vmatprep.subr.bf16.mxu0 0
    %2649 = vmatpush1.bf16.msra.mxu0 %v2631
    %2650 = vmatprep.subr.bf16.mxu0 0
    %2651 = vmatpush1.bf16.msra.mxu0 %v2632
    %2652 = vmatprep.subr.bf16.mxu0 0
    %2653 = vmatpush1.bf16.msra.mxu0 %v2633
    %2654 = vmatprep.subr.bf16.mxu0 0
    %2655 = vmatpush1.bf16.msra.mxu0 %v2634
    %2656 = vmatprep.subr.bf16.mxu0 0
    %2657 = vmatpush1.bf16.msra.mxu0 %v2635
    %2658 = vmatprep.subr.bf16.mxu0 0
    %2659 = vmatpush1.bf16.msra.mxu0 %v2636
    %2660 = vmatprep.subr.bf16.mxu0 0
    %2661 = vmatpush1.bf16.msra.mxu0 %v2637
    %2662 = vmatprep.subr.bf16.mxu0 0
    %2663 = vmatpush1.bf16.msra.mxu0 0
    %2664 = vmatprep.subr.bf16.mxu0 0
    %2665 = vmatpush1.bf16.msra.mxu0 0
    %2666 = vmatprep.subr.bf16.mxu0 0
    %2667 = vmatpush1.bf16.msra.mxu0 0
    %2668 = vmatprep.subr.bf16.mxu0 0
    %2669 = vmatpush1.bf16.msra.mxu0 0
    %2670 = vmatprep.subr.bf16.mxu0 0
    %2671 = vmatpush1.bf16.msra.mxu0 0
    %2672 = vmatprep.subr.bf16.mxu0 0
    %2673 = vmatpush1.bf16.msra.mxu0 0
    %2674 = vmatprep.subr.bf16.mxu0 0
    %2675 = vmatpush1.bf16.msra.mxu0 0
    %2676 = vmatprep.subr.bf16.mxu0 0
    %2677 = vmatpush1.bf16.msra.mxu0 0
    %2678 = vmatprep.mubr.bf16.mxu0 0
    %2679 = vmatmul.mubr.bf16.gmra.mrb[0].mxu0 %v2571
    %v2680 = vpop.f32.mrb[0].mxu0
    %v2681 = vadd.f32 %v2596, %v2680
    %v2682 = vpop.f32.mrb[0].mxu0
    %v2683 = vpop.f32.mrb[0].mxu0
    %v2684 = vadd.f32 %v2596, %v2683
    %v2685 = vpop.f32.mrb[0].mxu0
    %2686 = vmatprep.mubr.bf16.mxu0 0
    %2687 = vmatmul.mubr.bf16.gmra.mrb[0].mxu0 %v2572
    %v2688 = vpop.f32.mrb[0].mxu0
    %v2689 = vadd.f32 %v2596, %v2688
    %v2690 = vpop.f32.mrb[0].mxu0
    %v2691 = vpop.f32.mrb[0].mxu0
    %v2692 = vadd.f32 %v2596, %v2691
    %v2693 = vpop.f32.mrb[0].mxu0
    %2694 = vmatprep.mubr.bf16.mxu0 0
    %2695 = vmatmul.mubr.bf16.gmra.mrb[0].mxu0 %v2573
    %v2696 = vpop.f32.mrb[0].mxu0
    %v2697 = vadd.f32 %v2596, %v2696
    %v2698 = vpop.f32.mrb[0].mxu0
    %v2699 = vpop.f32.mrb[0].mxu0
    %v2700 = vadd.f32 %v2596, %v2699
    %v2701 = vpop.f32.mrb[0].mxu0
    %2702 = vmatprep.mubr.bf16.mxu0 0
    %2703 = vmatmul.mubr.bf16.gmra.mrb[0].mxu0 %v2574
    %v2704 = vpop.f32.mrb[0].mxu0
    %v2705 = vadd.f32 %v2596, %v2704
    %v2706 = vpop.f32.mrb[0].mxu0
    %v2707 = vpop.f32.mrb[0].mxu0
    %v2708 = vadd.f32 %v2596, %v2707
    %v2709 = vpop.f32.mrb[0].mxu0
    %2710 = vdwg.mxu0
    %v2711 = vmax.f32 %v2681, 0.0
    %v2712 = vmax.f32 %v2684, 0.0
    %v2713 = vmax.f32 %v2689, 0.0
    %v2714 = vmax.f32 %v2692, 0.0
    %v2715 = vmax.f32 %v2697, 0.0
    %v2716 = vmax.f32 %v2700, 0.0
    %v2717 = vmax.f32 %v2705, 0.0
    %v2718 = vmax.f32 %v2708, 0.0
    %2719 = vst [vmem:[%s9] sm:$0xff] %v2711
    %2720 = vst [vmem:[%s9 + $0x8] sm:$0xff] %v2712
    %2721 = vst [vmem:[%s9 + $0x10] sm:$0xff] %v2713
    %2722 = vst [vmem:[%s9 + $0x18] sm:$0xff] %v2714
    %2723 = vst [vmem:[%s9 + $0x20] sm:$0xff] %v2715
    %2724 = vst [vmem:[%s9 + $0x28] sm:$0xff] %v2716
    %2725 = vst [vmem:[%s9 + $0x30] sm:$0xff] %v2717
    %2726 = vst [vmem:[%s9 + $0x38] sm:$0xff] %v2718
    // Predicated region
    $region46: #{gru_net_forward.1} parent=1 // pred_check
      _
    $region47: #{gru_net_forward.1} parent=1 // pred_check_branch
      %2728 = sbr.rel (0) target = $region49
    $region48: #{gru_net_forward.1} parent=1 // pred_region
      _
    $region49: #{gru_net_forward.1} parent=1 // pred_fallthru
      _
    // Predicated region
    $region50: #{gru_net_forward.1} parent=1 // pred_check
      _
    $region51: #{gru_net_forward.1} parent=1 // pred_check_branch
      %2730 = sbr.rel (0) target = $region53
    $region52: #{gru_net_forward.1} parent=1 // pred_region
      _
    $region53: #{gru_net_forward.1} parent=1 // pred_fallthru
      _
    // Predicated region
    $region54: #{gru_net_forward.1} parent=1 // pred_check
      _
    $region55: #{gru_net_forward.1} parent=1 // pred_check_branch
      %2732 = sbr.rel (0) target = $region57
    $region56: #{gru_net_forward.1} parent=1 // pred_region
      _
    $region57: #{gru_net_forward.1} parent=1 // pred_fallthru
      _
    // Predicated region
    $region58: #{gru_net_forward.1} parent=1 // pred_check
      _
    $region59: #{gru_net_forward.1} parent=1 // pred_check_branch
      %2734 = sbr.rel (0) target = $region61
    $region60: #{gru_net_forward.1} parent=1 // pred_region
      _
    $region61: #{gru_net_forward.1} parent=1 // pred_fallthru
      _
    %2735 = vsyncpa [#allocation4], 1
    %2736 = vsyncpa [#allocation6], 1

</llo_original>
